<compile_context>
chip_gen: v6e
topology: v6e:2x2x1
jax: 0.10.0
libtpu: 0.0.40
codegen_flags: <defaults>
</compile_context>

<pallas_src>
import jax
import jax.numpy as jnp
import numpy as np
from jax.experimental import pallas as pl
from jax.experimental.pallas import tpu as pltpu

EPS = 1e-5


def stn3d_kernel(x_ref,
                 w1_ref, b1_ref,
                 w2_ref, b2_ref,
                 w3_ref, b3_ref,
                 fw1_ref, b4_ref,
                 fw2_ref, b5_ref,
                 fw3_ref, b6_ref,
                 o_ref):
    # x_ref block: (TG, N, 3) -> TG groups of N points each.
    tg, n, c = x_ref.shape
    x = x_ref[...].reshape(tg * n, c).astype(jnp.bfloat16)                 # (TG*N, 3)

    # conv1 + (folded bn1) + relu    -- 1x1 conv == matmul over channels
    h = jnp.dot(x, w1_ref[...], preferred_element_type=jnp.float32)       # (TG*N, 64)
    h = jnp.maximum(h + b1_ref[...], 0.0)

    # conv2 + (folded bn2) + relu
    h = jnp.dot(h.astype(jnp.bfloat16), w2_ref[...],
                preferred_element_type=jnp.float32)                       # (TG*N, 128)
    h = jnp.maximum(h + b2_ref[...], 0.0)

    # conv3 + (folded bn3) + relu
    h = jnp.dot(h.astype(jnp.bfloat16), w3_ref[...],
                preferred_element_type=jnp.float32)                       # (TG*N, 1024)
    h = jnp.maximum(h + b3_ref[...], 0.0)

    # torch.max(x, -1)[0] : per-group max over the N (point) axis
    g = jnp.max(h.reshape(tg, n, h.shape[-1]), axis=1)                    # (TG, 1024)

    # fc1 + (folded bn4) + relu
    g = jnp.dot(g.astype(jnp.bfloat16), fw1_ref[...],
                preferred_element_type=jnp.float32)                       # (TG, 512)
    g = jnp.maximum(g + b4_ref[...], 0.0)

    # fc2 + (folded bn5) + relu
    g = jnp.dot(g.astype(jnp.bfloat16), fw2_ref[...],
                preferred_element_type=jnp.float32)                       # (TG, 256)
    g = jnp.maximum(g + b5_ref[...], 0.0)

    # fc3 + bias (3x3 identity already folded into the bias)
    g = jnp.dot(g.astype(jnp.bfloat16), fw3_ref[...],
                preferred_element_type=jnp.float32) + b6_ref[...]         # (TG, 9)

    o_ref[0] = g                                                          # block (1, TG, 9)


def _const_spec(arr):
    # full-array block, same block every grid step (weights stay resident)
    nd = arr.ndim
    return pl.BlockSpec(arr.shape, lambda i, _nd=nd: (0,) * _nd)


def _choose_group_tile(bt, n, target_rows=1024):
    """TG groups per grid step so the conv-MLP LHS has ~target_rows rows.

    target_rows ~ 512-2048 keeps the MXU full (multiples of 256 on v6e/v7x,
    128 on v5e) while the (TG*N, 1024) f32 activation stays well under the
    scoped VMEM default on every generation (incl. v7x's 64 MiB physical).
    """
    tg = max(1, target_rows // max(n, 1))
    tg = min(tg, bt)
    if tg >= 8:
        tg = (tg // 8) * 8        # sublane-aligned group count when possible
    return tg


def fold_params(p):
    """Fold eval-mode BN scales into the weight columns; weights -> bf16.

    (x @ w) * s + b == x @ (w * s) + b  (s is per output channel), so only the
    shift + ReLU remain in the kernel. Shifts/biases stay f32.
    """
    f = jnp.bfloat16
    return dict(
        w1=(p["w1"] * p["s1"]).astype(f), b1=p["b1"],
        w2=(p["w2"] * p["s2"]).astype(f), b2=p["b2"],
        w3=(p["w3"] * p["s3"]).astype(f), b3=p["b3"],
        fw1=(p["fw1"] * p["s4"]).astype(f), b4=p["b4"],
        fw2=(p["fw2"] * p["s5"]).astype(f), b5=p["b5"],
        fw3=p["fw3"].astype(f), b6=p["b6"],
    )


def stn3d_forward(x_nchw, kp, target_rows=1024):
    B, C, T, N = x_nchw.shape
    assert C == 3
    BT = B * T

    # NCHW -> (B*T, N, 3).
    # TODO(synk): this transpose could be fused into the kernel (read
    # (1,3,T,N) blocks) to save one HBM round trip; mostly relevant on v5e.
    x = jnp.transpose(x_nchw, (0, 2, 3, 1)).reshape(BT, N, C)

    TG = _choose_group_tile(BT, N, target_rows)
    G = pl.cdiv(BT, TG)
    BT_pad = G * TG
    if BT_pad != BT:
        # pad whole groups with zeros; padded rows are sliced off below
        x = jnp.concatenate([x, jnp.zeros((BT_pad - BT, N, C), x.dtype)], axis=0)

    params = [kp["w1"], kp["b1"], kp["w2"], kp["b2"], kp["w3"], kp["b3"],
              kp["fw1"], kp["b4"], kp["fw2"], kp["b5"], kp["fw3"], kp["b6"]]

    out = pl.pallas_call(
        stn3d_kernel,
        out_shape=jax.ShapeDtypeStruct((G, TG, 9), jnp.float32),
        grid_spec=pltpu.PrefetchScalarGridSpec(
            num_scalar_prefetch=0,
            grid=(G,),
            in_specs=[pl.BlockSpec((TG, N, C), lambda i: (i, 0, 0))]
                     + [_const_spec(a) for a in params],
            out_specs=pl.BlockSpec((1, TG, 9), lambda i: (i, 0, 0)),
        ),
        compiler_params=pltpu.CompilerParams(
            dimension_semantics=("parallel",)),  # megacore split on v7x
    )(x, *params)

    return out.reshape(BT_pad, 9)[:BT].reshape(BT, 3, 3)


# --------------------------------------------------------------------------
# Pure-JAX references.
# --------------------------------------------------------------------------
def stn3d_reference_matched(x_nchw, kp):
    """Mirrors the kernel math exactly: folded BN, bf16 matmul operands,
    f32 accumulation."""
    B, C, T, N = x_nchw.shape
    x = jnp.transpose(x_nchw, (0, 2, 3, 1)).reshape(B * T * N, C)

    def mm(a, w):
        return jnp.dot(a.astype(jnp.bfloat16), w, preferred_element_type=jnp.float32)

    h = jnp.maximum(mm(x, kp["w1"]) + kp["b1"], 0.0)
    h = jnp.maximum(mm(h, kp["w2"]) + kp["b2"], 0.0)
    h = jnp.maximum(mm(h, kp["w3"]) + kp["b3"], 0.0)
    g = h.reshape(B * T, N, 1024).max(axis=1)
    g = jnp.maximum(mm(g, kp["fw1"]) + kp["b4"], 0.0)
    g = jnp.maximum(mm(g, kp["fw2"]) + kp["b5"], 0.0)
    g = mm(g, kp["fw3"]) + kp["b6"]
    return g.reshape(B * T, 3, 3)


def stn3d_reference_f32(x_nchw, p):
    """Full-f32 eval-mode module semantics (unfolded scale/shift)."""
    B, C, T, N = x_nchw.shape
    x = jnp.transpose(x_nchw, (0, 2, 3, 1)).reshape(B * T * N, C)
    h = jnp.maximum(x @ p["w1"] * p["s1"] + p["b1"], 0.0)
    h = jnp.maximum(h @ p["w2"] * p["s2"] + p["b2"], 0.0)
    h = jnp.maximum(h @ p["w3"] * p["s3"] + p["b3"], 0.0)
    g = h.reshape(B * T, N, 1024).max(axis=1)
    g = jnp.maximum(g @ p["fw1"] * p["s4"] + p["b4"], 0.0)
    g = jnp.maximum(g @ p["fw2"] * p["s5"] + p["b5"], 0.0)
    g = g @ p["fw3"] + p["b6"]
    return g.reshape(B * T, 3, 3)


def make_params(key):
    """Deterministic synthetic weights; BN (eval mode) and conv/linear biases
    expressed as per-feature scale/shift pairs."""
    ks = jax.random.split(key, 32)
    ki = iter(ks)

    def dense(shape, scale=0.1):
        return scale * jax.random.normal(next(ki), shape, jnp.float32)

    def bn_fold(cout, bias):
        gamma = jax.random.uniform(next(ki), (cout,), jnp.float32, 0.5, 1.5)
        beta = 0.1 * jax.random.normal(next(ki), (cout,), jnp.float32)
        mean = 0.1 * jax.random.normal(next(ki), (cout,), jnp.float32)
        var = jax.random.uniform(next(ki), (cout,), jnp.float32, 0.5, 1.5)
        scale = gamma / jnp.sqrt(var + EPS)
        shift = (bias - mean) * scale + beta
        return scale.reshape(1, cout), shift.reshape(1, cout)

    p = {}
    # conv1: Conv2d(3, 64, 1) -> weight used as (3, 64)
    p["w1"] = dense((3, 64));     s, b = bn_fold(64, dense((64,)));     p["s1"], p["b1"] = s, b
    # conv2: Conv2d(64, 128, 1)
    p["w2"] = dense((64, 128));   s, b = bn_fold(128, dense((128,)));   p["s2"], p["b2"] = s, b
    # conv3: Conv2d(128, 1024, 1)
    p["w3"] = dense((128, 1024)); s, b = bn_fold(1024, dense((1024,))); p["s3"], p["b3"] = s, b
    # fc1: Linear(1024, 512) + bn4
    p["fw1"] = dense((1024, 512), 0.05); s, b = bn_fold(512, dense((512,))); p["s4"], p["b4"] = s, b
    # fc2: Linear(512, 256) + bn5
    p["fw2"] = dense((512, 256), 0.05);  s, b = bn_fold(256, dense((256,))); p["s5"], p["b5"] = s, b
    # fc3: Linear(256, 9); 3x3 identity folded into the bias
    p["fw3"] = dense((256, 9), 0.05)
    fc3_bias = dense((9,))
    iden = jnp.array([1, 0, 0, 0, 1, 0, 0, 0, 1], jnp.float32)
    p["b6"] = (fc3_bias + iden).reshape(1, 9)
    return p


if __name__ == "__main__":
    key = jax.random.PRNGKey(0)
    kx, kparam = jax.random.split(key)

    B, C, T, N = 2, 3, 4, 16               # small shapes; input is NCHW
    x = jax.random.normal(kx, (B, C, T, N), jnp.float32)
    p = make_params(kparam)
    kp = fold_params(p)                    # kernel-ready params (BN folded, bf16 weights)

    out = jax.block_until_ready(stn3d_forward(x, kp))
    ref_matched = jax.block_until_ready(stn3d_reference_matched(x, kp))
    ref_f32 = jax.block_until_ready(stn3d_reference_f32(x, p))

    assert out.shape == (B * T, 3, 3), out.shape
    # tight check vs. a pure-JAX reference with identical (bf16-matmul) precision
    np.testing.assert_allclose(np.asarray(out), np.asarray(ref_matched),
                               rtol=5e-3, atol=5e-3)
    # loose check vs. full-f32 module semantics (difference == bf16 matmul rounding)
    np.testing.assert_allclose(np.asarray(out), np.asarray(ref_f32),
                               rtol=5e-2, atol=5e-2)
    print("KERNEL_OK")
</pallas_src>

<mosaic_0001>
module attributes {stable_mosaic.version = 11 : i64} {
  func.func @stn3d_kernel(%arg0: i32, %arg1: memref<8x16x3xf32, #tpu.memory_space<vmem>>, %arg2: memref<3x64xbf16, #tpu.memory_space<vmem>>, %arg3: memref<1x64xf32, #tpu.memory_space<vmem>>, %arg4: memref<64x128xbf16, #tpu.memory_space<vmem>>, %arg5: memref<1x128xf32, #tpu.memory_space<vmem>>, %arg6: memref<128x1024xbf16, #tpu.memory_space<vmem>>, %arg7: memref<1x1024xf32, #tpu.memory_space<vmem>>, %arg8: memref<1024x512xbf16, #tpu.memory_space<vmem>>, %arg9: memref<1x512xf32, #tpu.memory_space<vmem>>, %arg10: memref<512x256xbf16, #tpu.memory_space<vmem>>, %arg11: memref<1x256xf32, #tpu.memory_space<vmem>>, %arg12: memref<256x9xbf16, #tpu.memory_space<vmem>>, %arg13: memref<1x9xf32, #tpu.memory_space<vmem>>, %arg14: memref<1x8x9xf32, #tpu.memory_space<vmem>>) attributes {dimension_semantics = [#tpu.dimension_semantics<parallel>], iteration_bounds = array<i64: 1>, scalar_prefetch = 0 : i64, scratch_operands = 0 : i64, tpu.core_type = #tpu.core_type<tc>, window_params = [{transform_indices = @transform_0, window_bounds = array<i64: 8, 16, 3>}, {pipeline_mode = #tpu.pipeline_mode<synchronous>, transform_indices = @transform_1, window_bounds = array<i64: 3, 64>}, {pipeline_mode = #tpu.pipeline_mode<synchronous>, transform_indices = @transform_2, window_bounds = array<i64: 1, 64>}, {pipeline_mode = #tpu.pipeline_mode<synchronous>, transform_indices = @transform_3, window_bounds = array<i64: 64, 128>}, {pipeline_mode = #tpu.pipeline_mode<synchronous>, transform_indices = @transform_4, window_bounds = array<i64: 1, 128>}, {pipeline_mode = #tpu.pipeline_mode<synchronous>, transform_indices = @transform_5, window_bounds = array<i64: 128, 1024>}, {pipeline_mode = #tpu.pipeline_mode<synchronous>, transform_indices = @transform_6, window_bounds = array<i64: 1, 1024>}, {pipeline_mode = #tpu.pipeline_mode<synchronous>, transform_indices = @transform_7, window_bounds = array<i64: 1024, 512>}, {pipeline_mode = #tpu.pipeline_mode<synchronous>, transform_indices = @transform_8, window_bounds = array<i64: 1, 512>}, {pipeline_mode = #tpu.pipeline_mode<synchronous>, transform_indices = @transform_9, window_bounds = array<i64: 512, 256>}, {pipeline_mode = #tpu.pipeline_mode<synchronous>, transform_indices = @transform_10, window_bounds = array<i64: 1, 256>}, {pipeline_mode = #tpu.pipeline_mode<synchronous>, transform_indices = @transform_11, window_bounds = array<i64: 256, 9>}, {pipeline_mode = #tpu.pipeline_mode<synchronous>, transform_indices = @transform_12, window_bounds = array<i64: 1, 9>}, {transform_indices = @transform_13, window_bounds = array<i64: 1, 8, 9>}]} {
    %c0 = arith.constant 0 : index
    %c0_0 = arith.constant 0 : index
    %c0_1 = arith.constant 0 : index
    %0 = vector.load %arg1[%c0, %c0_0, %c0_1] : memref<8x16x3xf32, #tpu.memory_space<vmem>>, vector<8x16x3xf32>
    %1 = vector.shape_cast %0 : vector<8x16x3xf32> to vector<128x3xf32>
    %2 = arith.truncf %1 : vector<128x3xf32> to vector<128x3xbf16>
    %c0_2 = arith.constant 0 : index
    %c0_3 = arith.constant 0 : index
    %3 = vector.load %arg2[%c0_2, %c0_3] : memref<3x64xbf16, #tpu.memory_space<vmem>>, vector<3x64xbf16>
    %cst = arith.constant dense<0.000000e+00> : vector<128x64xf32>
    %4 = tpu.matmul %2, %3, %cst {dimension_numbers = #tpu.dot_dimension_numbers<[1], [0], [0], [1], [0, 0, 1, 1], [], []>} : vector<128x3xbf16>, vector<3x64xbf16>, vector<128x64xf32> -> vector<128x64xf32>
    %c0_4 = arith.constant 0 : index
    %c0_5 = arith.constant 0 : index
    %5 = vector.load %arg3[%c0_4, %c0_5] : memref<1x64xf32, #tpu.memory_space<vmem>>, vector<1x64xf32>
    %6 = vector.broadcast %5 : vector<1x64xf32> to vector<128x64xf32>
    %7 = arith.addf %4, %6 : vector<128x64xf32>
    %cst_6 = arith.constant 0.000000e+00 : f32
    %8 = vector.broadcast %cst_6 : f32 to vector<128x64xf32>
    %9 = arith.maximumf %7, %8 : vector<128x64xf32>
    %10 = arith.truncf %9 : vector<128x64xf32> to vector<128x64xbf16>
    %c0_7 = arith.constant 0 : index
    %c0_8 = arith.constant 0 : index
    %11 = vector.load %arg4[%c0_7, %c0_8] : memref<64x128xbf16, #tpu.memory_space<vmem>>, vector<64x128xbf16>
    %cst_9 = arith.constant dense<0.000000e+00> : vector<128x128xf32>
    %12 = tpu.matmul %10, %11, %cst_9 {dimension_numbers = #tpu.dot_dimension_numbers<[1], [0], [0], [1], [0, 0, 1, 1], [], []>} : vector<128x64xbf16>, vector<64x128xbf16>, vector<128x128xf32> -> vector<128x128xf32>
    %c0_10 = arith.constant 0 : index
    %c0_11 = arith.constant 0 : index
    %13 = vector.load %arg5[%c0_10, %c0_11] : memref<1x128xf32, #tpu.memory_space<vmem>>, vector<1x128xf32>
    %14 = vector.broadcast %13 : vector<1x128xf32> to vector<128x128xf32>
    %15 = arith.addf %12, %14 : vector<128x128xf32>
    %cst_12 = arith.constant 0.000000e+00 : f32
    %16 = vector.broadcast %cst_12 : f32 to vector<128x128xf32>
    %17 = arith.maximumf %15, %16 : vector<128x128xf32>
    %18 = arith.truncf %17 : vector<128x128xf32> to vector<128x128xbf16>
    %c0_13 = arith.constant 0 : index
    %c0_14 = arith.constant 0 : index
    %19 = vector.load %arg6[%c0_13, %c0_14] : memref<128x1024xbf16, #tpu.memory_space<vmem>>, vector<128x1024xbf16>
    %cst_15 = arith.constant dense<0.000000e+00> : vector<128x1024xf32>
    %20 = tpu.matmul %18, %19, %cst_15 {dimension_numbers = #tpu.dot_dimension_numbers<[1], [0], [0], [1], [0, 0, 1, 1], [], []>} : vector<128x128xbf16>, vector<128x1024xbf16>, vector<128x1024xf32> -> vector<128x1024xf32>
    %c0_16 = arith.constant 0 : index
    %c0_17 = arith.constant 0 : index
    %21 = vector.load %arg7[%c0_16, %c0_17] : memref<1x1024xf32, #tpu.memory_space<vmem>>, vector<1x1024xf32>
    %22 = vector.broadcast %21 : vector<1x1024xf32> to vector<128x1024xf32>
    %23 = arith.addf %20, %22 : vector<128x1024xf32>
    %cst_18 = arith.constant 0.000000e+00 : f32
    %24 = vector.broadcast %cst_18 : f32 to vector<128x1024xf32>
    %25 = arith.maximumf %23, %24 : vector<128x1024xf32>
    %26 = vector.shape_cast %25 : vector<128x1024xf32> to vector<8x16x1024xf32>
    %cst_19 = arith.constant dense<0xFF800000> : vector<8x1024xf32>
    %27 = vector.multi_reduction <maximumf>, %26, %cst_19 [1] : vector<8x16x1024xf32> to vector<8x1024xf32>
    %28 = arith.truncf %27 : vector<8x1024xf32> to vector<8x1024xbf16>
    %c0_20 = arith.constant 0 : index
    %c0_21 = arith.constant 0 : index
    %29 = vector.load %arg8[%c0_20, %c0_21] : memref<1024x512xbf16, #tpu.memory_space<vmem>>, vector<1024x512xbf16>
    %cst_22 = arith.constant dense<0.000000e+00> : vector<8x512xf32>
    %30 = tpu.matmul %28, %29, %cst_22 {dimension_numbers = #tpu.dot_dimension_numbers<[1], [0], [0], [1], [0, 0, 1, 1], [], []>} : vector<8x1024xbf16>, vector<1024x512xbf16>, vector<8x512xf32> -> vector<8x512xf32>
    %c0_23 = arith.constant 0 : index
    %c0_24 = arith.constant 0 : index
    %31 = vector.load %arg9[%c0_23, %c0_24] : memref<1x512xf32, #tpu.memory_space<vmem>>, vector<1x512xf32>
    %32 = vector.broadcast %31 : vector<1x512xf32> to vector<8x512xf32>
    %33 = arith.addf %30, %32 : vector<8x512xf32>
    %cst_25 = arith.constant 0.000000e+00 : f32
    %34 = vector.broadcast %cst_25 : f32 to vector<8x512xf32>
    %35 = arith.maximumf %33, %34 : vector<8x512xf32>
    %36 = arith.truncf %35 : vector<8x512xf32> to vector<8x512xbf16>
    %c0_26 = arith.constant 0 : index
    %c0_27 = arith.constant 0 : index
    %37 = vector.load %arg10[%c0_26, %c0_27] : memref<512x256xbf16, #tpu.memory_space<vmem>>, vector<512x256xbf16>
    %cst_28 = arith.constant dense<0.000000e+00> : vector<8x256xf32>
    %38 = tpu.matmul %36, %37, %cst_28 {dimension_numbers = #tpu.dot_dimension_numbers<[1], [0], [0], [1], [0, 0, 1, 1], [], []>} : vector<8x512xbf16>, vector<512x256xbf16>, vector<8x256xf32> -> vector<8x256xf32>
    %c0_29 = arith.constant 0 : index
    %c0_30 = arith.constant 0 : index
    %39 = vector.load %arg11[%c0_29, %c0_30] : memref<1x256xf32, #tpu.memory_space<vmem>>, vector<1x256xf32>
    %40 = vector.broadcast %39 : vector<1x256xf32> to vector<8x256xf32>
    %41 = arith.addf %38, %40 : vector<8x256xf32>
    %cst_31 = arith.constant 0.000000e+00 : f32
    %42 = vector.broadcast %cst_31 : f32 to vector<8x256xf32>
    %43 = arith.maximumf %41, %42 : vector<8x256xf32>
    %44 = arith.truncf %43 : vector<8x256xf32> to vector<8x256xbf16>
    %c0_32 = arith.constant 0 : index
    %c0_33 = arith.constant 0 : index
    %45 = vector.load %arg12[%c0_32, %c0_33] : memref<256x9xbf16, #tpu.memory_space<vmem>>, vector<256x9xbf16>
    %cst_34 = arith.constant dense<0.000000e+00> : vector<8x9xf32>
    %46 = tpu.matmul %44, %45, %cst_34 {dimension_numbers = #tpu.dot_dimension_numbers<[1], [0], [0], [1], [0, 0, 1, 1], [], []>} : vector<8x256xbf16>, vector<256x9xbf16>, vector<8x9xf32> -> vector<8x9xf32>
    %c0_35 = arith.constant 0 : index
    %c0_36 = arith.constant 0 : index
    %47 = vector.load %arg13[%c0_35, %c0_36] : memref<1x9xf32, #tpu.memory_space<vmem>>, vector<1x9xf32>
    %48 = vector.broadcast %47 : vector<1x9xf32> to vector<8x9xf32>
    %49 = arith.addf %46, %48 : vector<8x9xf32>
    %c0_37 = arith.constant 0 : index
    %c0_38 = arith.constant 0 : index
    %c0_39 = arith.constant 0 : index
    %50 = vector.load %arg14[%c0_37, %c0_38, %c0_39] : memref<1x8x9xf32, #tpu.memory_space<vmem>>, vector<1x8x9xf32>
    %51 = vector.shape_cast %50 : vector<1x8x9xf32> to vector<8x9xf32>
    %52 = vector.shape_cast %49 : vector<8x9xf32> to vector<1x8x9xf32>
    tpu.vector_store %arg14[%c0_37, %c0_38, %c0_39], %52 {strides = array<i32>} : memref<1x8x9xf32, #tpu.memory_space<vmem>>, vector<1x8x9xf32>,
    return
  }
  func.func @transform_0(%arg0: i32) -> (i32, i32, i32) {
    %c0_i32 = arith.constant 0 : i32
    %c0_i32_0 = arith.constant 0 : i32
    %c0_i32_1 = arith.constant 0 : i32
    return %arg0, %c0_i32, %c0_i32_0 : i32, i32, i32
  }
  func.func @transform_1(%arg0: i32) -> (i32, i32) {
    %c0_i32 = arith.constant 0 : i32
    %c0_i32_0 = arith.constant 0 : i32
    %c0_i32_1 = arith.constant 0 : i32
    return %c0_i32, %c0_i32_0 : i32, i32
  }
  func.func @transform_2(%arg0: i32) -> (i32, i32) {
    %c0_i32 = arith.constant 0 : i32
    %c0_i32_0 = arith.constant 0 : i32
    %c0_i32_1 = arith.constant 0 : i32
    return %c0_i32, %c0_i32_0 : i32, i32
  }
  func.func @transform_3(%arg0: i32) -> (i32, i32) {
    %c0_i32 = arith.constant 0 : i32
    %c0_i32_0 = arith.constant 0 : i32
    %c0_i32_1 = arith.constant 0 : i32
    return %c0_i32, %c0_i32_0 : i32, i32
  }
  func.func @transform_4(%arg0: i32) -> (i32, i32) {
    %c0_i32 = arith.constant 0 : i32
    %c0_i32_0 = arith.constant 0 : i32
    %c0_i32_1 = arith.constant 0 : i32
    return %c0_i32, %c0_i32_0 : i32, i32
  }
  func.func @transform_5(%arg0: i32) -> (i32, i32) {
    %c0_i32 = arith.constant 0 : i32
    %c0_i32_0 = arith.constant 0 : i32
    %c0_i32_1 = arith.constant 0 : i32
    return %c0_i32, %c0_i32_0 : i32, i32
  }
  func.func @transform_6(%arg0: i32) -> (i32, i32) {
    %c0_i32 = arith.constant 0 : i32
    %c0_i32_0 = arith.constant 0 : i32
    %c0_i32_1 = arith.constant 0 : i32
    return %c0_i32, %c0_i32_0 : i32, i32
  }
  func.func @transform_7(%arg0: i32) -> (i32, i32) {
    %c0_i32 = arith.constant 0 : i32
    %c0_i32_0 = arith.constant 0 : i32
    %c0_i32_1 = arith.constant 0 : i32
    return %c0_i32, %c0_i32_0 : i32, i32
  }
  func.func @transform_8(%arg0: i32) -> (i32, i32) {
    %c0_i32 = arith.constant 0 : i32
    %c0_i32_0 = arith.constant 0 : i32
    %c0_i32_1 = arith.constant 0 : i32
    return %c0_i32, %c0_i32_0 : i32, i32
  }
  func.func @transform_9(%arg0: i32) -> (i32, i32) {
    %c0_i32 = arith.constant 0 : i32
    %c0_i32_0 = arith.constant 0 : i32
    %c0_i32_1 = arith.constant 0 : i32
    return %c0_i32, %c0_i32_0 : i32, i32
  }
  func.func @transform_10(%arg0: i32) -> (i32, i32) {
    %c0_i32 = arith.constant 0 : i32
    %c0_i32_0 = arith.constant 0 : i32
    %c0_i32_1 = arith.constant 0 : i32
    return %c0_i32, %c0_i32_0 : i32, i32
  }
  func.func @transform_11(%arg0: i32) -> (i32, i32) {
    %c0_i32 = arith.constant 0 : i32
    %c0_i32_0 = arith.constant 0 : i32
    %c0_i32_1 = arith.constant 0 : i32
    return %c0_i32, %c0_i32_0 : i32, i32
  }
  func.func @transform_12(%arg0: i32) -> (i32, i32) {
    %c0_i32 = arith.constant 0 : i32
    %c0_i32_0 = arith.constant 0 : i32
    %c0_i32_1 = arith.constant 0 : i32
    return %c0_i32, %c0_i32_0 : i32, i32
  }
  func.func @transform_13(%arg0: i32) -> (i32, i32, i32) {
    %c0_i32 = arith.constant 0 : i32
    %c0_i32_0 = arith.constant 0 : i32
    %c0_i32_1 = arith.constant 0 : i32
    return %arg0, %c0_i32, %c0_i32_0 : i32, i32, i32
  }
}

</mosaic_0001>

<llo_original>
// kernel: tpu_custom_call.1
$region0: #{tpu_custom_call.1}
  #allocation0 [shape = 'u32[]', space=smem, size = 0x4, offset = 0x4, fixed_abs, tag = 'smem constant byte address 0x4 - core index']
  #allocation1 [shape = 'u32[144,128]{1,0:T(1,128)}', space=vmem, size = 0x12000, scoped, tag = 'internal scratch']
  %s0 = inlined_call_operand.vmem [shape: f32[8,16,3], index: 0, kind: input, shape index: {}]
  %s1 = inlined_call_operand.vmem [shape: bf16[3,64], index: 1, kind: input, shape index: {}]
  %s2 = inlined_call_operand.vmem [shape: f32[1,64], index: 2, kind: input, shape index: {}]
  %s3 = inlined_call_operand.vmem [shape: bf16[64,128], index: 3, kind: input, shape index: {}]
  %s4 = inlined_call_operand.vmem [shape: f32[1,128], index: 4, kind: input, shape index: {}]
  %s5 = inlined_call_operand.hbm [shape: bf16[128,1024], index: 5, kind: input, shape index: {}]
  %s6 = inlined_call_operand.vmem [shape: f32[1,1024], index: 6, kind: input, shape index: {}]
  %s7 = inlined_call_operand.hbm [shape: bf16[1024,512], index: 7, kind: input, shape index: {}]
  %s8 = inlined_call_operand.vmem [shape: f32[1,512], index: 8, kind: input, shape index: {}]
  %s9 = inlined_call_operand.hbm [shape: bf16[512,256], index: 9, kind: input, shape index: {}]
  %s10 = inlined_call_operand.vmem [shape: f32[1,256], index: 10, kind: input, shape index: {}]
  %s11 = inlined_call_operand.vmem [shape: bf16[256,9], index: 11, kind: input, shape index: {}]
  %s12 = inlined_call_operand.vmem [shape: f32[1,9], index: 12, kind: input, shape index: {}]
  %s13 = inlined_call_operand.hbm [shape: f32[1,8,9], index: 13, kind: output, shape index: {}]
  %s14 = sld [smem:[#allocation0]]
  $region74: #{tpu_custom_call.1} parent=0
    _
  %s16 = ssub.s32 1, %s14
  %s17 = scalar_select 0, %s16, %s14
  $region1: #{tpu_custom_call.1} parent=0
    #allocation2 [shape = 'u8[262144]{0}', space=vmem, size = 0x40000, scoped, tag = 'input window, operand 5, single buffered']
    #allocation3 [shape = 's32[1]{0}', space=sflag, size = 0x4, scoped, tag = 'scoped memory for tpu_custom_call.1']
    #allocation4 [shape = 's32[1]{0}', space=sflag, size = 0x4, scoped, tag = 'scoped memory for tpu_custom_call.1']
    #allocation5 [shape = 'u8[1048576]{0}', space=vmem, size = 0x100000, scoped, tag = 'input window, operand 7, single buffered']
    #allocation6 [shape = 's32[1]{0}', space=sflag, size = 0x4, scoped, tag = 'scoped memory for tpu_custom_call.1']
    #allocation7 [shape = 'u8[262144]{0}', space=vmem, size = 0x40000, scoped, tag = 'input window, operand 9, single buffered']
    #allocation8 [shape = 'u8[4096]{0}', space=vmem, size = 0x1000, scoped, tag = 'output window, operand 0, single buffered']
    %18 = vsyncpa [#allocation3], 0
    %19 = vsyncpa [#allocation6], 0
    %20 = vsyncpa [#allocation4], 0
    // Predicated region
    $region2: #{tpu_custom_call.1} parent=1 // pred_check
      _
    $region3: #{tpu_custom_call.1} parent=1 // pred_check_branch
      %22 = sbr.rel (0) target = $region5
    $region4: #{tpu_custom_call.1} parent=1 // pred_region
      _
    $region5: #{tpu_custom_call.1} parent=1 // pred_fallthru
      _
    // Predicated region
    $region6: #{tpu_custom_call.1} parent=1 // pred_check
      _
    $region7: #{tpu_custom_call.1} parent=1 // pred_check_branch
      %24 = sbr.rel (0) target = $region9
    $region8: #{tpu_custom_call.1} parent=1 // pred_region
      _
    $region9: #{tpu_custom_call.1} parent=1 // pred_fallthru
      _
    // Predicated region
    $region10: #{tpu_custom_call.1} parent=1 // pred_check
      _
    $region11: #{tpu_custom_call.1} parent=1 // pred_check_branch
      %26 = sbr.rel (0) target = $region13
    $region12: #{tpu_custom_call.1} parent=1 // pred_region
      _
    $region13: #{tpu_custom_call.1} parent=1 // pred_fallthru
      _
    // Predicated region
    $region14: #{tpu_custom_call.1} parent=1 // pred_check
      _
    $region15: #{tpu_custom_call.1} parent=1 // pred_check_branch
      %28 = sbr.rel (0) target = $region17
    $region16: #{tpu_custom_call.1} parent=1 // pred_region
      _
    $region17: #{tpu_custom_call.1} parent=1 // pred_fallthru
      _
    // Predicated region
    $region18: #{tpu_custom_call.1} parent=1 // pred_check
      _
    $region19: #{tpu_custom_call.1} parent=1 // pred_check_branch
      %30 = sbr.rel (0) target = $region21
    $region20: #{tpu_custom_call.1} parent=1 // pred_region
      _
    $region21: #{tpu_custom_call.1} parent=1 // pred_fallthru
      _
    // Predicated region
    $region22: #{tpu_custom_call.1} parent=1 // pred_check
      _
    $region23: #{tpu_custom_call.1} parent=1 // pred_check_branch
      %32 = sbr.rel (0) target = $region25
    $region24: #{tpu_custom_call.1} parent=1 // pred_region
      %s34 = ssub.s32 8192, 8192
      %35 = vsyncadd [#allocation3], %s34
      %s36 = sshll.u32 [#allocation2], 4
      %s37 = int_to_ptr.vmem [resolvable:$true] %s36
      %42 = dma.hbm_to_vmem [thread:$0]  %s5, 8192, %s37, [#allocation3], 512, 512, 32
    $region25: #{tpu_custom_call.1} parent=1 // pred_fallthru
      _
    // Predicated region
    $region26: #{tpu_custom_call.1} parent=1 // pred_check
      _
    $region27: #{tpu_custom_call.1} parent=1 // pred_check_branch
      %44 = sbr.rel (0) target = $region29
    $region28: #{tpu_custom_call.1} parent=1 // pred_region
      _
    $region29: #{tpu_custom_call.1} parent=1 // pred_fallthru
      _
    // Predicated region
    $region30: #{tpu_custom_call.1} parent=1 // pred_check
      _
    $region31: #{tpu_custom_call.1} parent=1 // pred_check_branch
      %46 = sbr.rel (0) target = $region33
    $region32: #{tpu_custom_call.1} parent=1 // pred_region
      %s48 = ssub.s32 32768, 32768
      %49 = vsyncadd [#allocation6], %s48
      %s50 = sshll.u32 [#allocation5], 4
      %s51 = int_to_ptr.vmem [resolvable:$true] %s50
      %56 = dma.hbm_to_vmem [thread:$0]  %s7, 32768, %s51, [#allocation6], 256, 256, 16
    $region33: #{tpu_custom_call.1} parent=1 // pred_fallthru
      _
    // Predicated region
    $region34: #{tpu_custom_call.1} parent=1 // pred_check
      _
    $region35: #{tpu_custom_call.1} parent=1 // pred_check_branch
      %58 = sbr.rel (0) target = $region37
    $region36: #{tpu_custom_call.1} parent=1 // pred_region
      _
    $region37: #{tpu_custom_call.1} parent=1 // pred_fallthru
      _
    // Predicated region
    $region38: #{tpu_custom_call.1} parent=1 // pred_check
      _
    $region39: #{tpu_custom_call.1} parent=1 // pred_check_branch
      %60 = sbr.rel (0) target = $region41
    $region40: #{tpu_custom_call.1} parent=1 // pred_region
      %s62 = ssub.s32 8192, 8192
      %63 = vsyncadd [#allocation6], %s62
      %s64 = sshll.u32 [#allocation7], 4
      %s65 = int_to_ptr.vmem [resolvable:$true] %s64
      %70 = dma.hbm_to_vmem [thread:$0]  %s9, 8192, %s65, [#allocation6], 128, 128, 8
    $region41: #{tpu_custom_call.1} parent=1 // pred_fallthru
      _
    // Predicated region
    $region42: #{tpu_custom_call.1} parent=1 // pred_check
      _
    $region43: #{tpu_custom_call.1} parent=1 // pred_check_branch
      %72 = sbr.rel (0) target = $region45
    $region44: #{tpu_custom_call.1} parent=1 // pred_region
      _
    $region45: #{tpu_custom_call.1} parent=1 // pred_fallthru
      _
    // Predicated region
    $region46: #{tpu_custom_call.1} parent=1 // pred_check
      _
    $region47: #{tpu_custom_call.1} parent=1 // pred_check_branch
      %74 = sbr.rel (0) target = $region49
    $region48: #{tpu_custom_call.1} parent=1 // pred_region
      _
    $region49: #{tpu_custom_call.1} parent=1 // pred_fallthru
      _
    // Predicated region
    $region50: #{tpu_custom_call.1} parent=1 // pred_check
      _
    $region51: #{tpu_custom_call.1} parent=1 // pred_check_branch
      %76 = sbr.rel (0) target = $region53
    $region52: #{tpu_custom_call.1} parent=1 // pred_region
      _
    $region53: #{tpu_custom_call.1} parent=1 // pred_fallthru
      _
    // Predicated region
    $region54: #{tpu_custom_call.1} parent=1 // pred_check
      _
    $region55: #{tpu_custom_call.1} parent=1 // pred_check_branch
      %78 = sbr.rel (0) target = $region57
    $region56: #{tpu_custom_call.1} parent=1 // pred_region
      %79 = dma.done [#allocation3], 8192
    $region57: #{tpu_custom_call.1} parent=1 // pred_fallthru
      _
    // Predicated region
    $region58: #{tpu_custom_call.1} parent=1 // pred_check
      _
    $region59: #{tpu_custom_call.1} parent=1 // pred_check_branch
      %81 = sbr.rel (0) target = $region61
    $region60: #{tpu_custom_call.1} parent=1 // pred_region
      %82 = dma.done [#allocation6], 32768
    $region61: #{tpu_custom_call.1} parent=1 // pred_fallthru
      _
    // Predicated region
    $region62: #{tpu_custom_call.1} parent=1 // pred_check
      _
    $region63: #{tpu_custom_call.1} parent=1 // pred_check_branch
      %84 = sbr.rel (0) target = $region65
    $region64: #{tpu_custom_call.1} parent=1 // pred_region
      %85 = dma.done [#allocation6], 8192
    $region65: #{tpu_custom_call.1} parent=1 // pred_fallthru
      _
    %v87 = vld [vmem:[%s0] sm:$0xff]
    %v88 = vld [vmem:[%s0 + $0x8] sm:$0xff]
    %v89 = vld [vmem:[%s0 + $0x10] sm:$0xff]
    %v90 = vld [vmem:[%s0 + $0x18] sm:$0xff]
    %v91 = vld [vmem:[%s0 + $0x20] sm:$0xff]
    %v92 = vld [vmem:[%s0 + $0x28] sm:$0xff]
    %v93 = vld [vmem:[%s0 + $0x30] sm:$0xff]
    %v94 = vld [vmem:[%s0 + $0x38] sm:$0xff]
    %v95 = vld [vmem:[%s0 + $0x40] sm:$0xff]
    %v96 = vld [vmem:[%s0 + $0x48] sm:$0xff]
    %v97 = vld [vmem:[%s0 + $0x50] sm:$0xff]
    %v98 = vld [vmem:[%s0 + $0x58] sm:$0xff]
    %v99 = vld [vmem:[%s0 + $0x60] sm:$0xff]
    %v100 = vld [vmem:[%s0 + $0x68] sm:$0xff]
    %v101 = vld [vmem:[%s0 + $0x70] sm:$0xff]
    %v102 = vld [vmem:[%s0 + $0x78] sm:$0xff]
    %v103 = vpack.c.bf16 %v88, %v87
    %v104 = vpack.c.bf16 %v90, %v89
    %v105 = vpack.c.bf16 %v92, %v91
    %v106 = vpack.c.bf16 %v94, %v93
    %v107 = vpack.c.bf16 %v96, %v95
    %v108 = vpack.c.bf16 %v98, %v97
    %v109 = vpack.c.bf16 %v100, %v99
    %v110 = vpack.c.bf16 %v102, %v101
    %v111 = vld [vmem:[%s1] sm:$0x3]
    %v112 = vld [vmem:[%s2] sm:$0x1]
    %v114 = vlaneseq
    %v115 = vshrl.u32 %v114, 7
    %v116 = vsub.s32 0, %v115
    %v117 = vrot.slane %v112, %v116
    %vm119 = vcmask 23552
    %v121 = vsel %vm119, %v103, 0
    %v124 = vsel %vm119, %v104, 0
    %v127 = vsel %vm119, %v105, 0
    %v130 = vsel %vm119, %v106, 0
    %v133 = vsel %vm119, %v107, 0
    %v136 = vsel %vm119, %v108, 0
    %v139 = vsel %vm119, %v109, 0
    %v142 = vsel %vm119, %v110, 0
    %vm144 = vcmask 1040384
    %vm145 = vcmask 1041408
    %v146 = vsel %vm144, 4294967295, 65535
    %v147 = vsel %vm145, %v146, 0
    %v149 = vand.u32 %v111, %v147
    %151 = vmatprep.subr.bf16.mxu0 0
    %152 = vmatpush1.bf16.msra.mxu0 0
    %153 = vmatprep.subr.bf16.mxu0 0
    %154 = vmatpush1.bf16.msra.mxu0 0
    %155 = vmatprep.subr.bf16.mxu0 0
    %156 = vmatpush1.bf16.msra.mxu0 0
    %157 = vmatprep.subr.bf16.mxu0 0
    %158 = vmatpush1.bf16.msra.mxu0 0
    %159 = vmatprep.subr.bf16.mxu0 0
    %160 = vmatpush1.bf16.msra.mxu0 0
    %161 = vmatprep.subr.bf16.mxu0 0
    %162 = vmatpush1.bf16.msra.mxu0 0
    %163 = vmatprep.subr.bf16.mxu0 0
    %164 = vmatpush1.bf16.msra.mxu0 0
    %165 = vmatprep.subr.bf16.mxu0 0
    %166 = vmatpush1.bf16.msra.mxu0 %v149
    %167 = vmatprep.subr.bf16.mxu0 0
    %168 = vmatpush2.bf16.msra.mxu0 0
    %169 = vmatprep.subr.bf16.mxu0 0
    %170 = vmatpush2.bf16.msra.mxu0 0
    %171 = vmatprep.subr.bf16.mxu0 0
    %172 = vmatpush2.bf16.msra.mxu0 0
    %173 = vmatprep.subr.bf16.mxu0 0
    %174 = vmatpush2.bf16.msra.mxu0 0
    %175 = vmatprep.subr.bf16.mxu0 0
    %176 = vmatpush2.bf16.msra.mxu0 0
    %177 = vmatprep.subr.bf16.mxu0 0
    %178 = vmatpush2.bf16.msra.mxu0 0
    %179 = vmatprep.subr.bf16.mxu0 0
    %180 = vmatpush2.bf16.msra.mxu0 0
    %181 = vmatprep.subr.bf16.mxu0 0
    %182 = vmatpush2.bf16.msra.mxu0 0
    %183 = vmatprep.mubr.bf16.mxu0 0
    %184 = vmatmul.mubr.bf16.gmra.mxu0 %v121
    %v185 = vpop.f32.mrf.mxu0
    %v186 = vadd.f32 %v117, %v185
    %v187 = vpop.f32.mrf.mxu0
    %v188 = vpop.f32.mrf.mxu0
    %v189 = vadd.f32 %v117, %v188
    %v190 = vpop.f32.mrf.mxu0
    %191 = vmatprep.mubr.bf16.mxu0 0
    %192 = vmatmul.mubr.bf16.gmra.mxu0 %v124
    %v193 = vpop.f32.mrf.mxu0
    %v194 = vadd.f32 %v117, %v193
    %v195 = vpop.f32.mrf.mxu0
    %v196 = vpop.f32.mrf.mxu0
    %v197 = vadd.f32 %v117, %v196
    %v198 = vpop.f32.mrf.mxu0
    %199 = vmatprep.mubr.bf16.mxu0 0
    %200 = vmatmul.mubr.bf16.gmra.mxu0 %v127
    %v201 = vpop.f32.mrf.mxu0
    %v202 = vadd.f32 %v117, %v201
    %v203 = vpop.f32.mrf.mxu0
    %v204 = vpop.f32.mrf.mxu0
    %v205 = vadd.f32 %v117, %v204
    %v206 = vpop.f32.mrf.mxu0
    %207 = vmatprep.mubr.bf16.mxu0 0
    %208 = vmatmul.mubr.bf16.gmra.mxu0 %v130
    %v209 = vpop.f32.mrf.mxu0
    %v210 = vadd.f32 %v117, %v209
    %v211 = vpop.f32.mrf.mxu0
    %v212 = vpop.f32.mrf.mxu0
    %v213 = vadd.f32 %v117, %v212
    %v214 = vpop.f32.mrf.mxu0
    %215 = vmatprep.mubr.bf16.mxu0 0
    %216 = vmatmul.mubr.bf16.gmra.mxu0 %v133
    %v217 = vpop.f32.mrf.mxu0
    %v218 = vadd.f32 %v117, %v217
    %v219 = vpop.f32.mrf.mxu0
    %v220 = vpop.f32.mrf.mxu0
    %v221 = vadd.f32 %v117, %v220
    %v222 = vpop.f32.mrf.mxu0
    %223 = vmatprep.mubr.bf16.mxu0 0
    %224 = vmatmul.mubr.bf16.gmra.mxu0 %v136
    %v225 = vpop.f32.mrf.mxu0
    %v226 = vadd.f32 %v117, %v225
    %v227 = vpop.f32.mrf.mxu0
    %v228 = vpop.f32.mrf.mxu0
    %v229 = vadd.f32 %v117, %v228
    %v230 = vpop.f32.mrf.mxu0
    %231 = vmatprep.mubr.bf16.mxu0 0
    %232 = vmatmul.mubr.bf16.gmra.mxu0 %v139
    %v233 = vpop.f32.mrf.mxu0
    %v234 = vadd.f32 %v117, %v233
    %v235 = vpop.f32.mrf.mxu0
    %v236 = vpop.f32.mrf.mxu0
    %v237 = vadd.f32 %v117, %v236
    %v238 = vpop.f32.mrf.mxu0
    %239 = vmatprep.mubr.bf16.mxu0 0
    %240 = vmatmul.mubr.bf16.gmra.mxu0 %v142
    %v241 = vpop.f32.mrf.mxu0
    %v242 = vadd.f32 %v117, %v241
    %v243 = vpop.f32.mrf.mxu0
    %v244 = vpop.f32.mrf.mxu0
    %v245 = vadd.f32 %v117, %v244
    %v246 = vpop.f32.mrf.mxu0
    %247 = vdwg.mxu0
    %v248 = vmax.f32 %v186, 0.0
    %v249 = vmax.f32 %v189, 0.0
    %v250 = vmax.f32 %v194, 0.0
    %v251 = vmax.f32 %v197, 0.0
    %v252 = vmax.f32 %v202, 0.0
    %v253 = vmax.f32 %v205, 0.0
    %v254 = vmax.f32 %v210, 0.0
    %v255 = vmax.f32 %v213, 0.0
    %v256 = vmax.f32 %v218, 0.0
    %v257 = vmax.f32 %v221, 0.0
    %v258 = vmax.f32 %v226, 0.0
    %v259 = vmax.f32 %v229, 0.0
    %v260 = vmax.f32 %v234, 0.0
    %v261 = vmax.f32 %v237, 0.0
    %v262 = vmax.f32 %v242, 0.0
    %v263 = vmax.f32 %v245, 0.0
    %v264 = vpack.c.bf16 %v249, %v248
    %v265 = vpack.c.bf16 %v251, %v250
    %v266 = vpack.c.bf16 %v253, %v252
    %v267 = vpack.c.bf16 %v255, %v254
    %v268 = vpack.c.bf16 %v257, %v256
    %v269 = vpack.c.bf16 %v259, %v258
    %v270 = vpack.c.bf16 %v261, %v260
    %v271 = vpack.c.bf16 %v263, %v262
    %v272 = vld [vmem:[%s3] sm:$0xf]
    %v273 = vld [vmem:[%s3 + $0x4] sm:$0xf]
    %v274 = vld [vmem:[%s3 + $0x8] sm:$0xf]
    %v275 = vld [vmem:[%s3 + $0xc] sm:$0xf]
    %v276 = vld [vmem:[%s3 + $0x10] sm:$0xf]
    %v277 = vld [vmem:[%s3 + $0x14] sm:$0xf]
    %v278 = vld [vmem:[%s3 + $0x18] sm:$0xf]
    %v279 = vld [vmem:[%s3 + $0x1c] sm:$0xf]
    %v280 = vld [vmem:[%s4] sm:$0x1]
    %v282 = vlaneseq
    %v283 = vshrl.u32 %v282, 7
    %v284 = vsub.s32 0, %v283
    %v285 = vrot.slane %v280, %v284
    %v295 = vunpack.c.l.b16 %v272
    %v296 = vunpack.c.l.b16 %v273
    %v297 = vunpack.c.l.b16 %v274
    %v298 = vunpack.c.l.b16 %v275
    %v299 = vunpack.c.l.b16 %v276
    %v300 = vunpack.c.l.b16 %v277
    %v301 = vunpack.c.l.b16 %v278
    %v302 = vunpack.c.l.b16 %v279
    %v303 = vpack.c.b16 %v296, %v295
    %v304 = vpack.c.b16 %v298, %v297
    %v305 = vpack.c.b16 %v300, %v299
    %v306 = vpack.c.b16 %v302, %v301
    %vm311 = vcmask 523264
    %v313 = vsel %vm311, %v264, 0
    %v316 = vsel %vm311, %v265, 0
    %v319 = vsel %vm311, %v266, 0
    %v322 = vsel %vm311, %v267, 0
    %v325 = vsel %vm311, %v268, 0
    %v328 = vsel %vm311, %v269, 0
    %v331 = vsel %vm311, %v270, 0
    %v334 = vsel %vm311, %v271, 0
    %336 = vmatprep.subr.bf16.mxu0 0
    %337 = vmatpush1.bf16.msra.mxu0 0
    %338 = vmatprep.subr.bf16.mxu0 0
    %339 = vmatpush1.bf16.msra.mxu0 0
    %340 = vmatprep.subr.bf16.mxu0 0
    %341 = vmatpush1.bf16.msra.mxu0 0
    %342 = vmatprep.subr.bf16.mxu0 0
    %343 = vmatpush1.bf16.msra.mxu0 0
    %344 = vmatprep.subr.bf16.mxu0 0
    %345 = vmatpush1.bf16.msra.mxu0 %v306
    %346 = vmatprep.subr.bf16.mxu0 0
    %347 = vmatpush1.bf16.msra.mxu0 %v305
    %348 = vmatprep.subr.bf16.mxu0 0
    %349 = vmatpush1.bf16.msra.mxu0 %v304
    %350 = vmatprep.subr.bf16.mxu0 0
    %351 = vmatpush1.bf16.msra.mxu0 %v303
    %352 = vmatprep.subr.bf16.mxu0 0
    %353 = vmatpush2.bf16.msra.mxu0 0
    %354 = vmatprep.subr.bf16.mxu0 0
    %355 = vmatpush2.bf16.msra.mxu0 0
    %356 = vmatprep.subr.bf16.mxu0 0
    %357 = vmatpush2.bf16.msra.mxu0 0
    %358 = vmatprep.subr.bf16.mxu0 0
    %359 = vmatpush2.bf16.msra.mxu0 0
    %360 = vmatprep.subr.bf16.mxu0 0
    %361 = vmatpush2.bf16.msra.mxu0 0
    %362 = vmatprep.subr.bf16.mxu0 0
    %363 = vmatpush2.bf16.msra.mxu0 0
    %364 = vmatprep.subr.bf16.mxu0 0
    %365 = vmatpush2.bf16.msra.mxu0 0
    %366 = vmatprep.subr.bf16.mxu0 0
    %367 = vmatpush2.bf16.msra.mxu0 0
    %368 = vmatprep.mubr.bf16.mxu0 0
    %369 = vmatmul.mubr.bf16.gmra.mxu0 %v313
    %v370 = vpop.f32.mrf.mxu0
    %v371 = vadd.f32 %v285, %v370
    %v372 = vpop.f32.mrf.mxu0
    %v373 = vpop.f32.mrf.mxu0
    %v374 = vadd.f32 %v285, %v373
    %v375 = vpop.f32.mrf.mxu0
    %376 = vmatprep.mubr.bf16.mxu0 0
    %377 = vmatmul.mubr.bf16.gmra.mxu0 %v316
    %v378 = vpop.f32.mrf.mxu0
    %v379 = vadd.f32 %v285, %v378
    %v380 = vpop.f32.mrf.mxu0
    %v381 = vpop.f32.mrf.mxu0
    %v382 = vadd.f32 %v285, %v381
    %v383 = vpop.f32.mrf.mxu0
    %384 = vmatprep.mubr.bf16.mxu0 0
    %385 = vmatmul.mubr.bf16.gmra.mxu0 %v319
    %v386 = vpop.f32.mrf.mxu0
    %v387 = vadd.f32 %v285, %v386
    %v388 = vpop.f32.mrf.mxu0
    %v389 = vpop.f32.mrf.mxu0
    %v390 = vadd.f32 %v285, %v389
    %v391 = vpop.f32.mrf.mxu0
    %392 = vmatprep.mubr.bf16.mxu0 0
    %393 = vmatmul.mubr.bf16.gmra.mxu0 %v322
    %v394 = vpop.f32.mrf.mxu0
    %v395 = vadd.f32 %v285, %v394
    %v396 = vpop.f32.mrf.mxu0
    %v397 = vpop.f32.mrf.mxu0
    %v398 = vadd.f32 %v285, %v397
    %v399 = vpop.f32.mrf.mxu0
    %400 = vmatprep.mubr.bf16.mxu0 0
    %401 = vmatmul.mubr.bf16.gmra.mxu0 %v325
    %v402 = vpop.f32.mrf.mxu0
    %v403 = vadd.f32 %v285, %v402
    %v404 = vpop.f32.mrf.mxu0
    %v405 = vpop.f32.mrf.mxu0
    %v406 = vadd.f32 %v285, %v405
    %v407 = vpop.f32.mrf.mxu0
    %408 = vmatprep.mubr.bf16.mxu0 0
    %409 = vmatmul.mubr.bf16.gmra.mxu0 %v328
    %v410 = vpop.f32.mrf.mxu0
    %v411 = vadd.f32 %v285, %v410
    %v412 = vpop.f32.mrf.mxu0
    %v413 = vpop.f32.mrf.mxu0
    %v414 = vadd.f32 %v285, %v413
    %v415 = vpop.f32.mrf.mxu0
    %416 = vmatprep.mubr.bf16.mxu0 0
    %417 = vmatmul.mubr.bf16.gmra.mxu0 %v331
    %v418 = vpop.f32.mrf.mxu0
    %v419 = vadd.f32 %v285, %v418
    %v420 = vpop.f32.mrf.mxu0
    %v421 = vpop.f32.mrf.mxu0
    %v422 = vadd.f32 %v285, %v421
    %v423 = vpop.f32.mrf.mxu0
    %424 = vmatprep.mubr.bf16.mxu0 0
    %425 = vmatmul.mubr.bf16.gmra.mxu0 %v334
    %v426 = vpop.f32.mrf.mxu0
    %v427 = vadd.f32 %v285, %v426
    %v428 = vpop.f32.mrf.mxu0
    %v429 = vpop.f32.mrf.mxu0
    %v430 = vadd.f32 %v285, %v429
    %v431 = vpop.f32.mrf.mxu0
    %432 = vdwg.mxu0
    %v433 = vmax.f32 %v371, 0.0
    %v434 = vmax.f32 %v374, 0.0
    %v435 = vmax.f32 %v379, 0.0
    %v436 = vmax.f32 %v382, 0.0
    %v437 = vmax.f32 %v387, 0.0
    %v438 = vmax.f32 %v390, 0.0
    %v439 = vmax.f32 %v395, 0.0
    %v440 = vmax.f32 %v398, 0.0
    %v441 = vmax.f32 %v403, 0.0
    %v442 = vmax.f32 %v406, 0.0
    %v443 = vmax.f32 %v411, 0.0
    %v444 = vmax.f32 %v414, 0.0
    %v445 = vmax.f32 %v419, 0.0
    %v446 = vmax.f32 %v422, 0.0
    %v447 = vmax.f32 %v427, 0.0
    %v448 = vmax.f32 %v430, 0.0
    %v449 = vpack.c.bf16 %v434, %v433
    %v450 = vpack.c.bf16 %v436, %v435
    %v451 = vpack.c.bf16 %v438, %v437
    %v452 = vpack.c.bf16 %v440, %v439
    %v453 = vpack.c.bf16 %v442, %v441
    %v454 = vpack.c.bf16 %v444, %v443
    %v455 = vpack.c.bf16 %v446, %v445
    %v456 = vpack.c.bf16 %v448, %v447
    %v457 = vld [vmem:[#allocation2] sm:$0xff]
    %v458 = vld [vmem:[#allocation2 + $0x8] sm:$0xff]
    %v459 = vld [vmem:[#allocation2 + $0x10] sm:$0xff]
    %v460 = vld [vmem:[#allocation2 + $0x18] sm:$0xff]
    %v461 = vld [vmem:[#allocation2 + $0x20] sm:$0xff]
    %v462 = vld [vmem:[#allocation2 + $0x28] sm:$0xff]
    %v463 = vld [vmem:[#allocation2 + $0x30] sm:$0xff]
    %v464 = vld [vmem:[#allocation2 + $0x38] sm:$0xff]
    %v465 = vld [vmem:[#allocation2 + $0x40] sm:$0xff]
    %v466 = vld [vmem:[#allocation2 + $0x48] sm:$0xff]
    %v467 = vld [vmem:[#allocation2 + $0x50] sm:$0xff]
    %v468 = vld [vmem:[#allocation2 + $0x58] sm:$0xff]
    %v469 = vld [vmem:[#allocation2 + $0x60] sm:$0xff]
    %v470 = vld [vmem:[#allocation2 + $0x68] sm:$0xff]
    %v471 = vld [vmem:[#allocation2 + $0x70] sm:$0xff]
    %v472 = vld [vmem:[#allocation2 + $0x78] sm:$0xff]
    %v473 = vld [vmem:[#allocation2 + $0x80] sm:$0xff]
    %v474 = vld [vmem:[#allocation2 + $0x88] sm:$0xff]
    %v475 = vld [vmem:[#allocation2 + $0x90] sm:$0xff]
    %v476 = vld [vmem:[#allocation2 + $0x98] sm:$0xff]
    %v477 = vld [vmem:[#allocation2 + $0xa0] sm:$0xff]
    %v478 = vld [vmem:[#allocation2 + $0xa8] sm:$0xff]
    %v479 = vld [vmem:[#allocation2 + $0xb0] sm:$0xff]
    %v480 = vld [vmem:[#allocation2 + $0xb8] sm:$0xff]
    %v481 = vld [vmem:[#allocation2 + $0xc0] sm:$0xff]
    %v482 = vld [vmem:[#allocation2 + $0xc8] sm:$0xff]
    %v483 = vld [vmem:[#allocation2 + $0xd0] sm:$0xff]
    %v484 = vld [vmem:[#allocation2 + $0xd8] sm:$0xff]
    %v485 = vld [vmem:[#allocation2 + $0xe0] sm:$0xff]
    %v486 = vld [vmem:[#allocation2 + $0xe8] sm:$0xff]
    %v487 = vld [vmem:[#allocation2 + $0xf0] sm:$0xff]
    %v488 = vld [vmem:[#allocation2 + $0xf8] sm:$0xff]
    %v489 = vld [vmem:[#allocation2 + $0x100] sm:$0xff]
    %v490 = vld [vmem:[#allocation2 + $0x108] sm:$0xff]
    %v491 = vld [vmem:[#allocation2 + $0x110] sm:$0xff]
    %v492 = vld [vmem:[#allocation2 + $0x118] sm:$0xff]
    %v493 = vld [vmem:[#allocation2 + $0x120] sm:$0xff]
    %v494 = vld [vmem:[#allocation2 + $0x128] sm:$0xff]
    %v495 = vld [vmem:[#allocation2 + $0x130] sm:$0xff]
    %v496 = vld [vmem:[#allocation2 + $0x138] sm:$0xff]
    %v497 = vld [vmem:[#allocation2 + $0x140] sm:$0xff]
    %v498 = vld [vmem:[#allocation2 + $0x148] sm:$0xff]
    %v499 = vld [vmem:[#allocation2 + $0x150] sm:$0xff]
    %v500 = vld [vmem:[#allocation2 + $0x158] sm:$0xff]
    %v501 = vld [vmem:[#allocation2 + $0x160] sm:$0xff]
    %v502 = vld [vmem:[#allocation2 + $0x168] sm:$0xff]
    %v503 = vld [vmem:[#allocation2 + $0x170] sm:$0xff]
    %v504 = vld [vmem:[#allocation2 + $0x178] sm:$0xff]
    %v505 = vld [vmem:[#allocation2 + $0x180] sm:$0xff]
    %v506 = vld [vmem:[#allocation2 + $0x188] sm:$0xff]
    %v507 = vld [vmem:[#allocation2 + $0x190] sm:$0xff]
    %v508 = vld [vmem:[#allocation2 + $0x198] sm:$0xff]
    %v509 = vld [vmem:[#allocation2 + $0x1a0] sm:$0xff]
    %v510 = vld [vmem:[#allocation2 + $0x1a8] sm:$0xff]
    %v511 = vld [vmem:[#allocation2 + $0x1b0] sm:$0xff]
    %v512 = vld [vmem:[#allocation2 + $0x1b8] sm:$0xff]
    %v513 = vld [vmem:[#allocation2 + $0x1c0] sm:$0xff]
    %v514 = vld [vmem:[#allocation2 + $0x1c8] sm:$0xff]
    %v515 = vld [vmem:[#allocation2 + $0x1d0] sm:$0xff]
    %v516 = vld [vmem:[#allocation2 + $0x1d8] sm:$0xff]
    %v517 = vld [vmem:[#allocation2 + $0x1e0] sm:$0xff]
    %v518 = vld [vmem:[#allocation2 + $0x1e8] sm:$0xff]
    %v519 = vld [vmem:[#allocation2 + $0x1f0] sm:$0xff]
    %v520 = vld [vmem:[#allocation2 + $0x1f8] sm:$0xff]
    %v521 = vld [vmem:[%s6] sm:$0xff]
    %v523 = vlaneseq
    %v524 = vshrl.u32 %v523, 7
    %v525 = vsub.s32 0, %v524
    %v526 = vrot.slane %v521, %v525
    %v527 = vlaneseq
    %v528 = vshrl.u32 %v527, 7
    %v529 = vsub.s32 1, %v528
    %v530 = vrot.slane %v521, %v529
    %v531 = vlaneseq
    %v532 = vshrl.u32 %v531, 7
    %v533 = vsub.s32 2, %v532
    %v534 = vrot.slane %v521, %v533
    %v535 = vlaneseq
    %v536 = vshrl.u32 %v535, 7
    %v537 = vsub.s32 3, %v536
    %v538 = vrot.slane %v521, %v537
    %v539 = vlaneseq
    %v540 = vshrl.u32 %v539, 7
    %v541 = vsub.s32 4, %v540
    %v542 = vrot.slane %v521, %v541
    %v543 = vlaneseq
    %v544 = vshrl.u32 %v543, 7
    %v545 = vsub.s32 5, %v544
    %v546 = vrot.slane %v521, %v545
    %v547 = vlaneseq
    %v548 = vshrl.u32 %v547, 7
    %v549 = vsub.s32 6, %v548
    %v550 = vrot.slane %v521, %v549
    %v551 = vlaneseq
    %v552 = vshrl.u32 %v551, 7
    %v553 = vsub.s32 7, %v552
    %v554 = vrot.slane %v521, %v553
    %v627 = vunpack.c.l.b16 %v457
    %v628 = vunpack.c.h.b16 %v457
    %v629 = vunpack.c.l.b16 %v458
    %v630 = vunpack.c.h.b16 %v458
    %v631 = vunpack.c.l.b16 %v459
    %v632 = vunpack.c.h.b16 %v459
    %v633 = vunpack.c.l.b16 %v460
    %v634 = vunpack.c.h.b16 %v460
    %v635 = vunpack.c.l.b16 %v461
    %v636 = vunpack.c.h.b16 %v461
    %v637 = vunpack.c.l.b16 %v462
    %v638 = vunpack.c.h.b16 %v462
    %v639 = vunpack.c.l.b16 %v463
    %v640 = vunpack.c.h.b16 %v463
    %v641 = vunpack.c.l.b16 %v464
    %v642 = vunpack.c.h.b16 %v464
    %v643 = vunpack.c.l.b16 %v465
    %v644 = vunpack.c.h.b16 %v465
    %v645 = vunpack.c.l.b16 %v466
    %v646 = vunpack.c.h.b16 %v466
    %v647 = vunpack.c.l.b16 %v467
    %v648 = vunpack.c.h.b16 %v467
    %v649 = vunpack.c.l.b16 %v468
    %v650 = vunpack.c.h.b16 %v468
    %v651 = vunpack.c.l.b16 %v469
    %v652 = vunpack.c.h.b16 %v469
    %v653 = vunpack.c.l.b16 %v470
    %v654 = vunpack.c.h.b16 %v470
    %v655 = vunpack.c.l.b16 %v471
    %v656 = vunpack.c.h.b16 %v471
    %v657 = vunpack.c.l.b16 %v472
    %v658 = vunpack.c.h.b16 %v472
    %v659 = vunpack.c.l.b16 %v473
    %v660 = vunpack.c.h.b16 %v473
    %v661 = vunpack.c.l.b16 %v474
    %v662 = vunpack.c.h.b16 %v474
    %v663 = vunpack.c.l.b16 %v475
    %v664 = vunpack.c.h.b16 %v475
    %v665 = vunpack.c.l.b16 %v476
    %v666 = vunpack.c.h.b16 %v476
    %v667 = vunpack.c.l.b16 %v477
    %v668 = vunpack.c.h.b16 %v477
    %v669 = vunpack.c.l.b16 %v478
    %v670 = vunpack.c.h.b16 %v478
    %v671 = vunpack.c.l.b16 %v479
    %v672 = vunpack.c.h.b16 %v479
    %v673 = vunpack.c.l.b16 %v480
    %v674 = vunpack.c.h.b16 %v480
    %v675 = vunpack.c.l.b16 %v481
    %v676 = vunpack.c.h.b16 %v481
    %v677 = vunpack.c.l.b16 %v482
    %v678 = vunpack.c.h.b16 %v482
    %v679 = vunpack.c.l.b16 %v483
    %v680 = vunpack.c.h.b16 %v483
    %v681 = vunpack.c.l.b16 %v484
    %v682 = vunpack.c.h.b16 %v484
    %v683 = vunpack.c.l.b16 %v485
    %v684 = vunpack.c.h.b16 %v485
    %v685 = vunpack.c.l.b16 %v486
    %v686 = vunpack.c.h.b16 %v486
    %v687 = vunpack.c.l.b16 %v487
    %v688 = vunpack.c.h.b16 %v487
    %v689 = vunpack.c.l.b16 %v488
    %v690 = vunpack.c.h.b16 %v488
    %v691 = vunpack.c.l.b16 %v489
    %v692 = vunpack.c.h.b16 %v489
    %v693 = vunpack.c.l.b16 %v490
    %v694 = vunpack.c.h.b16 %v490
    %v695 = vunpack.c.l.b16 %v491
    %v696 = vunpack.c.h.b16 %v491
    %v697 = vunpack.c.l.b16 %v492
    %v698 = vunpack.c.h.b16 %v492
    %v699 = vunpack.c.l.b16 %v493
    %v700 = vunpack.c.h.b16 %v493
    %v701 = vunpack.c.l.b16 %v494
    %v702 = vunpack.c.h.b16 %v494
    %v703 = vunpack.c.l.b16 %v495
    %v704 = vunpack.c.h.b16 %v495
    %v705 = vunpack.c.l.b16 %v496
    %v706 = vunpack.c.h.b16 %v496
    %v707 = vunpack.c.l.b16 %v497
    %v708 = vunpack.c.h.b16 %v497
    %v709 = vunpack.c.l.b16 %v498
    %v710 = vunpack.c.h.b16 %v498
    %v711 = vunpack.c.l.b16 %v499
    %v712 = vunpack.c.h.b16 %v499
    %v713 = vunpack.c.l.b16 %v500
    %v714 = vunpack.c.h.b16 %v500
    %v715 = vunpack.c.l.b16 %v501
    %v716 = vunpack.c.h.b16 %v501
    %v717 = vunpack.c.l.b16 %v502
    %v718 = vunpack.c.h.b16 %v502
    %v719 = vunpack.c.l.b16 %v503
    %v720 = vunpack.c.h.b16 %v503
    %v721 = vunpack.c.l.b16 %v504
    %v722 = vunpack.c.h.b16 %v504
    %v723 = vunpack.c.l.b16 %v505
    %v724 = vunpack.c.h.b16 %v505
    %v725 = vunpack.c.l.b16 %v506
    %v726 = vunpack.c.h.b16 %v506
    %v727 = vunpack.c.l.b16 %v507
    %v728 = vunpack.c.h.b16 %v507
    %v729 = vunpack.c.l.b16 %v508
    %v730 = vunpack.c.h.b16 %v508
    %v731 = vunpack.c.l.b16 %v509
    %v732 = vunpack.c.h.b16 %v509
    %v733 = vunpack.c.l.b16 %v510
    %v734 = vunpack.c.h.b16 %v510
    %v735 = vunpack.c.l.b16 %v511
    %v736 = vunpack.c.h.b16 %v511
    %v737 = vunpack.c.l.b16 %v512
    %v738 = vunpack.c.h.b16 %v512
    %v739 = vunpack.c.l.b16 %v513
    %v740 = vunpack.c.h.b16 %v513
    %v741 = vunpack.c.l.b16 %v514
    %v742 = vunpack.c.h.b16 %v514
    %v743 = vunpack.c.l.b16 %v515
    %v744 = vunpack.c.h.b16 %v515
    %v745 = vunpack.c.l.b16 %v516
    %v746 = vunpack.c.h.b16 %v516
    %v747 = vunpack.c.l.b16 %v517
    %v748 = vunpack.c.h.b16 %v517
    %v749 = vunpack.c.l.b16 %v518
    %v750 = vunpack.c.h.b16 %v518
    %v751 = vunpack.c.l.b16 %v519
    %v752 = vunpack.c.h.b16 %v519
    %v753 = vunpack.c.l.b16 %v520
    %v754 = vunpack.c.h.b16 %v520
    %v755 = vpack.c.b16 %v635, %v627
    %v756 = vpack.c.b16 %v636, %v628
    %v757 = vpack.c.b16 %v637, %v629
    %v758 = vpack.c.b16 %v638, %v630
    %v759 = vpack.c.b16 %v639, %v631
    %v760 = vpack.c.b16 %v640, %v632
    %v761 = vpack.c.b16 %v641, %v633
    %v762 = vpack.c.b16 %v642, %v634
    %v763 = vpack.c.b16 %v651, %v643
    %v764 = vpack.c.b16 %v652, %v644
    %v765 = vpack.c.b16 %v653, %v645
    %v766 = vpack.c.b16 %v654, %v646
    %v767 = vpack.c.b16 %v655, %v647
    %v768 = vpack.c.b16 %v656, %v648
    %v769 = vpack.c.b16 %v657, %v649
    %v770 = vpack.c.b16 %v658, %v650
    %v771 = vpack.c.b16 %v667, %v659
    %v772 = vpack.c.b16 %v668, %v660
    %v773 = vpack.c.b16 %v669, %v661
    %v774 = vpack.c.b16 %v670, %v662
    %v775 = vpack.c.b16 %v671, %v663
    %v776 = vpack.c.b16 %v672, %v664
    %v777 = vpack.c.b16 %v673, %v665
    %v778 = vpack.c.b16 %v674, %v666
    %v779 = vpack.c.b16 %v683, %v675
    %v780 = vpack.c.b16 %v684, %v676
    %v781 = vpack.c.b16 %v685, %v677
    %v782 = vpack.c.b16 %v686, %v678
    %v783 = vpack.c.b16 %v687, %v679
    %v784 = vpack.c.b16 %v688, %v680
    %v785 = vpack.c.b16 %v689, %v681
    %v786 = vpack.c.b16 %v690, %v682
    %v787 = vpack.c.b16 %v699, %v691
    %v788 = vpack.c.b16 %v700, %v692
    %v789 = vpack.c.b16 %v701, %v693
    %v790 = vpack.c.b16 %v702, %v694
    %v791 = vpack.c.b16 %v703, %v695
    %v792 = vpack.c.b16 %v704, %v696
    %v793 = vpack.c.b16 %v705, %v697
    %v794 = vpack.c.b16 %v706, %v698
    %v795 = vpack.c.b16 %v715, %v707
    %v796 = vpack.c.b16 %v716, %v708
    %v797 = vpack.c.b16 %v717, %v709
    %v798 = vpack.c.b16 %v718, %v710
    %v799 = vpack.c.b16 %v719, %v711
    %v800 = vpack.c.b16 %v720, %v712
    %v801 = vpack.c.b16 %v721, %v713
    %v802 = vpack.c.b16 %v722, %v714
    %v803 = vpack.c.b16 %v731, %v723
    %v804 = vpack.c.b16 %v732, %v724
    %v805 = vpack.c.b16 %v733, %v725
    %v806 = vpack.c.b16 %v734, %v726
    %v807 = vpack.c.b16 %v735, %v727
    %v808 = vpack.c.b16 %v736, %v728
    %v809 = vpack.c.b16 %v737, %v729
    %v810 = vpack.c.b16 %v738, %v730
    %v811 = vpack.c.b16 %v747, %v739
    %v812 = vpack.c.b16 %v748, %v740
    %v813 = vpack.c.b16 %v749, %v741
    %v814 = vpack.c.b16 %v750, %v742
    %v815 = vpack.c.b16 %v751, %v743
    %v816 = vpack.c.b16 %v752, %v744
    %v817 = vpack.c.b16 %v753, %v745
    %v818 = vpack.c.b16 %v754, %v746
    %883 = vmatprep.subr.bf16.mxu0 %v812
    %884 = vmatpush1.bf16.msra.mxu0 %v811
    %885 = vmatprep.subr.bf16.mxu0 %v804
    %886 = vmatpush1.bf16.msra.mxu0 %v803
    %887 = vmatprep.subr.bf16.mxu0 %v796
    %888 = vmatpush1.bf16.msra.mxu0 %v795
    %889 = vmatprep.subr.bf16.mxu0 %v788
    %890 = vmatpush1.bf16.msra.mxu0 %v787
    %891 = vmatprep.subr.bf16.mxu0 %v780
    %892 = vmatpush1.bf16.msra.mxu0 %v779
    %893 = vmatprep.subr.bf16.mxu0 %v772
    %894 = vmatpush1.bf16.msra.mxu0 %v771
    %895 = vmatprep.subr.bf16.mxu0 %v764
    %896 = vmatpush1.bf16.msra.mxu0 %v763
    %897 = vmatprep.subr.bf16.mxu0 %v756
    %898 = vmatpush1.bf16.msra.mxu0 %v755
    %899 = vmatprep.subr.bf16.mxu0 0
    %900 = vmatpush2.bf16.msra.mxu0 0
    %901 = vmatprep.subr.bf16.mxu0 0
    %902 = vmatpush2.bf16.msra.mxu0 0
    %903 = vmatprep.subr.bf16.mxu0 0
    %904 = vmatpush2.bf16.msra.mxu0 0
    %905 = vmatprep.subr.bf16.mxu0 0
    %906 = vmatpush2.bf16.msra.mxu0 0
    %907 = vmatprep.subr.bf16.mxu0 0
    %908 = vmatpush2.bf16.msra.mxu0 0
    %909 = vmatprep.subr.bf16.mxu0 0
    %910 = vmatpush2.bf16.msra.mxu0 0
    %911 = vmatprep.subr.bf16.mxu0 0
    %912 = vmatpush2.bf16.msra.mxu0 0
    %913 = vmatprep.subr.bf16.mxu0 0
    %914 = vmatpush2.bf16.msra.mxu0 0
    %915 = vmatprep.mubr.bf16.mxu0 0
    %916 = vmatmul.mubr.bf16.gmra.mxu0 %v449
    %v917 = vpop.f32.mrf.mxu0
    %v918 = vadd.f32 %v526, %v917
    %v919 = vpop.f32.mrf.mxu0
    %v920 = vadd.f32 %v530, %v919
    %v921 = vpop.f32.mrf.mxu0
    %v922 = vadd.f32 %v526, %v921
    %v923 = vpop.f32.mrf.mxu0
    %v924 = vadd.f32 %v530, %v923
    %925 = vmatprep.mubr.bf16.mxu0 0
    %926 = vmatmul.mubr.bf16.gmra.mxu0 %v450
    %v927 = vpop.f32.mrf.mxu0
    %v928 = vadd.f32 %v526, %v927
    %v929 = vpop.f32.mrf.mxu0
    %v930 = vadd.f32 %v530, %v929
    %v931 = vpop.f32.mrf.mxu0
    %v932 = vadd.f32 %v526, %v931
    %v933 = vpop.f32.mrf.mxu0
    %v934 = vadd.f32 %v530, %v933
    %935 = vmatprep.mubr.bf16.mxu0 0
    %936 = vmatmul.mubr.bf16.gmra.mxu0 %v451
    %v937 = vpop.f32.mrf.mxu0
    %v938 = vadd.f32 %v526, %v937
    %v939 = vpop.f32.mrf.mxu0
    %v940 = vadd.f32 %v530, %v939
    %v941 = vpop.f32.mrf.mxu0
    %v942 = vadd.f32 %v526, %v941
    %v943 = vpop.f32.mrf.mxu0
    %v944 = vadd.f32 %v530, %v943
    %945 = vmatprep.mubr.bf16.mxu0 0
    %946 = vmatmul.mubr.bf16.gmra.mxu0 %v452
    %v947 = vpop.f32.mrf.mxu0
    %v948 = vadd.f32 %v526, %v947
    %v949 = vpop.f32.mrf.mxu0
    %v950 = vadd.f32 %v530, %v949
    %v951 = vpop.f32.mrf.mxu0
    %v952 = vadd.f32 %v526, %v951
    %v953 = vpop.f32.mrf.mxu0
    %v954 = vadd.f32 %v530, %v953
    %955 = vmatprep.mubr.bf16.mxu0 0
    %956 = vmatmul.mubr.bf16.gmra.mxu0 %v453
    %v957 = vpop.f32.mrf.mxu0
    %v958 = vadd.f32 %v526, %v957
    %v959 = vpop.f32.mrf.mxu0
    %v960 = vadd.f32 %v530, %v959
    %v961 = vpop.f32.mrf.mxu0
    %v962 = vadd.f32 %v526, %v961
    %v963 = vpop.f32.mrf.mxu0
    %v964 = vadd.f32 %v530, %v963
    %965 = vmatprep.mubr.bf16.mxu0 0
    %966 = vmatmul.mubr.bf16.gmra.mxu0 %v454
    %v967 = vpop.f32.mrf.mxu0
    %v968 = vadd.f32 %v526, %v967
    %v969 = vpop.f32.mrf.mxu0
    %v970 = vadd.f32 %v530, %v969
    %v971 = vpop.f32.mrf.mxu0
    %v972 = vadd.f32 %v526, %v971
    %v973 = vpop.f32.mrf.mxu0
    %v974 = vadd.f32 %v530, %v973
    %975 = vmatprep.mubr.bf16.mxu0 0
    %976 = vmatmul.mubr.bf16.gmra.mxu0 %v455
    %v977 = vpop.f32.mrf.mxu0
    %v978 = vadd.f32 %v526, %v977
    %v979 = vpop.f32.mrf.mxu0
    %v980 = vadd.f32 %v530, %v979
    %v981 = vpop.f32.mrf.mxu0
    %v982 = vadd.f32 %v526, %v981
    %v983 = vpop.f32.mrf.mxu0
    %v984 = vadd.f32 %v530, %v983
    %985 = vmatprep.mubr.bf16.mxu0 0
    %986 = vmatmul.mubr.bf16.gmra.mxu0 %v456
    %v987 = vpop.f32.mrf.mxu0
    %v988 = vadd.f32 %v526, %v987
    %v989 = vpop.f32.mrf.mxu0
    %v990 = vadd.f32 %v530, %v989
    %v991 = vpop.f32.mrf.mxu0
    %v992 = vadd.f32 %v526, %v991
    %v993 = vpop.f32.mrf.mxu0
    %v994 = vadd.f32 %v530, %v993
    %995 = vdwg.mxu0
    %996 = vmatprep.subr.bf16.mxu0 %v814
    %997 = vmatpush1.bf16.msra.mxu0 %v813
    %998 = vmatprep.subr.bf16.mxu0 %v806
    %999 = vmatpush1.bf16.msra.mxu0 %v805
    %1000 = vmatprep.subr.bf16.mxu0 %v798
    %1001 = vmatpush1.bf16.msra.mxu0 %v797
    %1002 = vmatprep.subr.bf16.mxu0 %v790
    %1003 = vmatpush1.bf16.msra.mxu0 %v789
    %1004 = vmatprep.subr.bf16.mxu0 %v782
    %1005 = vmatpush1.bf16.msra.mxu0 %v781
    %1006 = vmatprep.subr.bf16.mxu0 %v774
    %1007 = vmatpush1.bf16.msra.mxu0 %v773
    %1008 = vmatprep.subr.bf16.mxu0 %v766
    %1009 = vmatpush1.bf16.msra.mxu0 %v765
    %1010 = vmatprep.subr.bf16.mxu0 %v758
    %1011 = vmatpush1.bf16.msra.mxu0 %v757
    %1012 = vmatprep.subr.bf16.mxu0 0
    %1013 = vmatpush2.bf16.msra.mxu0 0
    %1014 = vmatprep.subr.bf16.mxu0 0
    %1015 = vmatpush2.bf16.msra.mxu0 0
    %1016 = vmatprep.subr.bf16.mxu0 0
    %1017 = vmatpush2.bf16.msra.mxu0 0
    %1018 = vmatprep.subr.bf16.mxu0 0
    %1019 = vmatpush2.bf16.msra.mxu0 0
    %1020 = vmatprep.subr.bf16.mxu0 0
    %1021 = vmatpush2.bf16.msra.mxu0 0
    %1022 = vmatprep.subr.bf16.mxu0 0
    %1023 = vmatpush2.bf16.msra.mxu0 0
    %1024 = vmatprep.subr.bf16.mxu0 0
    %1025 = vmatpush2.bf16.msra.mxu0 0
    %1026 = vmatprep.subr.bf16.mxu0 0
    %1027 = vmatpush2.bf16.msra.mxu0 0
    %1028 = vmatprep.mubr.bf16.mxu0 0
    %1029 = vmatmul.mubr.bf16.gmra.mxu0 %v449
    %v1030 = vpop.f32.mrf.mxu0
    %v1031 = vadd.f32 %v534, %v1030
    %v1032 = vpop.f32.mrf.mxu0
    %v1033 = vadd.f32 %v538, %v1032
    %v1034 = vpop.f32.mrf.mxu0
    %v1035 = vadd.f32 %v534, %v1034
    %v1036 = vpop.f32.mrf.mxu0
    %v1037 = vadd.f32 %v538, %v1036
    %1038 = vmatprep.mubr.bf16.mxu0 0
    %1039 = vmatmul.mubr.bf16.gmra.mxu0 %v450
    %v1040 = vpop.f32.mrf.mxu0
    %v1041 = vadd.f32 %v534, %v1040
    %v1042 = vpop.f32.mrf.mxu0
    %v1043 = vadd.f32 %v538, %v1042
    %v1044 = vpop.f32.mrf.mxu0
    %v1045 = vadd.f32 %v534, %v1044
    %v1046 = vpop.f32.mrf.mxu0
    %v1047 = vadd.f32 %v538, %v1046
    %1048 = vmatprep.mubr.bf16.mxu0 0
    %1049 = vmatmul.mubr.bf16.gmra.mxu0 %v451
    %v1050 = vpop.f32.mrf.mxu0
    %v1051 = vadd.f32 %v534, %v1050
    %v1052 = vpop.f32.mrf.mxu0
    %v1053 = vadd.f32 %v538, %v1052
    %v1054 = vpop.f32.mrf.mxu0
    %v1055 = vadd.f32 %v534, %v1054
    %v1056 = vpop.f32.mrf.mxu0
    %v1057 = vadd.f32 %v538, %v1056
    %1058 = vmatprep.mubr.bf16.mxu0 0
    %1059 = vmatmul.mubr.bf16.gmra.mxu0 %v452
    %v1060 = vpop.f32.mrf.mxu0
    %v1061 = vadd.f32 %v534, %v1060
    %v1062 = vpop.f32.mrf.mxu0
    %v1063 = vadd.f32 %v538, %v1062
    %v1064 = vpop.f32.mrf.mxu0
    %v1065 = vadd.f32 %v534, %v1064
    %v1066 = vpop.f32.mrf.mxu0
    %v1067 = vadd.f32 %v538, %v1066
    %1068 = vmatprep.mubr.bf16.mxu0 0
    %1069 = vmatmul.mubr.bf16.gmra.mxu0 %v453
    %v1070 = vpop.f32.mrf.mxu0
    %v1071 = vadd.f32 %v534, %v1070
    %v1072 = vpop.f32.mrf.mxu0
    %v1073 = vadd.f32 %v538, %v1072
    %v1074 = vpop.f32.mrf.mxu0
    %v1075 = vadd.f32 %v534, %v1074
    %v1076 = vpop.f32.mrf.mxu0
    %v1077 = vadd.f32 %v538, %v1076
    %1078 = vmatprep.mubr.bf16.mxu0 0
    %1079 = vmatmul.mubr.bf16.gmra.mxu0 %v454
    %v1080 = vpop.f32.mrf.mxu0
    %v1081 = vadd.f32 %v534, %v1080
    %v1082 = vpop.f32.mrf.mxu0
    %v1083 = vadd.f32 %v538, %v1082
    %v1084 = vpop.f32.mrf.mxu0
    %v1085 = vadd.f32 %v534, %v1084
    %v1086 = vpop.f32.mrf.mxu0
    %v1087 = vadd.f32 %v538, %v1086
    %1088 = vmatprep.mubr.bf16.mxu0 0
    %1089 = vmatmul.mubr.bf16.gmra.mxu0 %v455
    %v1090 = vpop.f32.mrf.mxu0
    %v1091 = vadd.f32 %v534, %v1090
    %v1092 = vpop.f32.mrf.mxu0
    %v1093 = vadd.f32 %v538, %v1092
    %v1094 = vpop.f32.mrf.mxu0
    %v1095 = vadd.f32 %v534, %v1094
    %v1096 = vpop.f32.mrf.mxu0
    %v1097 = vadd.f32 %v538, %v1096
    %1098 = vmatprep.mubr.bf16.mxu0 0
    %1099 = vmatmul.mubr.bf16.gmra.mxu0 %v456
    %v1100 = vpop.f32.mrf.mxu0
    %v1101 = vadd.f32 %v534, %v1100
    %v1102 = vpop.f32.mrf.mxu0
    %v1103 = vadd.f32 %v538, %v1102
    %v1104 = vpop.f32.mrf.mxu0
    %v1105 = vadd.f32 %v534, %v1104
    %v1106 = vpop.f32.mrf.mxu0
    %v1107 = vadd.f32 %v538, %v1106
    %1108 = vdwg.mxu0
    %1109 = vmatprep.subr.bf16.mxu0 %v816
    %1110 = vmatpush1.bf16.msra.mxu0 %v815
    %1111 = vmatprep.subr.bf16.mxu0 %v808
    %1112 = vmatpush1.bf16.msra.mxu0 %v807
    %1113 = vmatprep.subr.bf16.mxu0 %v800
    %1114 = vmatpush1.bf16.msra.mxu0 %v799
    %1115 = vmatprep.subr.bf16.mxu0 %v792
    %1116 = vmatpush1.bf16.msra.mxu0 %v791
    %1117 = vmatprep.subr.bf16.mxu0 %v784
    %1118 = vmatpush1.bf16.msra.mxu0 %v783
    %1119 = vmatprep.subr.bf16.mxu0 %v776
    %1120 = vmatpush1.bf16.msra.mxu0 %v775
    %1121 = vmatprep.subr.bf16.mxu0 %v768
    %1122 = vmatpush1.bf16.msra.mxu0 %v767
    %1123 = vmatprep.subr.bf16.mxu0 %v760
    %1124 = vmatpush1.bf16.msra.mxu0 %v759
    %1125 = vmatprep.subr.bf16.mxu0 0
    %1126 = vmatpush2.bf16.msra.mxu0 0
    %1127 = vmatprep.subr.bf16.mxu0 0
    %1128 = vmatpush2.bf16.msra.mxu0 0
    %1129 = vmatprep.subr.bf16.mxu0 0
    %1130 = vmatpush2.bf16.msra.mxu0 0
    %1131 = vmatprep.subr.bf16.mxu0 0
    %1132 = vmatpush2.bf16.msra.mxu0 0
    %1133 = vmatprep.subr.bf16.mxu0 0
    %1134 = vmatpush2.bf16.msra.mxu0 0
    %1135 = vmatprep.subr.bf16.mxu0 0
    %1136 = vmatpush2.bf16.msra.mxu0 0
    %1137 = vmatprep.subr.bf16.mxu0 0
    %1138 = vmatpush2.bf16.msra.mxu0 0
    %1139 = vmatprep.subr.bf16.mxu0 0
    %1140 = vmatpush2.bf16.msra.mxu0 0
    %1141 = vmatprep.mubr.bf16.mxu0 0
    %1142 = vmatmul.mubr.bf16.gmra.mxu0 %v449
    %v1143 = vpop.f32.mrf.mxu0
    %v1144 = vadd.f32 %v542, %v1143
    %v1145 = vpop.f32.mrf.mxu0
    %v1146 = vadd.f32 %v546, %v1145
    %v1147 = vpop.f32.mrf.mxu0
    %v1148 = vadd.f32 %v542, %v1147
    %v1149 = vpop.f32.mrf.mxu0
    %v1150 = vadd.f32 %v546, %v1149
    %1151 = vmatprep.mubr.bf16.mxu0 0
    %1152 = vmatmul.mubr.bf16.gmra.mxu0 %v450
    %v1153 = vpop.f32.mrf.mxu0
    %v1154 = vadd.f32 %v542, %v1153
    %v1155 = vpop.f32.mrf.mxu0
    %v1156 = vadd.f32 %v546, %v1155
    %v1157 = vpop.f32.mrf.mxu0
    %v1158 = vadd.f32 %v542, %v1157
    %v1159 = vpop.f32.mrf.mxu0
    %v1160 = vadd.f32 %v546, %v1159
    %1161 = vmatprep.mubr.bf16.mxu0 0
    %1162 = vmatmul.mubr.bf16.gmra.mxu0 %v451
    %v1163 = vpop.f32.mrf.mxu0
    %v1164 = vadd.f32 %v542, %v1163
    %v1165 = vpop.f32.mrf.mxu0
    %v1166 = vadd.f32 %v546, %v1165
    %v1167 = vpop.f32.mrf.mxu0
    %v1168 = vadd.f32 %v542, %v1167
    %v1169 = vpop.f32.mrf.mxu0
    %v1170 = vadd.f32 %v546, %v1169
    %1171 = vmatprep.mubr.bf16.mxu0 0
    %1172 = vmatmul.mubr.bf16.gmra.mxu0 %v452
    %v1173 = vpop.f32.mrf.mxu0
    %v1174 = vadd.f32 %v542, %v1173
    %v1175 = vpop.f32.mrf.mxu0
    %v1176 = vadd.f32 %v546, %v1175
    %v1177 = vpop.f32.mrf.mxu0
    %v1178 = vadd.f32 %v542, %v1177
    %v1179 = vpop.f32.mrf.mxu0
    %v1180 = vadd.f32 %v546, %v1179
    %1181 = vmatprep.mubr.bf16.mxu0 0
    %1182 = vmatmul.mubr.bf16.gmra.mxu0 %v453
    %v1183 = vpop.f32.mrf.mxu0
    %v1184 = vadd.f32 %v542, %v1183
    %v1185 = vpop.f32.mrf.mxu0
    %v1186 = vadd.f32 %v546, %v1185
    %v1187 = vpop.f32.mrf.mxu0
    %v1188 = vadd.f32 %v542, %v1187
    %v1189 = vpop.f32.mrf.mxu0
    %v1190 = vadd.f32 %v546, %v1189
    %1191 = vmatprep.mubr.bf16.mxu0 0
    %1192 = vmatmul.mubr.bf16.gmra.mxu0 %v454
    %v1193 = vpop.f32.mrf.mxu0
    %v1194 = vadd.f32 %v542, %v1193
    %v1195 = vpop.f32.mrf.mxu0
    %v1196 = vadd.f32 %v546, %v1195
    %v1197 = vpop.f32.mrf.mxu0
    %v1198 = vadd.f32 %v542, %v1197
    %v1199 = vpop.f32.mrf.mxu0
    %v1200 = vadd.f32 %v546, %v1199
    %1201 = vmatprep.mubr.bf16.mxu0 0
    %1202 = vmatmul.mubr.bf16.gmra.mxu0 %v455
    %v1203 = vpop.f32.mrf.mxu0
    %v1204 = vadd.f32 %v542, %v1203
    %v1205 = vpop.f32.mrf.mxu0
    %v1206 = vadd.f32 %v546, %v1205
    %v1207 = vpop.f32.mrf.mxu0
    %v1208 = vadd.f32 %v542, %v1207
    %v1209 = vpop.f32.mrf.mxu0
    %v1210 = vadd.f32 %v546, %v1209
    %1211 = vmatprep.mubr.bf16.mxu0 0
    %1212 = vmatmul.mubr.bf16.gmra.mxu0 %v456
    %v1213 = vpop.f32.mrf.mxu0
    %v1214 = vadd.f32 %v542, %v1213
    %v1215 = vpop.f32.mrf.mxu0
    %v1216 = vadd.f32 %v546, %v1215
    %v1217 = vpop.f32.mrf.mxu0
    %v1218 = vadd.f32 %v542, %v1217
    %v1219 = vpop.f32.mrf.mxu0
    %v1220 = vadd.f32 %v546, %v1219
    %1221 = vdwg.mxu0
    %1222 = vmatprep.subr.bf16.mxu0 %v818
    %1223 = vmatpush1.bf16.msra.mxu0 %v817
    %1224 = vmatprep.subr.bf16.mxu0 %v810
    %1225 = vmatpush1.bf16.msra.mxu0 %v809
    %1226 = vmatprep.subr.bf16.mxu0 %v802
    %1227 = vmatpush1.bf16.msra.mxu0 %v801
    %1228 = vmatprep.subr.bf16.mxu0 %v794
    %1229 = vmatpush1.bf16.msra.mxu0 %v793
    %1230 = vmatprep.subr.bf16.mxu0 %v786
    %1231 = vmatpush1.bf16.msra.mxu0 %v785
    %1232 = vmatprep.subr.bf16.mxu0 %v778
    %1233 = vmatpush1.bf16.msra.mxu0 %v777
    %1234 = vmatprep.subr.bf16.mxu0 %v770
    %1235 = vmatpush1.bf16.msra.mxu0 %v769
    %1236 = vmatprep.subr.bf16.mxu0 %v762
    %1237 = vmatpush1.bf16.msra.mxu0 %v761
    %1238 = vmatprep.subr.bf16.mxu0 0
    %1239 = vmatpush2.bf16.msra.mxu0 0
    %1240 = vmatprep.subr.bf16.mxu0 0
    %1241 = vmatpush2.bf16.msra.mxu0 0
    %1242 = vmatprep.subr.bf16.mxu0 0
    %1243 = vmatpush2.bf16.msra.mxu0 0
    %1244 = vmatprep.subr.bf16.mxu0 0
    %1245 = vmatpush2.bf16.msra.mxu0 0
    %1246 = vmatprep.subr.bf16.mxu0 0
    %1247 = vmatpush2.bf16.msra.mxu0 0
    %1248 = vmatprep.subr.bf16.mxu0 0
    %1249 = vmatpush2.bf16.msra.mxu0 0
    %1250 = vmatprep.subr.bf16.mxu0 0
    %1251 = vmatpush2.bf16.msra.mxu0 0
    %1252 = vmatprep.subr.bf16.mxu0 0
    %1253 = vmatpush2.bf16.msra.mxu0 0
    %1254 = vmatprep.mubr.bf16.mxu0 0
    %1255 = vmatmul.mubr.bf16.gmra.mxu0 %v449
    %v1256 = vpop.f32.mrf.mxu0
    %v1257 = vadd.f32 %v550, %v1256
    %v1258 = vpop.f32.mrf.mxu0
    %v1259 = vadd.f32 %v554, %v1258
    %v1260 = vpop.f32.mrf.mxu0
    %v1261 = vadd.f32 %v550, %v1260
    %v1262 = vpop.f32.mrf.mxu0
    %v1263 = vadd.f32 %v554, %v1262
    %1264 = vmatprep.mubr.bf16.mxu0 0
    %1265 = vmatmul.mubr.bf16.gmra.mxu0 %v450
    %v1266 = vpop.f32.mrf.mxu0
    %v1267 = vadd.f32 %v550, %v1266
    %v1268 = vpop.f32.mrf.mxu0
    %v1269 = vadd.f32 %v554, %v1268
    %v1270 = vpop.f32.mrf.mxu0
    %v1271 = vadd.f32 %v550, %v1270
    %v1272 = vpop.f32.mrf.mxu0
    %v1273 = vadd.f32 %v554, %v1272
    %1274 = vmatprep.mubr.bf16.mxu0 0
    %1275 = vmatmul.mubr.bf16.gmra.mxu0 %v451
    %v1276 = vpop.f32.mrf.mxu0
    %v1277 = vadd.f32 %v550, %v1276
    %v1278 = vpop.f32.mrf.mxu0
    %v1279 = vadd.f32 %v554, %v1278
    %v1280 = vpop.f32.mrf.mxu0
    %v1281 = vadd.f32 %v550, %v1280
    %v1282 = vpop.f32.mrf.mxu0
    %v1283 = vadd.f32 %v554, %v1282
    %1284 = vmatprep.mubr.bf16.mxu0 0
    %1285 = vmatmul.mubr.bf16.gmra.mxu0 %v452
    %v1286 = vpop.f32.mrf.mxu0
    %v1287 = vadd.f32 %v550, %v1286
    %v1288 = vpop.f32.mrf.mxu0
    %v1289 = vadd.f32 %v554, %v1288
    %v1290 = vpop.f32.mrf.mxu0
    %v1291 = vadd.f32 %v550, %v1290
    %v1292 = vpop.f32.mrf.mxu0
    %v1293 = vadd.f32 %v554, %v1292
    %1294 = vmatprep.mubr.bf16.mxu0 0
    %1295 = vmatmul.mubr.bf16.gmra.mxu0 %v453
    %v1296 = vpop.f32.mrf.mxu0
    %v1297 = vadd.f32 %v550, %v1296
    %v1298 = vpop.f32.mrf.mxu0
    %v1299 = vadd.f32 %v554, %v1298
    %v1300 = vpop.f32.mrf.mxu0
    %v1301 = vadd.f32 %v550, %v1300
    %v1302 = vpop.f32.mrf.mxu0
    %v1303 = vadd.f32 %v554, %v1302
    %1304 = vmatprep.mubr.bf16.mxu0 0
    %1305 = vmatmul.mubr.bf16.gmra.mxu0 %v454
    %v1306 = vpop.f32.mrf.mxu0
    %v1307 = vadd.f32 %v550, %v1306
    %v1308 = vpop.f32.mrf.mxu0
    %v1309 = vadd.f32 %v554, %v1308
    %v1310 = vpop.f32.mrf.mxu0
    %v1311 = vadd.f32 %v550, %v1310
    %v1312 = vpop.f32.mrf.mxu0
    %v1313 = vadd.f32 %v554, %v1312
    %1314 = vmatprep.mubr.bf16.mxu0 0
    %1315 = vmatmul.mubr.bf16.gmra.mxu0 %v455
    %v1316 = vpop.f32.mrf.mxu0
    %v1317 = vadd.f32 %v550, %v1316
    %v1318 = vpop.f32.mrf.mxu0
    %v1319 = vadd.f32 %v554, %v1318
    %v1320 = vpop.f32.mrf.mxu0
    %v1321 = vadd.f32 %v550, %v1320
    %v1322 = vpop.f32.mrf.mxu0
    %v1323 = vadd.f32 %v554, %v1322
    %1324 = vmatprep.mubr.bf16.mxu0 0
    %1325 = vmatmul.mubr.bf16.gmra.mxu0 %v456
    %v1326 = vpop.f32.mrf.mxu0
    %v1327 = vadd.f32 %v550, %v1326
    %v1328 = vpop.f32.mrf.mxu0
    %v1329 = vadd.f32 %v554, %v1328
    %v1330 = vpop.f32.mrf.mxu0
    %v1331 = vadd.f32 %v550, %v1330
    %v1332 = vpop.f32.mrf.mxu0
    %v1333 = vadd.f32 %v554, %v1332
    %1334 = vdwg.mxu0
    %v1335 = vmax.f32 %v918, 0.0
    %v1336 = vmax.f32 %v920, 0.0
    %v1337 = vmax.f32 %v1031, 0.0
    %v1338 = vmax.f32 %v1033, 0.0
    %v1339 = vmax.f32 %v1144, 0.0
    %v1340 = vmax.f32 %v1146, 0.0
    %v1341 = vmax.f32 %v1257, 0.0
    %v1342 = vmax.f32 %v1259, 0.0
    %v1343 = vmax.f32 %v922, 0.0
    %v1344 = vmax.f32 %v924, 0.0
    %v1345 = vmax.f32 %v1035, 0.0
    %v1346 = vmax.f32 %v1037, 0.0
    %v1347 = vmax.f32 %v1148, 0.0
    %v1348 = vmax.f32 %v1150, 0.0
    %v1349 = vmax.f32 %v1261, 0.0
    %v1350 = vmax.f32 %v1263, 0.0
    %v1351 = vmax.f32 %v928, 0.0
    %v1352 = vmax.f32 %v930, 0.0
    %v1353 = vmax.f32 %v1041, 0.0
    %v1354 = vmax.f32 %v1043, 0.0
    %v1355 = vmax.f32 %v1154, 0.0
    %v1356 = vmax.f32 %v1156, 0.0
    %v1357 = vmax.f32 %v1267, 0.0
    %v1358 = vmax.f32 %v1269, 0.0
    %v1359 = vmax.f32 %v932, 0.0
    %v1360 = vmax.f32 %v934, 0.0
    %v1361 = vmax.f32 %v1045, 0.0
    %v1362 = vmax.f32 %v1047, 0.0
    %v1363 = vmax.f32 %v1158, 0.0
    %v1364 = vmax.f32 %v1160, 0.0
    %v1365 = vmax.f32 %v1271, 0.0
    %v1366 = vmax.f32 %v1273, 0.0
    %v1367 = vmax.f32 %v938, 0.0
    %v1368 = vmax.f32 %v940, 0.0
    %v1369 = vmax.f32 %v1051, 0.0
    %v1370 = vmax.f32 %v1053, 0.0
    %v1371 = vmax.f32 %v1164, 0.0
    %v1372 = vmax.f32 %v1166, 0.0
    %v1373 = vmax.f32 %v1277, 0.0
    %v1374 = vmax.f32 %v1279, 0.0
    %v1375 = vmax.f32 %v942, 0.0
    %v1376 = vmax.f32 %v944, 0.0
    %v1377 = vmax.f32 %v1055, 0.0
    %v1378 = vmax.f32 %v1057, 0.0
    %v1379 = vmax.f32 %v1168, 0.0
    %v1380 = vmax.f32 %v1170, 0.0
    %v1381 = vmax.f32 %v1281, 0.0
    %v1382 = vmax.f32 %v1283, 0.0
    %v1383 = vmax.f32 %v948, 0.0
    %v1384 = vmax.f32 %v950, 0.0
    %v1385 = vmax.f32 %v1061, 0.0
    %v1386 = vmax.f32 %v1063, 0.0
    %v1387 = vmax.f32 %v1174, 0.0
    %v1388 = vmax.f32 %v1176, 0.0
    %v1389 = vmax.f32 %v1287, 0.0
    %v1390 = vmax.f32 %v1289, 0.0
    %v1391 = vmax.f32 %v952, 0.0
    %v1392 = vmax.f32 %v954, 0.0
    %v1393 = vmax.f32 %v1065, 0.0
    %v1394 = vmax.f32 %v1067, 0.0
    %v1395 = vmax.f32 %v1178, 0.0
    %v1396 = vmax.f32 %v1180, 0.0
    %v1397 = vmax.f32 %v1291, 0.0
    %v1398 = vmax.f32 %v1293, 0.0
    %v1399 = vmax.f32 %v958, 0.0
    %v1400 = vmax.f32 %v960, 0.0
    %v1401 = vmax.f32 %v1071, 0.0
    %v1402 = vmax.f32 %v1073, 0.0
    %v1403 = vmax.f32 %v1184, 0.0
    %v1404 = vmax.f32 %v1186, 0.0
    %v1405 = vmax.f32 %v1297, 0.0
    %v1406 = vmax.f32 %v1299, 0.0
    %v1407 = vmax.f32 %v962, 0.0
    %v1408 = vmax.f32 %v964, 0.0
    %v1409 = vmax.f32 %v1075, 0.0
    %v1410 = vmax.f32 %v1077, 0.0
    %v1411 = vmax.f32 %v1188, 0.0
    %v1412 = vmax.f32 %v1190, 0.0
    %v1413 = vmax.f32 %v1301, 0.0
    %v1414 = vmax.f32 %v1303, 0.0
    %v1415 = vmax.f32 %v968, 0.0
    %v1416 = vmax.f32 %v970, 0.0
    %v1417 = vmax.f32 %v1081, 0.0
    %v1418 = vmax.f32 %v1083, 0.0
    %v1419 = vmax.f32 %v1194, 0.0
    %v1420 = vmax.f32 %v1196, 0.0
    %v1421 = vmax.f32 %v1307, 0.0
    %v1422 = vmax.f32 %v1309, 0.0
    %v1423 = vmax.f32 %v972, 0.0
    %v1424 = vmax.f32 %v974, 0.0
    %v1425 = vmax.f32 %v1085, 0.0
    %v1426 = vmax.f32 %v1087, 0.0
    %v1427 = vmax.f32 %v1198, 0.0
    %v1428 = vmax.f32 %v1200, 0.0
    %v1429 = vmax.f32 %v1311, 0.0
    %v1430 = vmax.f32 %v1313, 0.0
    %v1431 = vmax.f32 %v978, 0.0
    %v1432 = vmax.f32 %v980, 0.0
    %v1433 = vmax.f32 %v1091, 0.0
    %v1434 = vmax.f32 %v1093, 0.0
    %v1435 = vmax.f32 %v1204, 0.0
    %v1436 = vmax.f32 %v1206, 0.0
    %v1437 = vmax.f32 %v1317, 0.0
    %v1438 = vmax.f32 %v1319, 0.0
    %v1439 = vmax.f32 %v982, 0.0
    %v1440 = vmax.f32 %v984, 0.0
    %v1441 = vmax.f32 %v1095, 0.0
    %v1442 = vmax.f32 %v1097, 0.0
    %v1443 = vmax.f32 %v1208, 0.0
    %v1444 = vmax.f32 %v1210, 0.0
    %v1445 = vmax.f32 %v1321, 0.0
    %v1446 = vmax.f32 %v1323, 0.0
    %v1447 = vmax.f32 %v988, 0.0
    %v1448 = vmax.f32 %v990, 0.0
    %v1449 = vmax.f32 %v1101, 0.0
    %v1450 = vmax.f32 %v1103, 0.0
    %v1451 = vmax.f32 %v1214, 0.0
    %v1452 = vmax.f32 %v1216, 0.0
    %v1453 = vmax.f32 %v1327, 0.0
    %v1454 = vmax.f32 %v1329, 0.0
    %v1455 = vmax.f32 %v992, 0.0
    %v1456 = vmax.f32 %v994, 0.0
    %v1457 = vmax.f32 %v1105, 0.0
    %v1458 = vmax.f32 %v1107, 0.0
    %v1459 = vmax.f32 %v1218, 0.0
    %v1460 = vmax.f32 %v1220, 0.0
    %v1461 = vmax.f32 %v1331, 0.0
    %v1462 = vmax.f32 %v1333, 0.0
    %v1463 = vmax.f32 %v1335, %v1343
    %v1464 = vrot.slane %v1463, 4
    %v1465 = vmax.f32 %v1463, %v1464
    %v1466 = vrot.slane %v1465, 2
    %v1467 = vmax.f32 %v1465, %v1466
    %v1468 = vrot.slane %v1467, 1
    %v1469 = vmax.f32 %v1467, %v1468
    %v1470 = vmax.f32 %v1336, %v1344
    %v1471 = vrot.slane %v1470, 4
    %v1472 = vmax.f32 %v1470, %v1471
    %v1473 = vrot.slane %v1472, 2
    %v1474 = vmax.f32 %v1472, %v1473
    %v1475 = vrot.slane %v1474, 1
    %v1476 = vmax.f32 %v1474, %v1475
    %v1477 = vmax.f32 %v1337, %v1345
    %v1478 = vrot.slane %v1477, 4
    %v1479 = vmax.f32 %v1477, %v1478
    %v1480 = vrot.slane %v1479, 2
    %v1481 = vmax.f32 %v1479, %v1480
    %v1482 = vrot.slane %v1481, 1
    %v1483 = vmax.f32 %v1481, %v1482
    %v1484 = vmax.f32 %v1338, %v1346
    %v1485 = vrot.slane %v1484, 4
    %v1486 = vmax.f32 %v1484, %v1485
    %v1487 = vrot.slane %v1486, 2
    %v1488 = vmax.f32 %v1486, %v1487
    %v1489 = vrot.slane %v1488, 1
    %v1490 = vmax.f32 %v1488, %v1489
    %v1491 = vmax.f32 %v1339, %v1347
    %v1492 = vrot.slane %v1491, 4
    %v1493 = vmax.f32 %v1491, %v1492
    %v1494 = vrot.slane %v1493, 2
    %v1495 = vmax.f32 %v1493, %v1494
    %v1496 = vrot.slane %v1495, 1
    %v1497 = vmax.f32 %v1495, %v1496
    %v1498 = vmax.f32 %v1340, %v1348
    %v1499 = vrot.slane %v1498, 4
    %v1500 = vmax.f32 %v1498, %v1499
    %v1501 = vrot.slane %v1500, 2
    %v1502 = vmax.f32 %v1500, %v1501
    %v1503 = vrot.slane %v1502, 1
    %v1504 = vmax.f32 %v1502, %v1503
    %v1505 = vmax.f32 %v1341, %v1349
    %v1506 = vrot.slane %v1505, 4
    %v1507 = vmax.f32 %v1505, %v1506
    %v1508 = vrot.slane %v1507, 2
    %v1509 = vmax.f32 %v1507, %v1508
    %v1510 = vrot.slane %v1509, 1
    %v1511 = vmax.f32 %v1509, %v1510
    %v1512 = vmax.f32 %v1342, %v1350
    %v1513 = vrot.slane %v1512, 4
    %v1514 = vmax.f32 %v1512, %v1513
    %v1515 = vrot.slane %v1514, 2
    %v1516 = vmax.f32 %v1514, %v1515
    %v1517 = vrot.slane %v1516, 1
    %v1518 = vmax.f32 %v1516, %v1517
    %v1519 = vmax.f32 %v1351, %v1359
    %v1520 = vrot.slane %v1519, 4
    %v1521 = vmax.f32 %v1519, %v1520
    %v1522 = vrot.slane %v1521, 2
    %v1523 = vmax.f32 %v1521, %v1522
    %v1524 = vrot.slane %v1523, 1
    %v1525 = vmax.f32 %v1523, %v1524
    %v1526 = vmax.f32 %v1352, %v1360
    %v1527 = vrot.slane %v1526, 4
    %v1528 = vmax.f32 %v1526, %v1527
    %v1529 = vrot.slane %v1528, 2
    %v1530 = vmax.f32 %v1528, %v1529
    %v1531 = vrot.slane %v1530, 1
    %v1532 = vmax.f32 %v1530, %v1531
    %v1533 = vmax.f32 %v1353, %v1361
    %v1534 = vrot.slane %v1533, 4
    %v1535 = vmax.f32 %v1533, %v1534
    %v1536 = vrot.slane %v1535, 2
    %v1537 = vmax.f32 %v1535, %v1536
    %v1538 = vrot.slane %v1537, 1
    %v1539 = vmax.f32 %v1537, %v1538
    %v1540 = vmax.f32 %v1354, %v1362
    %v1541 = vrot.slane %v1540, 4
    %v1542 = vmax.f32 %v1540, %v1541
    %v1543 = vrot.slane %v1542, 2
    %v1544 = vmax.f32 %v1542, %v1543
    %v1545 = vrot.slane %v1544, 1
    %v1546 = vmax.f32 %v1544, %v1545
    %v1547 = vmax.f32 %v1355, %v1363
    %v1548 = vrot.slane %v1547, 4
    %v1549 = vmax.f32 %v1547, %v1548
    %v1550 = vrot.slane %v1549, 2
    %v1551 = vmax.f32 %v1549, %v1550
    %v1552 = vrot.slane %v1551, 1
    %v1553 = vmax.f32 %v1551, %v1552
    %v1554 = vmax.f32 %v1356, %v1364
    %v1555 = vrot.slane %v1554, 4
    %v1556 = vmax.f32 %v1554, %v1555
    %v1557 = vrot.slane %v1556, 2
    %v1558 = vmax.f32 %v1556, %v1557
    %v1559 = vrot.slane %v1558, 1
    %v1560 = vmax.f32 %v1558, %v1559
    %v1561 = vmax.f32 %v1357, %v1365
    %v1562 = vrot.slane %v1561, 4
    %v1563 = vmax.f32 %v1561, %v1562
    %v1564 = vrot.slane %v1563, 2
    %v1565 = vmax.f32 %v1563, %v1564
    %v1566 = vrot.slane %v1565, 1
    %v1567 = vmax.f32 %v1565, %v1566
    %v1568 = vmax.f32 %v1358, %v1366
    %v1569 = vrot.slane %v1568, 4
    %v1570 = vmax.f32 %v1568, %v1569
    %v1571 = vrot.slane %v1570, 2
    %v1572 = vmax.f32 %v1570, %v1571
    %v1573 = vrot.slane %v1572, 1
    %v1574 = vmax.f32 %v1572, %v1573
    %v1575 = vmax.f32 %v1367, %v1375
    %v1576 = vrot.slane %v1575, 4
    %v1577 = vmax.f32 %v1575, %v1576
    %v1578 = vrot.slane %v1577, 2
    %v1579 = vmax.f32 %v1577, %v1578
    %v1580 = vrot.slane %v1579, 1
    %v1581 = vmax.f32 %v1579, %v1580
    %v1582 = vmax.f32 %v1368, %v1376
    %v1583 = vrot.slane %v1582, 4
    %v1584 = vmax.f32 %v1582, %v1583
    %v1585 = vrot.slane %v1584, 2
    %v1586 = vmax.f32 %v1584, %v1585
    %v1587 = vrot.slane %v1586, 1
    %v1588 = vmax.f32 %v1586, %v1587
    %v1589 = vmax.f32 %v1369, %v1377
    %v1590 = vrot.slane %v1589, 4
    %v1591 = vmax.f32 %v1589, %v1590
    %v1592 = vrot.slane %v1591, 2
    %v1593 = vmax.f32 %v1591, %v1592
    %v1594 = vrot.slane %v1593, 1
    %v1595 = vmax.f32 %v1593, %v1594
    %v1596 = vmax.f32 %v1370, %v1378
    %v1597 = vrot.slane %v1596, 4
    %v1598 = vmax.f32 %v1596, %v1597
    %v1599 = vrot.slane %v1598, 2
    %v1600 = vmax.f32 %v1598, %v1599
    %v1601 = vrot.slane %v1600, 1
    %v1602 = vmax.f32 %v1600, %v1601
    %v1603 = vmax.f32 %v1371, %v1379
    %v1604 = vrot.slane %v1603, 4
    %v1605 = vmax.f32 %v1603, %v1604
    %v1606 = vrot.slane %v1605, 2
    %v1607 = vmax.f32 %v1605, %v1606
    %v1608 = vrot.slane %v1607, 1
    %v1609 = vmax.f32 %v1607, %v1608
    %v1610 = vmax.f32 %v1372, %v1380
    %v1611 = vrot.slane %v1610, 4
    %v1612 = vmax.f32 %v1610, %v1611
    %v1613 = vrot.slane %v1612, 2
    %v1614 = vmax.f32 %v1612, %v1613
    %v1615 = vrot.slane %v1614, 1
    %v1616 = vmax.f32 %v1614, %v1615
    %v1617 = vmax.f32 %v1373, %v1381
    %v1618 = vrot.slane %v1617, 4
    %v1619 = vmax.f32 %v1617, %v1618
    %v1620 = vrot.slane %v1619, 2
    %v1621 = vmax.f32 %v1619, %v1620
    %v1622 = vrot.slane %v1621, 1
    %v1623 = vmax.f32 %v1621, %v1622
    %v1624 = vmax.f32 %v1374, %v1382
    %v1625 = vrot.slane %v1624, 4
    %v1626 = vmax.f32 %v1624, %v1625
    %v1627 = vrot.slane %v1626, 2
    %v1628 = vmax.f32 %v1626, %v1627
    %v1629 = vrot.slane %v1628, 1
    %v1630 = vmax.f32 %v1628, %v1629
    %v1631 = vmax.f32 %v1383, %v1391
    %v1632 = vrot.slane %v1631, 4
    %v1633 = vmax.f32 %v1631, %v1632
    %v1634 = vrot.slane %v1633, 2
    %v1635 = vmax.f32 %v1633, %v1634
    %v1636 = vrot.slane %v1635, 1
    %v1637 = vmax.f32 %v1635, %v1636
    %v1638 = vmax.f32 %v1384, %v1392
    %v1639 = vrot.slane %v1638, 4
    %v1640 = vmax.f32 %v1638, %v1639
    %v1641 = vrot.slane %v1640, 2
    %v1642 = vmax.f32 %v1640, %v1641
    %v1643 = vrot.slane %v1642, 1
    %v1644 = vmax.f32 %v1642, %v1643
    %v1645 = vmax.f32 %v1385, %v1393
    %v1646 = vrot.slane %v1645, 4
    %v1647 = vmax.f32 %v1645, %v1646
    %v1648 = vrot.slane %v1647, 2
    %v1649 = vmax.f32 %v1647, %v1648
    %v1650 = vrot.slane %v1649, 1
    %v1651 = vmax.f32 %v1649, %v1650
    %v1652 = vmax.f32 %v1386, %v1394
    %v1653 = vrot.slane %v1652, 4
    %v1654 = vmax.f32 %v1652, %v1653
    %v1655 = vrot.slane %v1654, 2
    %v1656 = vmax.f32 %v1654, %v1655
    %v1657 = vrot.slane %v1656, 1
    %v1658 = vmax.f32 %v1656, %v1657
    %v1659 = vmax.f32 %v1387, %v1395
    %v1660 = vrot.slane %v1659, 4
    %v1661 = vmax.f32 %v1659, %v1660
    %v1662 = vrot.slane %v1661, 2
    %v1663 = vmax.f32 %v1661, %v1662
    %v1664 = vrot.slane %v1663, 1
    %v1665 = vmax.f32 %v1663, %v1664
    %v1666 = vmax.f32 %v1388, %v1396
    %v1667 = vrot.slane %v1666, 4
    %v1668 = vmax.f32 %v1666, %v1667
    %v1669 = vrot.slane %v1668, 2
    %v1670 = vmax.f32 %v1668, %v1669
    %v1671 = vrot.slane %v1670, 1
    %v1672 = vmax.f32 %v1670, %v1671
    %v1673 = vmax.f32 %v1389, %v1397
    %v1674 = vrot.slane %v1673, 4
    %v1675 = vmax.f32 %v1673, %v1674
    %v1676 = vrot.slane %v1675, 2
    %v1677 = vmax.f32 %v1675, %v1676
    %v1678 = vrot.slane %v1677, 1
    %v1679 = vmax.f32 %v1677, %v1678
    %v1680 = vmax.f32 %v1390, %v1398
    %v1681 = vrot.slane %v1680, 4
    %v1682 = vmax.f32 %v1680, %v1681
    %v1683 = vrot.slane %v1682, 2
    %v1684 = vmax.f32 %v1682, %v1683
    %v1685 = vrot.slane %v1684, 1
    %v1686 = vmax.f32 %v1684, %v1685
    %v1687 = vmax.f32 %v1399, %v1407
    %v1688 = vrot.slane %v1687, 4
    %v1689 = vmax.f32 %v1687, %v1688
    %v1690 = vrot.slane %v1689, 2
    %v1691 = vmax.f32 %v1689, %v1690
    %v1692 = vrot.slane %v1691, 1
    %v1693 = vmax.f32 %v1691, %v1692
    %v1694 = vmax.f32 %v1400, %v1408
    %v1695 = vrot.slane %v1694, 4
    %v1696 = vmax.f32 %v1694, %v1695
    %v1697 = vrot.slane %v1696, 2
    %v1698 = vmax.f32 %v1696, %v1697
    %v1699 = vrot.slane %v1698, 1
    %v1700 = vmax.f32 %v1698, %v1699
    %v1701 = vmax.f32 %v1401, %v1409
    %v1702 = vrot.slane %v1701, 4
    %v1703 = vmax.f32 %v1701, %v1702
    %v1704 = vrot.slane %v1703, 2
    %v1705 = vmax.f32 %v1703, %v1704
    %v1706 = vrot.slane %v1705, 1
    %v1707 = vmax.f32 %v1705, %v1706
    %v1708 = vmax.f32 %v1402, %v1410
    %v1709 = vrot.slane %v1708, 4
    %v1710 = vmax.f32 %v1708, %v1709
    %v1711 = vrot.slane %v1710, 2
    %v1712 = vmax.f32 %v1710, %v1711
    %v1713 = vrot.slane %v1712, 1
    %v1714 = vmax.f32 %v1712, %v1713
    %v1715 = vmax.f32 %v1403, %v1411
    %v1716 = vrot.slane %v1715, 4
    %v1717 = vmax.f32 %v1715, %v1716
    %v1718 = vrot.slane %v1717, 2
    %v1719 = vmax.f32 %v1717, %v1718
    %v1720 = vrot.slane %v1719, 1
    %v1721 = vmax.f32 %v1719, %v1720
    %v1722 = vmax.f32 %v1404, %v1412
    %v1723 = vrot.slane %v1722, 4
    %v1724 = vmax.f32 %v1722, %v1723
    %v1725 = vrot.slane %v1724, 2
    %v1726 = vmax.f32 %v1724, %v1725
    %v1727 = vrot.slane %v1726, 1
    %v1728 = vmax.f32 %v1726, %v1727
    %v1729 = vmax.f32 %v1405, %v1413
    %v1730 = vrot.slane %v1729, 4
    %v1731 = vmax.f32 %v1729, %v1730
    %v1732 = vrot.slane %v1731, 2
    %v1733 = vmax.f32 %v1731, %v1732
    %v1734 = vrot.slane %v1733, 1
    %v1735 = vmax.f32 %v1733, %v1734
    %v1736 = vmax.f32 %v1406, %v1414
    %v1737 = vrot.slane %v1736, 4
    %v1738 = vmax.f32 %v1736, %v1737
    %v1739 = vrot.slane %v1738, 2
    %v1740 = vmax.f32 %v1738, %v1739
    %v1741 = vrot.slane %v1740, 1
    %v1742 = vmax.f32 %v1740, %v1741
    %v1743 = vmax.f32 %v1415, %v1423
    %v1744 = vrot.slane %v1743, 4
    %v1745 = vmax.f32 %v1743, %v1744
    %v1746 = vrot.slane %v1745, 2
    %v1747 = vmax.f32 %v1745, %v1746
    %v1748 = vrot.slane %v1747, 1
    %v1749 = vmax.f32 %v1747, %v1748
    %v1750 = vmax.f32 %v1416, %v1424
    %v1751 = vrot.slane %v1750, 4
    %v1752 = vmax.f32 %v1750, %v1751
    %v1753 = vrot.slane %v1752, 2
    %v1754 = vmax.f32 %v1752, %v1753
    %v1755 = vrot.slane %v1754, 1
    %v1756 = vmax.f32 %v1754, %v1755
    %v1757 = vmax.f32 %v1417, %v1425
    %v1758 = vrot.slane %v1757, 4
    %v1759 = vmax.f32 %v1757, %v1758
    %v1760 = vrot.slane %v1759, 2
    %v1761 = vmax.f32 %v1759, %v1760
    %v1762 = vrot.slane %v1761, 1
    %v1763 = vmax.f32 %v1761, %v1762
    %v1764 = vmax.f32 %v1418, %v1426
    %v1765 = vrot.slane %v1764, 4
    %v1766 = vmax.f32 %v1764, %v1765
    %v1767 = vrot.slane %v1766, 2
    %v1768 = vmax.f32 %v1766, %v1767
    %v1769 = vrot.slane %v1768, 1
    %v1770 = vmax.f32 %v1768, %v1769
    %v1771 = vmax.f32 %v1419, %v1427
    %v1772 = vrot.slane %v1771, 4
    %v1773 = vmax.f32 %v1771, %v1772
    %v1774 = vrot.slane %v1773, 2
    %v1775 = vmax.f32 %v1773, %v1774
    %v1776 = vrot.slane %v1775, 1
    %v1777 = vmax.f32 %v1775, %v1776
    %v1778 = vmax.f32 %v1420, %v1428
    %v1779 = vrot.slane %v1778, 4
    %v1780 = vmax.f32 %v1778, %v1779
    %v1781 = vrot.slane %v1780, 2
    %v1782 = vmax.f32 %v1780, %v1781
    %v1783 = vrot.slane %v1782, 1
    %v1784 = vmax.f32 %v1782, %v1783
    %v1785 = vmax.f32 %v1421, %v1429
    %v1786 = vrot.slane %v1785, 4
    %v1787 = vmax.f32 %v1785, %v1786
    %v1788 = vrot.slane %v1787, 2
    %v1789 = vmax.f32 %v1787, %v1788
    %v1790 = vrot.slane %v1789, 1
    %v1791 = vmax.f32 %v1789, %v1790
    %v1792 = vmax.f32 %v1422, %v1430
    %v1793 = vrot.slane %v1792, 4
    %v1794 = vmax.f32 %v1792, %v1793
    %v1795 = vrot.slane %v1794, 2
    %v1796 = vmax.f32 %v1794, %v1795
    %v1797 = vrot.slane %v1796, 1
    %v1798 = vmax.f32 %v1796, %v1797
    %v1799 = vmax.f32 %v1431, %v1439
    %v1800 = vrot.slane %v1799, 4
    %v1801 = vmax.f32 %v1799, %v1800
    %v1802 = vrot.slane %v1801, 2
    %v1803 = vmax.f32 %v1801, %v1802
    %v1804 = vrot.slane %v1803, 1
    %v1805 = vmax.f32 %v1803, %v1804
    %v1806 = vmax.f32 %v1432, %v1440
    %v1807 = vrot.slane %v1806, 4
    %v1808 = vmax.f32 %v1806, %v1807
    %v1809 = vrot.slane %v1808, 2
    %v1810 = vmax.f32 %v1808, %v1809
    %v1811 = vrot.slane %v1810, 1
    %v1812 = vmax.f32 %v1810, %v1811
    %v1813 = vmax.f32 %v1433, %v1441
    %v1814 = vrot.slane %v1813, 4
    %v1815 = vmax.f32 %v1813, %v1814
    %v1816 = vrot.slane %v1815, 2
    %v1817 = vmax.f32 %v1815, %v1816
    %v1818 = vrot.slane %v1817, 1
    %v1819 = vmax.f32 %v1817, %v1818
    %v1820 = vmax.f32 %v1434, %v1442
    %v1821 = vrot.slane %v1820, 4
    %v1822 = vmax.f32 %v1820, %v1821
    %v1823 = vrot.slane %v1822, 2
    %v1824 = vmax.f32 %v1822, %v1823
    %v1825 = vrot.slane %v1824, 1
    %v1826 = vmax.f32 %v1824, %v1825
    %v1827 = vmax.f32 %v1435, %v1443
    %v1828 = vrot.slane %v1827, 4
    %v1829 = vmax.f32 %v1827, %v1828
    %v1830 = vrot.slane %v1829, 2
    %v1831 = vmax.f32 %v1829, %v1830
    %v1832 = vrot.slane %v1831, 1
    %v1833 = vmax.f32 %v1831, %v1832
    %v1834 = vmax.f32 %v1436, %v1444
    %v1835 = vrot.slane %v1834, 4
    %v1836 = vmax.f32 %v1834, %v1835
    %v1837 = vrot.slane %v1836, 2
    %v1838 = vmax.f32 %v1836, %v1837
    %v1839 = vrot.slane %v1838, 1
    %v1840 = vmax.f32 %v1838, %v1839
    %v1841 = vmax.f32 %v1437, %v1445
    %v1842 = vrot.slane %v1841, 4
    %v1843 = vmax.f32 %v1841, %v1842
    %v1844 = vrot.slane %v1843, 2
    %v1845 = vmax.f32 %v1843, %v1844
    %v1846 = vrot.slane %v1845, 1
    %v1847 = vmax.f32 %v1845, %v1846
    %v1848 = vmax.f32 %v1438, %v1446
    %v1849 = vrot.slane %v1848, 4
    %v1850 = vmax.f32 %v1848, %v1849
    %v1851 = vrot.slane %v1850, 2
    %v1852 = vmax.f32 %v1850, %v1851
    %v1853 = vrot.slane %v1852, 1
    %v1854 = vmax.f32 %v1852, %v1853
    %v1855 = vmax.f32 %v1447, %v1455
    %v1856 = vrot.slane %v1855, 4
    %v1857 = vmax.f32 %v1855, %v1856
    %v1858 = vrot.slane %v1857, 2
    %v1859 = vmax.f32 %v1857, %v1858
    %v1860 = vrot.slane %v1859, 1
    %v1861 = vmax.f32 %v1859, %v1860
    %v1862 = vmax.f32 %v1448, %v1456
    %v1863 = vrot.slane %v1862, 4
    %v1864 = vmax.f32 %v1862, %v1863
    %v1865 = vrot.slane %v1864, 2
    %v1866 = vmax.f32 %v1864, %v1865
    %v1867 = vrot.slane %v1866, 1
    %v1868 = vmax.f32 %v1866, %v1867
    %v1869 = vmax.f32 %v1449, %v1457
    %v1870 = vrot.slane %v1869, 4
    %v1871 = vmax.f32 %v1869, %v1870
    %v1872 = vrot.slane %v1871, 2
    %v1873 = vmax.f32 %v1871, %v1872
    %v1874 = vrot.slane %v1873, 1
    %v1875 = vmax.f32 %v1873, %v1874
    %v1876 = vmax.f32 %v1450, %v1458
    %v1877 = vrot.slane %v1876, 4
    %v1878 = vmax.f32 %v1876, %v1877
    %v1879 = vrot.slane %v1878, 2
    %v1880 = vmax.f32 %v1878, %v1879
    %v1881 = vrot.slane %v1880, 1
    %v1882 = vmax.f32 %v1880, %v1881
    %v1883 = vmax.f32 %v1451, %v1459
    %v1884 = vrot.slane %v1883, 4
    %v1885 = vmax.f32 %v1883, %v1884
    %v1886 = vrot.slane %v1885, 2
    %v1887 = vmax.f32 %v1885, %v1886
    %v1888 = vrot.slane %v1887, 1
    %v1889 = vmax.f32 %v1887, %v1888
    %v1890 = vmax.f32 %v1452, %v1460
    %v1891 = vrot.slane %v1890, 4
    %v1892 = vmax.f32 %v1890, %v1891
    %v1893 = vrot.slane %v1892, 2
    %v1894 = vmax.f32 %v1892, %v1893
    %v1895 = vrot.slane %v1894, 1
    %v1896 = vmax.f32 %v1894, %v1895
    %v1897 = vmax.f32 %v1453, %v1461
    %v1898 = vrot.slane %v1897, 4
    %v1899 = vmax.f32 %v1897, %v1898
    %v1900 = vrot.slane %v1899, 2
    %v1901 = vmax.f32 %v1899, %v1900
    %v1902 = vrot.slane %v1901, 1
    %v1903 = vmax.f32 %v1901, %v1902
    %v1904 = vmax.f32 %v1454, %v1462
    %v1905 = vrot.slane %v1904, 4
    %v1906 = vmax.f32 %v1904, %v1905
    %v1907 = vrot.slane %v1906, 2
    %v1908 = vmax.f32 %v1906, %v1907
    %v1909 = vrot.slane %v1908, 1
    %v1910 = vmax.f32 %v1908, %v1909
    %v1911 = vpack.c.bf16 %v1469, %v1469
    %v1912 = vpack.c.bf16 %v1476, %v1476
    %v1913 = vpack.c.bf16 %v1483, %v1483
    %v1914 = vpack.c.bf16 %v1490, %v1490
    %v1915 = vpack.c.bf16 %v1497, %v1497
    %v1916 = vpack.c.bf16 %v1504, %v1504
    %v1917 = vpack.c.bf16 %v1511, %v1511
    %v1918 = vpack.c.bf16 %v1518, %v1518
    %v1919 = vpack.c.bf16 %v1525, %v1525
    %v1920 = vpack.c.bf16 %v1532, %v1532
    %v1921 = vpack.c.bf16 %v1539, %v1539
    %v1922 = vpack.c.bf16 %v1546, %v1546
    %v1923 = vpack.c.bf16 %v1553, %v1553
    %v1924 = vpack.c.bf16 %v1560, %v1560
    %v1925 = vpack.c.bf16 %v1567, %v1567
    %v1926 = vpack.c.bf16 %v1574, %v1574
    %v1927 = vpack.c.bf16 %v1581, %v1581
    %v1928 = vpack.c.bf16 %v1588, %v1588
    %v1929 = vpack.c.bf16 %v1595, %v1595
    %v1930 = vpack.c.bf16 %v1602, %v1602
    %v1931 = vpack.c.bf16 %v1609, %v1609
    %v1932 = vpack.c.bf16 %v1616, %v1616
    %v1933 = vpack.c.bf16 %v1623, %v1623
    %v1934 = vpack.c.bf16 %v1630, %v1630
    %v1935 = vpack.c.bf16 %v1637, %v1637
    %v1936 = vpack.c.bf16 %v1644, %v1644
    %v1937 = vpack.c.bf16 %v1651, %v1651
    %v1938 = vpack.c.bf16 %v1658, %v1658
    %v1939 = vpack.c.bf16 %v1665, %v1665
    %v1940 = vpack.c.bf16 %v1672, %v1672
    %v1941 = vpack.c.bf16 %v1679, %v1679
    %v1942 = vpack.c.bf16 %v1686, %v1686
    %v1943 = vpack.c.bf16 %v1693, %v1693
    %v1944 = vpack.c.bf16 %v1700, %v1700
    %v1945 = vpack.c.bf16 %v1707, %v1707
    %v1946 = vpack.c.bf16 %v1714, %v1714
    %v1947 = vpack.c.bf16 %v1721, %v1721
    %v1948 = vpack.c.bf16 %v1728, %v1728
    %v1949 = vpack.c.bf16 %v1735, %v1735
    %v1950 = vpack.c.bf16 %v1742, %v1742
    %v1951 = vpack.c.bf16 %v1749, %v1749
    %v1952 = vpack.c.bf16 %v1756, %v1756
    %v1953 = vpack.c.bf16 %v1763, %v1763
    %v1954 = vpack.c.bf16 %v1770, %v1770
    %v1955 = vpack.c.bf16 %v1777, %v1777
    %v1956 = vpack.c.bf16 %v1784, %v1784
    %v1957 = vpack.c.bf16 %v1791, %v1791
    %v1958 = vpack.c.bf16 %v1798, %v1798
    %v1959 = vpack.c.bf16 %v1805, %v1805
    %v1960 = vpack.c.bf16 %v1812, %v1812
    %v1961 = vpack.c.bf16 %v1819, %v1819
    %v1962 = vpack.c.bf16 %v1826, %v1826
    %v1963 = vpack.c.bf16 %v1833, %v1833
    %v1964 = vpack.c.bf16 %v1840, %v1840
    %v1965 = vpack.c.bf16 %v1847, %v1847
    %v1966 = vpack.c.bf16 %v1854, %v1854
    %v1967 = vpack.c.bf16 %v1861, %v1861
    %v1968 = vpack.c.bf16 %v1868, %v1868
    %v1969 = vpack.c.bf16 %v1875, %v1875
    %v1970 = vpack.c.bf16 %v1882, %v1882
    %v1971 = vpack.c.bf16 %v1889, %v1889
    %v1972 = vpack.c.bf16 %v1896, %v1896
    %v1973 = vpack.c.bf16 %v1903, %v1903
    %v1974 = vpack.c.bf16 %v1910, %v1910
    %v1975 = vld [vmem:[#allocation5] sm:$0xff]
    %v1976 = vld [vmem:[#allocation5 + $0x8] sm:$0xff]
    %v1977 = vld [vmem:[#allocation5 + $0x10] sm:$0xff]
    %v1978 = vld [vmem:[#allocation5 + $0x18] sm:$0xff]
    %v1979 = vld [vmem:[#allocation5 + $0x20] sm:$0xff]
    %v1980 = vld [vmem:[#allocation5 + $0x28] sm:$0xff]
    %v1981 = vld [vmem:[#allocation5 + $0x30] sm:$0xff]
    %v1982 = vld [vmem:[#allocation5 + $0x38] sm:$0xff]
    %v1983 = vld [vmem:[#allocation5 + $0x40] sm:$0xff]
    %v1984 = vld [vmem:[#allocation5 + $0x48] sm:$0xff]
    %v1985 = vld [vmem:[#allocation5 + $0x50] sm:$0xff]
    %v1986 = vld [vmem:[#allocation5 + $0x58] sm:$0xff]
    %v1987 = vld [vmem:[#allocation5 + $0x60] sm:$0xff]
    %v1988 = vld [vmem:[#allocation5 + $0x68] sm:$0xff]
    %v1989 = vld [vmem:[#allocation5 + $0x70] sm:$0xff]
    %v1990 = vld [vmem:[#allocation5 + $0x78] sm:$0xff]
    %v1991 = vld [vmem:[#allocation5 + $0x80] sm:$0xff]
    %v1992 = vld [vmem:[#allocation5 + $0x88] sm:$0xff]
    %v1993 = vld [vmem:[#allocation5 + $0x90] sm:$0xff]
    %v1994 = vld [vmem:[#allocation5 + $0x98] sm:$0xff]
    %v1995 = vld [vmem:[#allocation5 + $0xa0] sm:$0xff]
    %v1996 = vld [vmem:[#allocation5 + $0xa8] sm:$0xff]
    %v1997 = vld [vmem:[#allocation5 + $0xb0] sm:$0xff]
    %v1998 = vld [vmem:[#allocation5 + $0xb8] sm:$0xff]
    %v1999 = vld [vmem:[#allocation5 + $0xc0] sm:$0xff]
    %v2000 = vld [vmem:[#allocation5 + $0xc8] sm:$0xff]
    %v2001 = vld [vmem:[#allocation5 + $0xd0] sm:$0xff]
    %v2002 = vld [vmem:[#allocation5 + $0xd8] sm:$0xff]
    %v2003 = vld [vmem:[#allocation5 + $0xe0] sm:$0xff]
    %v2004 = vld [vmem:[#allocation5 + $0xe8] sm:$0xff]
    %v2005 = vld [vmem:[#allocation5 + $0xf0] sm:$0xff]
    %v2006 = vld [vmem:[#allocation5 + $0xf8] sm:$0xff]
    %v2007 = vld [vmem:[#allocation5 + $0x100] sm:$0xff]
    %v2008 = vld [vmem:[#allocation5 + $0x108] sm:$0xff]
    %v2009 = vld [vmem:[#allocation5 + $0x110] sm:$0xff]
    %v2010 = vld [vmem:[#allocation5 + $0x118] sm:$0xff]
    %v2011 = vld [vmem:[#allocation5 + $0x120] sm:$0xff]
    %v2012 = vld [vmem:[#allocation5 + $0x128] sm:$0xff]
    %v2013 = vld [vmem:[#allocation5 + $0x130] sm:$0xff]
    %v2014 = vld [vmem:[#allocation5 + $0x138] sm:$0xff]
    %v2015 = vld [vmem:[#allocation5 + $0x140] sm:$0xff]
    %v2016 = vld [vmem:[#allocation5 + $0x148] sm:$0xff]
    %v2017 = vld [vmem:[#allocation5 + $0x150] sm:$0xff]
    %v2018 = vld [vmem:[#allocation5 + $0x158] sm:$0xff]
    %v2019 = vld [vmem:[#allocation5 + $0x160] sm:$0xff]
    %v2020 = vld [vmem:[#allocation5 + $0x168] sm:$0xff]
    %v2021 = vld [vmem:[#allocation5 + $0x170] sm:$0xff]
    %v2022 = vld [vmem:[#allocation5 + $0x178] sm:$0xff]
    %v2023 = vld [vmem:[#allocation5 + $0x180] sm:$0xff]
    %v2024 = vld [vmem:[#allocation5 + $0x188] sm:$0xff]
    %v2025 = vld [vmem:[#allocation5 + $0x190] sm:$0xff]
    %v2026 = vld [vmem:[#allocation5 + $0x198] sm:$0xff]
    %v2027 = vld [vmem:[#allocation5 + $0x1a0] sm:$0xff]
    %v2028 = vld [vmem:[#allocation5 + $0x1a8] sm:$0xff]
    %v2029 = vld [vmem:[#allocation5 + $0x1b0] sm:$0xff]
    %v2030 = vld [vmem:[#allocation5 + $0x1b8] sm:$0xff]
    %v2031 = vld [vmem:[#allocation5 + $0x1c0] sm:$0xff]
    %v2032 = vld [vmem:[#allocation5 + $0x1c8] sm:$0xff]
    %v2033 = vld [vmem:[#allocation5 + $0x1d0] sm:$0xff]
    %v2034 = vld [vmem:[#allocation5 + $0x1d8] sm:$0xff]
    %v2035 = vld [vmem:[#allocation5 + $0x1e0] sm:$0xff]
    %v2036 = vld [vmem:[#allocation5 + $0x1e8] sm:$0xff]
    %v2037 = vld [vmem:[#allocation5 + $0x1f0] sm:$0xff]
    %v2038 = vld [vmem:[#allocation5 + $0x1f8] sm:$0xff]
    %v2039 = vld [vmem:[#allocation5 + $0x200] sm:$0xff]
    %v2040 = vld [vmem:[#allocation5 + $0x208] sm:$0xff]
    %v2041 = vld [vmem:[#allocation5 + $0x210] sm:$0xff]
    %v2042 = vld [vmem:[#allocation5 + $0x218] sm:$0xff]
    %v2043 = vld [vmem:[#allocation5 + $0x220] sm:$0xff]
    %v2044 = vld [vmem:[#allocation5 + $0x228] sm:$0xff]
    %v2045 = vld [vmem:[#allocation5 + $0x230] sm:$0xff]
    %v2046 = vld [vmem:[#allocation5 + $0x238] sm:$0xff]
    %v2047 = vld [vmem:[#allocation5 + $0x240] sm:$0xff]
    %v2048 = vld [vmem:[#allocation5 + $0x248] sm:$0xff]
    %v2049 = vld [vmem:[#allocation5 + $0x250] sm:$0xff]
    %v2050 = vld [vmem:[#allocation5 + $0x258] sm:$0xff]
    %v2051 = vld [vmem:[#allocation5 + $0x260] sm:$0xff]
    %v2052 = vld [vmem:[#allocation5 + $0x268] sm:$0xff]
    %v2053 = vld [vmem:[#allocation5 + $0x270] sm:$0xff]
    %v2054 = vld [vmem:[#allocation5 + $0x278] sm:$0xff]
    %v2055 = vld [vmem:[#allocation5 + $0x280] sm:$0xff]
    %v2056 = vld [vmem:[#allocation5 + $0x288] sm:$0xff]
    %v2057 = vld [vmem:[#allocation5 + $0x290] sm:$0xff]
    %v2058 = vld [vmem:[#allocation5 + $0x298] sm:$0xff]
    %v2059 = vld [vmem:[#allocation5 + $0x2a0] sm:$0xff]
    %v2060 = vld [vmem:[#allocation5 + $0x2a8] sm:$0xff]
    %v2061 = vld [vmem:[#allocation5 + $0x2b0] sm:$0xff]
    %v2062 = vld [vmem:[#allocation5 + $0x2b8] sm:$0xff]
    %v2063 = vld [vmem:[#allocation5 + $0x2c0] sm:$0xff]
    %v2064 = vld [vmem:[#allocation5 + $0x2c8] sm:$0xff]
    %v2065 = vld [vmem:[#allocation5 + $0x2d0] sm:$0xff]
    %v2066 = vld [vmem:[#allocation5 + $0x2d8] sm:$0xff]
    %v2067 = vld [vmem:[#allocation5 + $0x2e0] sm:$0xff]
    %v2068 = vld [vmem:[#allocation5 + $0x2e8] sm:$0xff]
    %v2069 = vld [vmem:[#allocation5 + $0x2f0] sm:$0xff]
    %v2070 = vld [vmem:[#allocation5 + $0x2f8] sm:$0xff]
    %v2071 = vld [vmem:[#allocation5 + $0x300] sm:$0xff]
    %v2072 = vld [vmem:[#allocation5 + $0x308] sm:$0xff]
    %v2073 = vld [vmem:[#allocation5 + $0x310] sm:$0xff]
    %v2074 = vld [vmem:[#allocation5 + $0x318] sm:$0xff]
    %v2075 = vld [vmem:[#allocation5 + $0x320] sm:$0xff]
    %v2076 = vld [vmem:[#allocation5 + $0x328] sm:$0xff]
    %v2077 = vld [vmem:[#allocation5 + $0x330] sm:$0xff]
    %v2078 = vld [vmem:[#allocation5 + $0x338] sm:$0xff]
    %v2079 = vld [vmem:[#allocation5 + $0x340] sm:$0xff]
    %v2080 = vld [vmem:[#allocation5 + $0x348] sm:$0xff]
    %v2081 = vld [vmem:[#allocation5 + $0x350] sm:$0xff]
    %v2082 = vld [vmem:[#allocation5 + $0x358] sm:$0xff]
    %v2083 = vld [vmem:[#allocation5 + $0x360] sm:$0xff]
    %v2084 = vld [vmem:[#allocation5 + $0x368] sm:$0xff]
    %v2085 = vld [vmem:[#allocation5 + $0x370] sm:$0xff]
    %v2086 = vld [vmem:[#allocation5 + $0x378] sm:$0xff]
    %v2087 = vld [vmem:[#allocation5 + $0x380] sm:$0xff]
    %v2088 = vld [vmem:[#allocation5 + $0x388] sm:$0xff]
    %v2089 = vld [vmem:[#allocation5 + $0x390] sm:$0xff]
    %v2090 = vld [vmem:[#allocation5 + $0x398] sm:$0xff]
    %v2091 = vld [vmem:[#allocation5 + $0x3a0] sm:$0xff]
    %v2092 = vld [vmem:[#allocation5 + $0x3a8] sm:$0xff]
    %v2093 = vld [vmem:[#allocation5 + $0x3b0] sm:$0xff]
    %v2094 = vld [vmem:[#allocation5 + $0x3b8] sm:$0xff]
    %v2095 = vld [vmem:[#allocation5 + $0x3c0] sm:$0xff]
    %v2096 = vld [vmem:[#allocation5 + $0x3c8] sm:$0xff]
    %v2097 = vld [vmem:[#allocation5 + $0x3d0] sm:$0xff]
    %v2098 = vld [vmem:[#allocation5 + $0x3d8] sm:$0xff]
    %v2099 = vld [vmem:[#allocation5 + $0x3e0] sm:$0xff]
    %v2100 = vld [vmem:[#allocation5 + $0x3e8] sm:$0xff]
    %v2101 = vld [vmem:[#allocation5 + $0x3f0] sm:$0xff]
    %v2102 = vld [vmem:[#allocation5 + $0x3f8] sm:$0xff]
    %v2103 = vld [vmem:[#allocation5 + $0x400] sm:$0xff]
    %v2104 = vld [vmem:[#allocation5 + $0x408] sm:$0xff]
    %v2105 = vld [vmem:[#allocation5 + $0x410] sm:$0xff]
    %v2106 = vld [vmem:[#allocation5 + $0x418] sm:$0xff]
    %v2107 = vld [vmem:[#allocation5 + $0x420] sm:$0xff]
    %v2108 = vld [vmem:[#allocation5 + $0x428] sm:$0xff]
    %v2109 = vld [vmem:[#allocation5 + $0x430] sm:$0xff]
    %v2110 = vld [vmem:[#allocation5 + $0x438] sm:$0xff]
    %v2111 = vld [vmem:[#allocation5 + $0x440] sm:$0xff]
    %v2112 = vld [vmem:[#allocation5 + $0x448] sm:$0xff]
    %v2113 = vld [vmem:[#allocation5 + $0x450] sm:$0xff]
    %v2114 = vld [vmem:[#allocation5 + $0x458] sm:$0xff]
    %v2115 = vld [vmem:[#allocation5 + $0x460] sm:$0xff]
    %v2116 = vld [vmem:[#allocation5 + $0x468] sm:$0xff]
    %v2117 = vld [vmem:[#allocation5 + $0x470] sm:$0xff]
    %v2118 = vld [vmem:[#allocation5 + $0x478] sm:$0xff]
    %v2119 = vld [vmem:[#allocation5 + $0x480] sm:$0xff]
    %v2120 = vld [vmem:[#allocation5 + $0x488] sm:$0xff]
    %v2121 = vld [vmem:[#allocation5 + $0x490] sm:$0xff]
    %v2122 = vld [vmem:[#allocation5 + $0x498] sm:$0xff]
    %v2123 = vld [vmem:[#allocation5 + $0x4a0] sm:$0xff]
    %v2124 = vld [vmem:[#allocation5 + $0x4a8] sm:$0xff]
    %v2125 = vld [vmem:[#allocation5 + $0x4b0] sm:$0xff]
    %v2126 = vld [vmem:[#allocation5 + $0x4b8] sm:$0xff]
    %v2127 = vld [vmem:[#allocation5 + $0x4c0] sm:$0xff]
    %v2128 = vld [vmem:[#allocation5 + $0x4c8] sm:$0xff]
    %v2129 = vld [vmem:[#allocation5 + $0x4d0] sm:$0xff]
    %v2130 = vld [vmem:[#allocation5 + $0x4d8] sm:$0xff]
    %v2131 = vld [vmem:[#allocation5 + $0x4e0] sm:$0xff]
    %v2132 = vld [vmem:[#allocation5 + $0x4e8] sm:$0xff]
    %v2133 = vld [vmem:[#allocation5 + $0x4f0] sm:$0xff]
    %v2134 = vld [vmem:[#allocation5 + $0x4f8] sm:$0xff]
    %v2135 = vld [vmem:[#allocation5 + $0x500] sm:$0xff]
    %v2136 = vld [vmem:[#allocation5 + $0x508] sm:$0xff]
    %v2137 = vld [vmem:[#allocation5 + $0x510] sm:$0xff]
    %v2138 = vld [vmem:[#allocation5 + $0x518] sm:$0xff]
    %v2139 = vld [vmem:[#allocation5 + $0x520] sm:$0xff]
    %v2140 = vld [vmem:[#allocation5 + $0x528] sm:$0xff]
    %v2141 = vld [vmem:[#allocation5 + $0x530] sm:$0xff]
    %v2142 = vld [vmem:[#allocation5 + $0x538] sm:$0xff]
    %v2143 = vld [vmem:[#allocation5 + $0x540] sm:$0xff]
    %v2144 = vld [vmem:[#allocation5 + $0x548] sm:$0xff]
    %v2145 = vld [vmem:[#allocation5 + $0x550] sm:$0xff]
    %v2146 = vld [vmem:[#allocation5 + $0x558] sm:$0xff]
    %v2147 = vld [vmem:[#allocation5 + $0x560] sm:$0xff]
    %v2148 = vld [vmem:[#allocation5 + $0x568] sm:$0xff]
    %v2149 = vld [vmem:[#allocation5 + $0x570] sm:$0xff]
    %v2150 = vld [vmem:[#allocation5 + $0x578] sm:$0xff]
    %v2151 = vld [vmem:[#allocation5 + $0x580] sm:$0xff]
    %v2152 = vld [vmem:[#allocation5 + $0x588] sm:$0xff]
    %v2153 = vld [vmem:[#allocation5 + $0x590] sm:$0xff]
    %v2154 = vld [vmem:[#allocation5 + $0x598] sm:$0xff]
    %v2155 = vld [vmem:[#allocation5 + $0x5a0] sm:$0xff]
    %v2156 = vld [vmem:[#allocation5 + $0x5a8] sm:$0xff]
    %v2157 = vld [vmem:[#allocation5 + $0x5b0] sm:$0xff]
    %v2158 = vld [vmem:[#allocation5 + $0x5b8] sm:$0xff]
    %v2159 = vld [vmem:[#allocation5 + $0x5c0] sm:$0xff]
    %v2160 = vld [vmem:[#allocation5 + $0x5c8] sm:$0xff]
    %v2161 = vld [vmem:[#allocation5 + $0x5d0] sm:$0xff]
    %v2162 = vld [vmem:[#allocation5 + $0x5d8] sm:$0xff]
    %v2163 = vld [vmem:[#allocation5 + $0x5e0] sm:$0xff]
    %v2164 = vld [vmem:[#allocation5 + $0x5e8] sm:$0xff]
    %v2165 = vld [vmem:[#allocation5 + $0x5f0] sm:$0xff]
    %v2166 = vld [vmem:[#allocation5 + $0x5f8] sm:$0xff]
    %v2167 = vld [vmem:[#allocation5 + $0x600] sm:$0xff]
    %v2168 = vld [vmem:[#allocation5 + $0x608] sm:$0xff]
    %v2169 = vld [vmem:[#allocation5 + $0x610] sm:$0xff]
    %v2170 = vld [vmem:[#allocation5 + $0x618] sm:$0xff]
    %v2171 = vld [vmem:[#allocation5 + $0x620] sm:$0xff]
    %v2172 = vld [vmem:[#allocation5 + $0x628] sm:$0xff]
    %v2173 = vld [vmem:[#allocation5 + $0x630] sm:$0xff]
    %v2174 = vld [vmem:[#allocation5 + $0x638] sm:$0xff]
    %v2175 = vld [vmem:[#allocation5 + $0x640] sm:$0xff]
    %v2176 = vld [vmem:[#allocation5 + $0x648] sm:$0xff]
    %v2177 = vld [vmem:[#allocation5 + $0x650] sm:$0xff]
    %v2178 = vld [vmem:[#allocation5 + $0x658] sm:$0xff]
    %v2179 = vld [vmem:[#allocation5 + $0x660] sm:$0xff]
    %v2180 = vld [vmem:[#allocation5 + $0x668] sm:$0xff]
    %v2181 = vld [vmem:[#allocation5 + $0x670] sm:$0xff]
    %v2182 = vld [vmem:[#allocation5 + $0x678] sm:$0xff]
    %v2183 = vld [vmem:[#allocation5 + $0x680] sm:$0xff]
    %v2184 = vld [vmem:[#allocation5 + $0x688] sm:$0xff]
    %v2185 = vld [vmem:[#allocation5 + $0x690] sm:$0xff]
    %v2186 = vld [vmem:[#allocation5 + $0x698] sm:$0xff]
    %v2187 = vld [vmem:[#allocation5 + $0x6a0] sm:$0xff]
    %v2188 = vld [vmem:[#allocation5 + $0x6a8] sm:$0xff]
    %v2189 = vld [vmem:[#allocation5 + $0x6b0] sm:$0xff]
    %v2190 = vld [vmem:[#allocation5 + $0x6b8] sm:$0xff]
    %v2191 = vld [vmem:[#allocation5 + $0x6c0] sm:$0xff]
    %v2192 = vld [vmem:[#allocation5 + $0x6c8] sm:$0xff]
    %v2193 = vld [vmem:[#allocation5 + $0x6d0] sm:$0xff]
    %v2194 = vld [vmem:[#allocation5 + $0x6d8] sm:$0xff]
    %v2195 = vld [vmem:[#allocation5 + $0x6e0] sm:$0xff]
    %v2196 = vld [vmem:[#allocation5 + $0x6e8] sm:$0xff]
    %v2197 = vld [vmem:[#allocation5 + $0x6f0] sm:$0xff]
    %v2198 = vld [vmem:[#allocation5 + $0x6f8] sm:$0xff]
    %v2199 = vld [vmem:[#allocation5 + $0x700] sm:$0xff]
    %v2200 = vld [vmem:[#allocation5 + $0x708] sm:$0xff]
    %v2201 = vld [vmem:[#allocation5 + $0x710] sm:$0xff]
    %v2202 = vld [vmem:[#allocation5 + $0x718] sm:$0xff]
    %v2203 = vld [vmem:[#allocation5 + $0x720] sm:$0xff]
    %v2204 = vld [vmem:[#allocation5 + $0x728] sm:$0xff]
    %v2205 = vld [vmem:[#allocation5 + $0x730] sm:$0xff]
    %v2206 = vld [vmem:[#allocation5 + $0x738] sm:$0xff]
    %v2207 = vld [vmem:[#allocation5 + $0x740] sm:$0xff]
    %v2208 = vld [vmem:[#allocation5 + $0x748] sm:$0xff]
    %v2209 = vld [vmem:[#allocation5 + $0x750] sm:$0xff]
    %v2210 = vld [vmem:[#allocation5 + $0x758] sm:$0xff]
    %v2211 = vld [vmem:[#allocation5 + $0x760] sm:$0xff]
    %v2212 = vld [vmem:[#allocation5 + $0x768] sm:$0xff]
    %v2213 = vld [vmem:[#allocation5 + $0x770] sm:$0xff]
    %v2214 = vld [vmem:[#allocation5 + $0x778] sm:$0xff]
    %v2215 = vld [vmem:[#allocation5 + $0x780] sm:$0xff]
    %v2216 = vld [vmem:[#allocation5 + $0x788] sm:$0xff]
    %v2217 = vld [vmem:[#allocation5 + $0x790] sm:$0xff]
    %v2218 = vld [vmem:[#allocation5 + $0x798] sm:$0xff]
    %v2219 = vld [vmem:[#allocation5 + $0x7a0] sm:$0xff]
    %v2220 = vld [vmem:[#allocation5 + $0x7a8] sm:$0xff]
    %v2221 = vld [vmem:[#allocation5 + $0x7b0] sm:$0xff]
    %v2222 = vld [vmem:[#allocation5 + $0x7b8] sm:$0xff]
    %v2223 = vld [vmem:[#allocation5 + $0x7c0] sm:$0xff]
    %v2224 = vld [vmem:[#allocation5 + $0x7c8] sm:$0xff]
    %v2225 = vld [vmem:[#allocation5 + $0x7d0] sm:$0xff]
    %v2226 = vld [vmem:[#allocation5 + $0x7d8] sm:$0xff]
    %v2227 = vld [vmem:[#allocation5 + $0x7e0] sm:$0xff]
    %v2228 = vld [vmem:[#allocation5 + $0x7e8] sm:$0xff]
    %v2229 = vld [vmem:[#allocation5 + $0x7f0] sm:$0xff]
    %v2230 = vld [vmem:[#allocation5 + $0x7f8] sm:$0xff]
    %v2231 = vld [vmem:[%s8] sm:$0xf]
    %v2233 = vlaneseq
    %v2234 = vshrl.u32 %v2233, 7
    %v2235 = vsub.s32 0, %v2234
    %v2236 = vrot.slane %v2231, %v2235
    %v2237 = vlaneseq
    %v2238 = vshrl.u32 %v2237, 7
    %v2239 = vsub.s32 1, %v2238
    %v2240 = vrot.slane %v2231, %v2239
    %v2241 = vlaneseq
    %v2242 = vshrl.u32 %v2241, 7
    %v2243 = vsub.s32 2, %v2242
    %v2244 = vrot.slane %v2231, %v2243
    %v2245 = vlaneseq
    %v2246 = vshrl.u32 %v2245, 7
    %v2247 = vsub.s32 3, %v2246
    %v2248 = vrot.slane %v2231, %v2247
    %v2317 = vunpack.c.l.b16 %v1911
    %v2318 = vunpack.c.l.b16 %v1912
    %v2319 = vunpack.c.l.b16 %v1913
    %v2320 = vunpack.c.l.b16 %v1914
    %v2321 = vunpack.c.l.b16 %v1915
    %v2322 = vunpack.c.l.b16 %v1916
    %v2323 = vunpack.c.l.b16 %v1917
    %v2324 = vunpack.c.l.b16 %v1918
    %v2325 = vunpack.c.l.b16 %v1919
    %v2326 = vunpack.c.l.b16 %v1920
    %v2327 = vunpack.c.l.b16 %v1921
    %v2328 = vunpack.c.l.b16 %v1922
    %v2329 = vunpack.c.l.b16 %v1923
    %v2330 = vunpack.c.l.b16 %v1924
    %v2331 = vunpack.c.l.b16 %v1925
    %v2332 = vunpack.c.l.b16 %v1926
    %v2333 = vunpack.c.l.b16 %v1927
    %v2334 = vunpack.c.l.b16 %v1928
    %v2335 = vunpack.c.l.b16 %v1929
    %v2336 = vunpack.c.l.b16 %v1930
    %v2337 = vunpack.c.l.b16 %v1931
    %v2338 = vunpack.c.l.b16 %v1932
    %v2339 = vunpack.c.l.b16 %v1933
    %v2340 = vunpack.c.l.b16 %v1934
    %v2341 = vunpack.c.l.b16 %v1935
    %v2342 = vunpack.c.l.b16 %v1936
    %v2343 = vunpack.c.l.b16 %v1937
    %v2344 = vunpack.c.l.b16 %v1938
    %v2345 = vunpack.c.l.b16 %v1939
    %v2346 = vunpack.c.l.b16 %v1940
    %v2347 = vunpack.c.l.b16 %v1941
    %v2348 = vunpack.c.l.b16 %v1942
    %v2349 = vunpack.c.l.b16 %v1943
    %v2350 = vunpack.c.l.b16 %v1944
    %v2351 = vunpack.c.l.b16 %v1945
    %v2352 = vunpack.c.l.b16 %v1946
    %v2353 = vunpack.c.l.b16 %v1947
    %v2354 = vunpack.c.l.b16 %v1948
    %v2355 = vunpack.c.l.b16 %v1949
    %v2356 = vunpack.c.l.b16 %v1950
    %v2357 = vunpack.c.l.b16 %v1951
    %v2358 = vunpack.c.l.b16 %v1952
    %v2359 = vunpack.c.l.b16 %v1953
    %v2360 = vunpack.c.l.b16 %v1954
    %v2361 = vunpack.c.l.b16 %v1955
    %v2362 = vunpack.c.l.b16 %v1956
    %v2363 = vunpack.c.l.b16 %v1957
    %v2364 = vunpack.c.l.b16 %v1958
    %v2365 = vunpack.c.l.b16 %v1959
    %v2366 = vunpack.c.l.b16 %v1960
    %v2367 = vunpack.c.l.b16 %v1961
    %v2368 = vunpack.c.l.b16 %v1962
    %v2369 = vunpack.c.l.b16 %v1963
    %v2370 = vunpack.c.l.b16 %v1964
    %v2371 = vunpack.c.l.b16 %v1965
    %v2372 = vunpack.c.l.b16 %v1966
    %v2373 = vunpack.c.l.b16 %v1967
    %v2374 = vunpack.c.l.b16 %v1968
    %v2375 = vunpack.c.l.b16 %v1969
    %v2376 = vunpack.c.l.b16 %v1970
    %v2377 = vunpack.c.l.b16 %v1971
    %v2378 = vunpack.c.l.b16 %v1972
    %v2379 = vunpack.c.l.b16 %v1973
    %v2380 = vunpack.c.l.b16 %v1974
    %vm2381 = vcmask 1041409
    %v2382 = vsel %vm2381, %v2325, %v2317
    %vm2383 = vcmask 1042434
    %v2384 = vsel %vm2383, %v2333, %v2382
    %vm2385 = vcmask 1043459
    %v2386 = vsel %vm2385, %v2341, %v2384
    %vm2387 = vcmask 1044484
    %v2388 = vsel %vm2387, %v2349, %v2386
    %vm2389 = vcmask 1045509
    %v2390 = vsel %vm2389, %v2357, %v2388
    %vm2391 = vcmask 1046534
    %v2392 = vsel %vm2391, %v2365, %v2390
    %vm2393 = vcmask 1047559
    %v2394 = vsel %vm2393, %v2373, %v2392
    %v2395 = vsel %vm2381, %v2326, %v2318
    %v2396 = vsel %vm2383, %v2334, %v2395
    %v2397 = vsel %vm2385, %v2342, %v2396
    %v2398 = vsel %vm2387, %v2350, %v2397
    %v2399 = vsel %vm2389, %v2358, %v2398
    %v2400 = vsel %vm2391, %v2366, %v2399
    %v2401 = vsel %vm2393, %v2374, %v2400
    %v2402 = vsel %vm2381, %v2327, %v2319
    %v2403 = vsel %vm2383, %v2335, %v2402
    %v2404 = vsel %vm2385, %v2343, %v2403
    %v2405 = vsel %vm2387, %v2351, %v2404
    %v2406 = vsel %vm2389, %v2359, %v2405
    %v2407 = vsel %vm2391, %v2367, %v2406
    %v2408 = vsel %vm2393, %v2375, %v2407
    %v2409 = vsel %vm2381, %v2328, %v2320
    %v2410 = vsel %vm2383, %v2336, %v2409
    %v2411 = vsel %vm2385, %v2344, %v2410
    %v2412 = vsel %vm2387, %v2352, %v2411
    %v2413 = vsel %vm2389, %v2360, %v2412
    %v2414 = vsel %vm2391, %v2368, %v2413
    %v2415 = vsel %vm2393, %v2376, %v2414
    %v2416 = vsel %vm2381, %v2329, %v2321
    %v2417 = vsel %vm2383, %v2337, %v2416
    %v2418 = vsel %vm2385, %v2345, %v2417
    %v2419 = vsel %vm2387, %v2353, %v2418
    %v2420 = vsel %vm2389, %v2361, %v2419
    %v2421 = vsel %vm2391, %v2369, %v2420
    %v2422 = vsel %vm2393, %v2377, %v2421
    %v2423 = vsel %vm2381, %v2330, %v2322
    %v2424 = vsel %vm2383, %v2338, %v2423
    %v2425 = vsel %vm2385, %v2346, %v2424
    %v2426 = vsel %vm2387, %v2354, %v2425
    %v2427 = vsel %vm2389, %v2362, %v2426
    %v2428 = vsel %vm2391, %v2370, %v2427
    %v2429 = vsel %vm2393, %v2378, %v2428
    %v2430 = vsel %vm2381, %v2331, %v2323
    %v2431 = vsel %vm2383, %v2339, %v2430
    %v2432 = vsel %vm2385, %v2347, %v2431
    %v2433 = vsel %vm2387, %v2355, %v2432
    %v2434 = vsel %vm2389, %v2363, %v2433
    %v2435 = vsel %vm2391, %v2371, %v2434
    %v2436 = vsel %vm2393, %v2379, %v2435
    %v2437 = vsel %vm2381, %v2332, %v2324
    %v2438 = vsel %vm2383, %v2340, %v2437
    %v2439 = vsel %vm2385, %v2348, %v2438
    %v2440 = vsel %vm2387, %v2356, %v2439
    %v2441 = vsel %vm2389, %v2364, %v2440
    %v2442 = vsel %vm2391, %v2372, %v2441
    %v2443 = vsel %vm2393, %v2380, %v2442
    %v2444 = vpack.c.b16 %v2394, %v2394
    %v2445 = vpack.c.b16 %v2401, %v2401
    %v2446 = vpack.c.b16 %v2408, %v2408
    %v2447 = vpack.c.b16 %v2415, %v2415
    %v2448 = vpack.c.b16 %v2422, %v2422
    %v2449 = vpack.c.b16 %v2429, %v2429
    %v2450 = vpack.c.b16 %v2436, %v2436
    %v2451 = vpack.c.b16 %v2443, %v2443
    %v2716 = vunpack.c.l.b16 %v1975
    %v2717 = vunpack.c.h.b16 %v1975
    %v2718 = vunpack.c.l.b16 %v1976
    %v2719 = vunpack.c.h.b16 %v1976
    %v2720 = vunpack.c.l.b16 %v1977
    %v2721 = vunpack.c.h.b16 %v1977
    %v2722 = vunpack.c.l.b16 %v1978
    %v2723 = vunpack.c.h.b16 %v1978
    %v2724 = vunpack.c.l.b16 %v1979
    %v2725 = vunpack.c.h.b16 %v1979
    %v2726 = vunpack.c.l.b16 %v1980
    %v2727 = vunpack.c.h.b16 %v1980
    %v2728 = vunpack.c.l.b16 %v1981
    %v2729 = vunpack.c.h.b16 %v1981
    %v2730 = vunpack.c.l.b16 %v1982
    %v2731 = vunpack.c.h.b16 %v1982
    %v2732 = vunpack.c.l.b16 %v1983
    %v2733 = vunpack.c.h.b16 %v1983
    %v2734 = vunpack.c.l.b16 %v1984
    %v2735 = vunpack.c.h.b16 %v1984
    %v2736 = vunpack.c.l.b16 %v1985
    %v2737 = vunpack.c.h.b16 %v1985
    %v2738 = vunpack.c.l.b16 %v1986
    %v2739 = vunpack.c.h.b16 %v1986
    %v2740 = vunpack.c.l.b16 %v1987
    %v2741 = vunpack.c.h.b16 %v1987
    %v2742 = vunpack.c.l.b16 %v1988
    %v2743 = vunpack.c.h.b16 %v1988
    %v2744 = vunpack.c.l.b16 %v1989
    %v2745 = vunpack.c.h.b16 %v1989
    %v2746 = vunpack.c.l.b16 %v1990
    %v2747 = vunpack.c.h.b16 %v1990
    %v2748 = vunpack.c.l.b16 %v1991
    %v2749 = vunpack.c.h.b16 %v1991
    %v2750 = vunpack.c.l.b16 %v1992
    %v2751 = vunpack.c.h.b16 %v1992
    %v2752 = vunpack.c.l.b16 %v1993
    %v2753 = vunpack.c.h.b16 %v1993
    %v2754 = vunpack.c.l.b16 %v1994
    %v2755 = vunpack.c.h.b16 %v1994
    %v2756 = vunpack.c.l.b16 %v1995
    %v2757 = vunpack.c.h.b16 %v1995
    %v2758 = vunpack.c.l.b16 %v1996
    %v2759 = vunpack.c.h.b16 %v1996
    %v2760 = vunpack.c.l.b16 %v1997
    %v2761 = vunpack.c.h.b16 %v1997
    %v2762 = vunpack.c.l.b16 %v1998
    %v2763 = vunpack.c.h.b16 %v1998
    %v2764 = vunpack.c.l.b16 %v1999
    %v2765 = vunpack.c.h.b16 %v1999
    %v2766 = vunpack.c.l.b16 %v2000
    %v2767 = vunpack.c.h.b16 %v2000
    %v2768 = vunpack.c.l.b16 %v2001
    %v2769 = vunpack.c.h.b16 %v2001
    %v2770 = vunpack.c.l.b16 %v2002
    %v2771 = vunpack.c.h.b16 %v2002
    %v2772 = vunpack.c.l.b16 %v2003
    %v2773 = vunpack.c.h.b16 %v2003
    %v2774 = vunpack.c.l.b16 %v2004
    %v2775 = vunpack.c.h.b16 %v2004
    %v2776 = vunpack.c.l.b16 %v2005
    %v2777 = vunpack.c.h.b16 %v2005
    %v2778 = vunpack.c.l.b16 %v2006
    %v2779 = vunpack.c.h.b16 %v2006
    %v2780 = vunpack.c.l.b16 %v2007
    %v2781 = vunpack.c.h.b16 %v2007
    %v2782 = vunpack.c.l.b16 %v2008
    %v2783 = vunpack.c.h.b16 %v2008
    %v2784 = vunpack.c.l.b16 %v2009
    %v2785 = vunpack.c.h.b16 %v2009
    %v2786 = vunpack.c.l.b16 %v2010
    %v2787 = vunpack.c.h.b16 %v2010
    %v2788 = vunpack.c.l.b16 %v2011
    %v2789 = vunpack.c.h.b16 %v2011
    %v2790 = vunpack.c.l.b16 %v2012
    %v2791 = vunpack.c.h.b16 %v2012
    %v2792 = vunpack.c.l.b16 %v2013
    %v2793 = vunpack.c.h.b16 %v2013
    %v2794 = vunpack.c.l.b16 %v2014
    %v2795 = vunpack.c.h.b16 %v2014
    %v2796 = vunpack.c.l.b16 %v2015
    %v2797 = vunpack.c.h.b16 %v2015
    %v2798 = vunpack.c.l.b16 %v2016
    %v2799 = vunpack.c.h.b16 %v2016
    %v2800 = vunpack.c.l.b16 %v2017
    %v2801 = vunpack.c.h.b16 %v2017
    %v2802 = vunpack.c.l.b16 %v2018
    %v2803 = vunpack.c.h.b16 %v2018
    %v2804 = vunpack.c.l.b16 %v2019
    %v2805 = vunpack.c.h.b16 %v2019
    %v2806 = vunpack.c.l.b16 %v2020
    %v2807 = vunpack.c.h.b16 %v2020
    %v2808 = vunpack.c.l.b16 %v2021
    %v2809 = vunpack.c.h.b16 %v2021
    %v2810 = vunpack.c.l.b16 %v2022
    %v2811 = vunpack.c.h.b16 %v2022
    %v2812 = vunpack.c.l.b16 %v2023
    %v2813 = vunpack.c.h.b16 %v2023
    %v2814 = vunpack.c.l.b16 %v2024
    %v2815 = vunpack.c.h.b16 %v2024
    %v2816 = vunpack.c.l.b16 %v2025
    %v2817 = vunpack.c.h.b16 %v2025
    %v2818 = vunpack.c.l.b16 %v2026
    %v2819 = vunpack.c.h.b16 %v2026
    %v2820 = vunpack.c.l.b16 %v2027
    %v2821 = vunpack.c.h.b16 %v2027
    %v2822 = vunpack.c.l.b16 %v2028
    %v2823 = vunpack.c.h.b16 %v2028
    %v2824 = vunpack.c.l.b16 %v2029
    %v2825 = vunpack.c.h.b16 %v2029
    %v2826 = vunpack.c.l.b16 %v2030
    %v2827 = vunpack.c.h.b16 %v2030
    %v2828 = vunpack.c.l.b16 %v2031
    %v2829 = vunpack.c.h.b16 %v2031
    %v2830 = vunpack.c.l.b16 %v2032
    %v2831 = vunpack.c.h.b16 %v2032
    %v2832 = vunpack.c.l.b16 %v2033
    %v2833 = vunpack.c.h.b16 %v2033
    %v2834 = vunpack.c.l.b16 %v2034
    %v2835 = vunpack.c.h.b16 %v2034
    %v2836 = vunpack.c.l.b16 %v2035
    %v2837 = vunpack.c.h.b16 %v2035
    %v2838 = vunpack.c.l.b16 %v2036
    %v2839 = vunpack.c.h.b16 %v2036
    %v2840 = vunpack.c.l.b16 %v2037
    %v2841 = vunpack.c.h.b16 %v2037
    %v2842 = vunpack.c.l.b16 %v2038
    %v2843 = vunpack.c.h.b16 %v2038
    %v2844 = vunpack.c.l.b16 %v2039
    %v2845 = vunpack.c.h.b16 %v2039
    %v2846 = vunpack.c.l.b16 %v2040
    %v2847 = vunpack.c.h.b16 %v2040
    %v2848 = vunpack.c.l.b16 %v2041
    %v2849 = vunpack.c.h.b16 %v2041
    %v2850 = vunpack.c.l.b16 %v2042
    %v2851 = vunpack.c.h.b16 %v2042
    %v2852 = vunpack.c.l.b16 %v2043
    %v2853 = vunpack.c.h.b16 %v2043
    %v2854 = vunpack.c.l.b16 %v2044
    %v2855 = vunpack.c.h.b16 %v2044
    %v2856 = vunpack.c.l.b16 %v2045
    %v2857 = vunpack.c.h.b16 %v2045
    %v2858 = vunpack.c.l.b16 %v2046
    %v2859 = vunpack.c.h.b16 %v2046
    %v2860 = vunpack.c.l.b16 %v2047
    %v2861 = vunpack.c.h.b16 %v2047
    %v2862 = vunpack.c.l.b16 %v2048
    %v2863 = vunpack.c.h.b16 %v2048
    %v2864 = vunpack.c.l.b16 %v2049
    %v2865 = vunpack.c.h.b16 %v2049
    %v2866 = vunpack.c.l.b16 %v2050
    %v2867 = vunpack.c.h.b16 %v2050
    %v2868 = vunpack.c.l.b16 %v2051
    %v2869 = vunpack.c.h.b16 %v2051
    %v2870 = vunpack.c.l.b16 %v2052
    %v2871 = vunpack.c.h.b16 %v2052
    %v2872 = vunpack.c.l.b16 %v2053
    %v2873 = vunpack.c.h.b16 %v2053
    %v2874 = vunpack.c.l.b16 %v2054
    %v2875 = vunpack.c.h.b16 %v2054
    %v2876 = vunpack.c.l.b16 %v2055
    %v2877 = vunpack.c.h.b16 %v2055
    %v2878 = vunpack.c.l.b16 %v2056
    %v2879 = vunpack.c.h.b16 %v2056
    %v2880 = vunpack.c.l.b16 %v2057
    %v2881 = vunpack.c.h.b16 %v2057
    %v2882 = vunpack.c.l.b16 %v2058
    %v2883 = vunpack.c.h.b16 %v2058
    %v2884 = vunpack.c.l.b16 %v2059
    %v2885 = vunpack.c.h.b16 %v2059
    %v2886 = vunpack.c.l.b16 %v2060
    %v2887 = vunpack.c.h.b16 %v2060
    %v2888 = vunpack.c.l.b16 %v2061
    %v2889 = vunpack.c.h.b16 %v2061
    %v2890 = vunpack.c.l.b16 %v2062
    %v2891 = vunpack.c.h.b16 %v2062
    %v2892 = vunpack.c.l.b16 %v2063
    %v2893 = vunpack.c.h.b16 %v2063
    %v2894 = vunpack.c.l.b16 %v2064
    %v2895 = vunpack.c.h.b16 %v2064
    %v2896 = vunpack.c.l.b16 %v2065
    %v2897 = vunpack.c.h.b16 %v2065
    %v2898 = vunpack.c.l.b16 %v2066
    %v2899 = vunpack.c.h.b16 %v2066
    %v2900 = vunpack.c.l.b16 %v2067
    %v2901 = vunpack.c.h.b16 %v2067
    %v2902 = vunpack.c.l.b16 %v2068
    %v2903 = vunpack.c.h.b16 %v2068
    %v2904 = vunpack.c.l.b16 %v2069
    %v2905 = vunpack.c.h.b16 %v2069
    %v2906 = vunpack.c.l.b16 %v2070
    %v2907 = vunpack.c.h.b16 %v2070
    %v2908 = vunpack.c.l.b16 %v2071
    %v2909 = vunpack.c.h.b16 %v2071
    %v2910 = vunpack.c.l.b16 %v2072
    %v2911 = vunpack.c.h.b16 %v2072
    %v2912 = vunpack.c.l.b16 %v2073
    %v2913 = vunpack.c.h.b16 %v2073
    %v2914 = vunpack.c.l.b16 %v2074
    %v2915 = vunpack.c.h.b16 %v2074
    %v2916 = vunpack.c.l.b16 %v2075
    %v2917 = vunpack.c.h.b16 %v2075
    %v2918 = vunpack.c.l.b16 %v2076
    %v2919 = vunpack.c.h.b16 %v2076
    %v2920 = vunpack.c.l.b16 %v2077
    %v2921 = vunpack.c.h.b16 %v2077
    %v2922 = vunpack.c.l.b16 %v2078
    %v2923 = vunpack.c.h.b16 %v2078
    %v2924 = vunpack.c.l.b16 %v2079
    %v2925 = vunpack.c.h.b16 %v2079
    %v2926 = vunpack.c.l.b16 %v2080
    %v2927 = vunpack.c.h.b16 %v2080
    %v2928 = vunpack.c.l.b16 %v2081
    %v2929 = vunpack.c.h.b16 %v2081
    %v2930 = vunpack.c.l.b16 %v2082
    %v2931 = vunpack.c.h.b16 %v2082
    %v2932 = vunpack.c.l.b16 %v2083
    %v2933 = vunpack.c.h.b16 %v2083
    %v2934 = vunpack.c.l.b16 %v2084
    %v2935 = vunpack.c.h.b16 %v2084
    %v2936 = vunpack.c.l.b16 %v2085
    %v2937 = vunpack.c.h.b16 %v2085
    %v2938 = vunpack.c.l.b16 %v2086
    %v2939 = vunpack.c.h.b16 %v2086
    %v2940 = vunpack.c.l.b16 %v2087
    %v2941 = vunpack.c.h.b16 %v2087
    %v2942 = vunpack.c.l.b16 %v2088
    %v2943 = vunpack.c.h.b16 %v2088
    %v2944 = vunpack.c.l.b16 %v2089
    %v2945 = vunpack.c.h.b16 %v2089
    %v2946 = vunpack.c.l.b16 %v2090
    %v2947 = vunpack.c.h.b16 %v2090
    %v2948 = vunpack.c.l.b16 %v2091
    %v2949 = vunpack.c.h.b16 %v2091
    %v2950 = vunpack.c.l.b16 %v2092
    %v2951 = vunpack.c.h.b16 %v2092
    %v2952 = vunpack.c.l.b16 %v2093
    %v2953 = vunpack.c.h.b16 %v2093
    %v2954 = vunpack.c.l.b16 %v2094
    %v2955 = vunpack.c.h.b16 %v2094
    %v2956 = vunpack.c.l.b16 %v2095
    %v2957 = vunpack.c.h.b16 %v2095
    %v2958 = vunpack.c.l.b16 %v2096
    %v2959 = vunpack.c.h.b16 %v2096
    %v2960 = vunpack.c.l.b16 %v2097
    %v2961 = vunpack.c.h.b16 %v2097
    %v2962 = vunpack.c.l.b16 %v2098
    %v2963 = vunpack.c.h.b16 %v2098
    %v2964 = vunpack.c.l.b16 %v2099
    %v2965 = vunpack.c.h.b16 %v2099
    %v2966 = vunpack.c.l.b16 %v2100
    %v2967 = vunpack.c.h.b16 %v2100
    %v2968 = vunpack.c.l.b16 %v2101
    %v2969 = vunpack.c.h.b16 %v2101
    %v2970 = vunpack.c.l.b16 %v2102
    %v2971 = vunpack.c.h.b16 %v2102
    %v2972 = vunpack.c.l.b16 %v2103
    %v2973 = vunpack.c.h.b16 %v2103
    %v2974 = vunpack.c.l.b16 %v2104
    %v2975 = vunpack.c.h.b16 %v2104
    %v2976 = vunpack.c.l.b16 %v2105
    %v2977 = vunpack.c.h.b16 %v2105
    %v2978 = vunpack.c.l.b16 %v2106
    %v2979 = vunpack.c.h.b16 %v2106
    %v2980 = vunpack.c.l.b16 %v2107
    %v2981 = vunpack.c.h.b16 %v2107
    %v2982 = vunpack.c.l.b16 %v2108
    %v2983 = vunpack.c.h.b16 %v2108
    %v2984 = vunpack.c.l.b16 %v2109
    %v2985 = vunpack.c.h.b16 %v2109
    %v2986 = vunpack.c.l.b16 %v2110
    %v2987 = vunpack.c.h.b16 %v2110
    %v2988 = vunpack.c.l.b16 %v2111
    %v2989 = vunpack.c.h.b16 %v2111
    %v2990 = vunpack.c.l.b16 %v2112
    %v2991 = vunpack.c.h.b16 %v2112
    %v2992 = vunpack.c.l.b16 %v2113
    %v2993 = vunpack.c.h.b16 %v2113
    %v2994 = vunpack.c.l.b16 %v2114
    %v2995 = vunpack.c.h.b16 %v2114
    %v2996 = vunpack.c.l.b16 %v2115
    %v2997 = vunpack.c.h.b16 %v2115
    %v2998 = vunpack.c.l.b16 %v2116
    %v2999 = vunpack.c.h.b16 %v2116
    %v3000 = vunpack.c.l.b16 %v2117
    %v3001 = vunpack.c.h.b16 %v2117
    %v3002 = vunpack.c.l.b16 %v2118
    %v3003 = vunpack.c.h.b16 %v2118
    %v3004 = vunpack.c.l.b16 %v2119
    %v3005 = vunpack.c.h.b16 %v2119
    %v3006 = vunpack.c.l.b16 %v2120
    %v3007 = vunpack.c.h.b16 %v2120
    %v3008 = vunpack.c.l.b16 %v2121
    %v3009 = vunpack.c.h.b16 %v2121
    %v3010 = vunpack.c.l.b16 %v2122
    %v3011 = vunpack.c.h.b16 %v2122
    %v3012 = vunpack.c.l.b16 %v2123
    %v3013 = vunpack.c.h.b16 %v2123
    %v3014 = vunpack.c.l.b16 %v2124
    %v3015 = vunpack.c.h.b16 %v2124
    %v3016 = vunpack.c.l.b16 %v2125
    %v3017 = vunpack.c.h.b16 %v2125
    %v3018 = vunpack.c.l.b16 %v2126
    %v3019 = vunpack.c.h.b16 %v2126
    %v3020 = vunpack.c.l.b16 %v2127
    %v3021 = vunpack.c.h.b16 %v2127
    %v3022 = vunpack.c.l.b16 %v2128
    %v3023 = vunpack.c.h.b16 %v2128
    %v3024 = vunpack.c.l.b16 %v2129
    %v3025 = vunpack.c.h.b16 %v2129
    %v3026 = vunpack.c.l.b16 %v2130
    %v3027 = vunpack.c.h.b16 %v2130
    %v3028 = vunpack.c.l.b16 %v2131
    %v3029 = vunpack.c.h.b16 %v2131
    %v3030 = vunpack.c.l.b16 %v2132
    %v3031 = vunpack.c.h.b16 %v2132
    %v3032 = vunpack.c.l.b16 %v2133
    %v3033 = vunpack.c.h.b16 %v2133
    %v3034 = vunpack.c.l.b16 %v2134
    %v3035 = vunpack.c.h.b16 %v2134
    %v3036 = vunpack.c.l.b16 %v2135
    %v3037 = vunpack.c.h.b16 %v2135
    %v3038 = vunpack.c.l.b16 %v2136
    %v3039 = vunpack.c.h.b16 %v2136
    %v3040 = vunpack.c.l.b16 %v2137
    %v3041 = vunpack.c.h.b16 %v2137
    %v3042 = vunpack.c.l.b16 %v2138
    %v3043 = vunpack.c.h.b16 %v2138
    %v3044 = vunpack.c.l.b16 %v2139
    %v3045 = vunpack.c.h.b16 %v2139
    %v3046 = vunpack.c.l.b16 %v2140
    %v3047 = vunpack.c.h.b16 %v2140
    %v3048 = vunpack.c.l.b16 %v2141
    %v3049 = vunpack.c.h.b16 %v2141
    %v3050 = vunpack.c.l.b16 %v2142
    %v3051 = vunpack.c.h.b16 %v2142
    %v3052 = vunpack.c.l.b16 %v2143
    %v3053 = vunpack.c.h.b16 %v2143
    %v3054 = vunpack.c.l.b16 %v2144
    %v3055 = vunpack.c.h.b16 %v2144
    %v3056 = vunpack.c.l.b16 %v2145
    %v3057 = vunpack.c.h.b16 %v2145
    %v3058 = vunpack.c.l.b16 %v2146
    %v3059 = vunpack.c.h.b16 %v2146
    %v3060 = vunpack.c.l.b16 %v2147
    %v3061 = vunpack.c.h.b16 %v2147
    %v3062 = vunpack.c.l.b16 %v2148
    %v3063 = vunpack.c.h.b16 %v2148
    %v3064 = vunpack.c.l.b16 %v2149
    %v3065 = vunpack.c.h.b16 %v2149
    %v3066 = vunpack.c.l.b16 %v2150
    %v3067 = vunpack.c.h.b16 %v2150
    %v3068 = vunpack.c.l.b16 %v2151
    %v3069 = vunpack.c.h.b16 %v2151
    %v3070 = vunpack.c.l.b16 %v2152
    %v3071 = vunpack.c.h.b16 %v2152
    %v3072 = vunpack.c.l.b16 %v2153
    %v3073 = vunpack.c.h.b16 %v2153
    %v3074 = vunpack.c.l.b16 %v2154
    %v3075 = vunpack.c.h.b16 %v2154
    %v3076 = vunpack.c.l.b16 %v2155
    %v3077 = vunpack.c.h.b16 %v2155
    %v3078 = vunpack.c.l.b16 %v2156
    %v3079 = vunpack.c.h.b16 %v2156
    %v3080 = vunpack.c.l.b16 %v2157
    %v3081 = vunpack.c.h.b16 %v2157
    %v3082 = vunpack.c.l.b16 %v2158
    %v3083 = vunpack.c.h.b16 %v2158
    %v3084 = vunpack.c.l.b16 %v2159
    %v3085 = vunpack.c.h.b16 %v2159
    %v3086 = vunpack.c.l.b16 %v2160
    %v3087 = vunpack.c.h.b16 %v2160
    %v3088 = vunpack.c.l.b16 %v2161
    %v3089 = vunpack.c.h.b16 %v2161
    %v3090 = vunpack.c.l.b16 %v2162
    %v3091 = vunpack.c.h.b16 %v2162
    %v3092 = vunpack.c.l.b16 %v2163
    %v3093 = vunpack.c.h.b16 %v2163
    %v3094 = vunpack.c.l.b16 %v2164
    %v3095 = vunpack.c.h.b16 %v2164
    %v3096 = vunpack.c.l.b16 %v2165
    %v3097 = vunpack.c.h.b16 %v2165
    %v3098 = vunpack.c.l.b16 %v2166
    %v3099 = vunpack.c.h.b16 %v2166
    %v3100 = vunpack.c.l.b16 %v2167
    %v3101 = vunpack.c.h.b16 %v2167
    %v3102 = vunpack.c.l.b16 %v2168
    %v3103 = vunpack.c.h.b16 %v2168
    %v3104 = vunpack.c.l.b16 %v2169
    %v3105 = vunpack.c.h.b16 %v2169
    %v3106 = vunpack.c.l.b16 %v2170
    %v3107 = vunpack.c.h.b16 %v2170
    %v3108 = vunpack.c.l.b16 %v2171
    %v3109 = vunpack.c.h.b16 %v2171
    %v3110 = vunpack.c.l.b16 %v2172
    %v3111 = vunpack.c.h.b16 %v2172
    %v3112 = vunpack.c.l.b16 %v2173
    %v3113 = vunpack.c.h.b16 %v2173
    %v3114 = vunpack.c.l.b16 %v2174
    %v3115 = vunpack.c.h.b16 %v2174
    %v3116 = vunpack.c.l.b16 %v2175
    %v3117 = vunpack.c.h.b16 %v2175
    %v3118 = vunpack.c.l.b16 %v2176
    %v3119 = vunpack.c.h.b16 %v2176
    %v3120 = vunpack.c.l.b16 %v2177
    %v3121 = vunpack.c.h.b16 %v2177
    %v3122 = vunpack.c.l.b16 %v2178
    %v3123 = vunpack.c.h.b16 %v2178
    %v3124 = vunpack.c.l.b16 %v2179
    %v3125 = vunpack.c.h.b16 %v2179
    %v3126 = vunpack.c.l.b16 %v2180
    %v3127 = vunpack.c.h.b16 %v2180
    %v3128 = vunpack.c.l.b16 %v2181
    %v3129 = vunpack.c.h.b16 %v2181
    %v3130 = vunpack.c.l.b16 %v2182
    %v3131 = vunpack.c.h.b16 %v2182
    %v3132 = vunpack.c.l.b16 %v2183
    %v3133 = vunpack.c.h.b16 %v2183
    %v3134 = vunpack.c.l.b16 %v2184
    %v3135 = vunpack.c.h.b16 %v2184
    %v3136 = vunpack.c.l.b16 %v2185
    %v3137 = vunpack.c.h.b16 %v2185
    %v3138 = vunpack.c.l.b16 %v2186
    %v3139 = vunpack.c.h.b16 %v2186
    %v3140 = vunpack.c.l.b16 %v2187
    %v3141 = vunpack.c.h.b16 %v2187
    %v3142 = vunpack.c.l.b16 %v2188
    %v3143 = vunpack.c.h.b16 %v2188
    %v3144 = vunpack.c.l.b16 %v2189
    %v3145 = vunpack.c.h.b16 %v2189
    %v3146 = vunpack.c.l.b16 %v2190
    %v3147 = vunpack.c.h.b16 %v2190
    %v3148 = vunpack.c.l.b16 %v2191
    %v3149 = vunpack.c.h.b16 %v2191
    %v3150 = vunpack.c.l.b16 %v2192
    %v3151 = vunpack.c.h.b16 %v2192
    %v3152 = vunpack.c.l.b16 %v2193
    %v3153 = vunpack.c.h.b16 %v2193
    %v3154 = vunpack.c.l.b16 %v2194
    %v3155 = vunpack.c.h.b16 %v2194
    %v3156 = vunpack.c.l.b16 %v2195
    %v3157 = vunpack.c.h.b16 %v2195
    %v3158 = vunpack.c.l.b16 %v2196
    %v3159 = vunpack.c.h.b16 %v2196
    %v3160 = vunpack.c.l.b16 %v2197
    %v3161 = vunpack.c.h.b16 %v2197
    %v3162 = vunpack.c.l.b16 %v2198
    %v3163 = vunpack.c.h.b16 %v2198
    %v3164 = vunpack.c.l.b16 %v2199
    %v3165 = vunpack.c.h.b16 %v2199
    %v3166 = vunpack.c.l.b16 %v2200
    %v3167 = vunpack.c.h.b16 %v2200
    %v3168 = vunpack.c.l.b16 %v2201
    %v3169 = vunpack.c.h.b16 %v2201
    %v3170 = vunpack.c.l.b16 %v2202
    %v3171 = vunpack.c.h.b16 %v2202
    %v3172 = vunpack.c.l.b16 %v2203
    %v3173 = vunpack.c.h.b16 %v2203
    %v3174 = vunpack.c.l.b16 %v2204
    %v3175 = vunpack.c.h.b16 %v2204
    %v3176 = vunpack.c.l.b16 %v2205
    %v3177 = vunpack.c.h.b16 %v2205
    %v3178 = vunpack.c.l.b16 %v2206
    %v3179 = vunpack.c.h.b16 %v2206
    %v3180 = vunpack.c.l.b16 %v2207
    %v3181 = vunpack.c.h.b16 %v2207
    %v3182 = vunpack.c.l.b16 %v2208
    %v3183 = vunpack.c.h.b16 %v2208
    %v3184 = vunpack.c.l.b16 %v2209
    %v3185 = vunpack.c.h.b16 %v2209
    %v3186 = vunpack.c.l.b16 %v2210
    %v3187 = vunpack.c.h.b16 %v2210
    %v3188 = vunpack.c.l.b16 %v2211
    %v3189 = vunpack.c.h.b16 %v2211
    %v3190 = vunpack.c.l.b16 %v2212
    %v3191 = vunpack.c.h.b16 %v2212
    %v3192 = vunpack.c.l.b16 %v2213
    %v3193 = vunpack.c.h.b16 %v2213
    %v3194 = vunpack.c.l.b16 %v2214
    %v3195 = vunpack.c.h.b16 %v2214
    %v3196 = vunpack.c.l.b16 %v2215
    %v3197 = vunpack.c.h.b16 %v2215
    %v3198 = vunpack.c.l.b16 %v2216
    %v3199 = vunpack.c.h.b16 %v2216
    %v3200 = vunpack.c.l.b16 %v2217
    %v3201 = vunpack.c.h.b16 %v2217
    %v3202 = vunpack.c.l.b16 %v2218
    %v3203 = vunpack.c.h.b16 %v2218
    %v3204 = vunpack.c.l.b16 %v2219
    %v3205 = vunpack.c.h.b16 %v2219
    %v3206 = vunpack.c.l.b16 %v2220
    %v3207 = vunpack.c.h.b16 %v2220
    %v3208 = vunpack.c.l.b16 %v2221
    %v3209 = vunpack.c.h.b16 %v2221
    %v3210 = vunpack.c.l.b16 %v2222
    %v3211 = vunpack.c.h.b16 %v2222
    %v3212 = vunpack.c.l.b16 %v2223
    %v3213 = vunpack.c.h.b16 %v2223
    %v3214 = vunpack.c.l.b16 %v2224
    %v3215 = vunpack.c.h.b16 %v2224
    %v3216 = vunpack.c.l.b16 %v2225
    %v3217 = vunpack.c.h.b16 %v2225
    %v3218 = vunpack.c.l.b16 %v2226
    %v3219 = vunpack.c.h.b16 %v2226
    %v3220 = vunpack.c.l.b16 %v2227
    %v3221 = vunpack.c.h.b16 %v2227
    %v3222 = vunpack.c.l.b16 %v2228
    %v3223 = vunpack.c.h.b16 %v2228
    %v3224 = vunpack.c.l.b16 %v2229
    %v3225 = vunpack.c.h.b16 %v2229
    %v3226 = vunpack.c.l.b16 %v2230
    %v3227 = vunpack.c.h.b16 %v2230
    %v3228 = vpack.c.b16 %v2720, %v2716
    %v3229 = vpack.c.b16 %v2721, %v2717
    %v3230 = vpack.c.b16 %v2722, %v2718
    %v3231 = vpack.c.b16 %v2723, %v2719
    %v3232 = vpack.c.b16 %v2728, %v2724
    %v3233 = vpack.c.b16 %v2729, %v2725
    %v3234 = vpack.c.b16 %v2730, %v2726
    %v3235 = vpack.c.b16 %v2731, %v2727
    %v3236 = vpack.c.b16 %v2736, %v2732
    %v3237 = vpack.c.b16 %v2737, %v2733
    %v3238 = vpack.c.b16 %v2738, %v2734
    %v3239 = vpack.c.b16 %v2739, %v2735
    %v3240 = vpack.c.b16 %v2744, %v2740
    %v3241 = vpack.c.b16 %v2745, %v2741
    %v3242 = vpack.c.b16 %v2746, %v2742
    %v3243 = vpack.c.b16 %v2747, %v2743
    %v3244 = vpack.c.b16 %v2752, %v2748
    %v3245 = vpack.c.b16 %v2753, %v2749
    %v3246 = vpack.c.b16 %v2754, %v2750
    %v3247 = vpack.c.b16 %v2755, %v2751
    %v3248 = vpack.c.b16 %v2760, %v2756
    %v3249 = vpack.c.b16 %v2761, %v2757
    %v3250 = vpack.c.b16 %v2762, %v2758
    %v3251 = vpack.c.b16 %v2763, %v2759
    %v3252 = vpack.c.b16 %v2768, %v2764
    %v3253 = vpack.c.b16 %v2769, %v2765
    %v3254 = vpack.c.b16 %v2770, %v2766
    %v3255 = vpack.c.b16 %v2771, %v2767
    %v3256 = vpack.c.b16 %v2776, %v2772
    %v3257 = vpack.c.b16 %v2777, %v2773
    %v3258 = vpack.c.b16 %v2778, %v2774
    %v3259 = vpack.c.b16 %v2779, %v2775
    %v3260 = vpack.c.b16 %v2784, %v2780
    %v3261 = vpack.c.b16 %v2785, %v2781
    %v3262 = vpack.c.b16 %v2786, %v2782
    %v3263 = vpack.c.b16 %v2787, %v2783
    %v3264 = vpack.c.b16 %v2792, %v2788
    %v3265 = vpack.c.b16 %v2793, %v2789
    %v3266 = vpack.c.b16 %v2794, %v2790
    %v3267 = vpack.c.b16 %v2795, %v2791
    %v3268 = vpack.c.b16 %v2800, %v2796
    %v3269 = vpack.c.b16 %v2801, %v2797
    %v3270 = vpack.c.b16 %v2802, %v2798
    %v3271 = vpack.c.b16 %v2803, %v2799
    %v3272 = vpack.c.b16 %v2808, %v2804
    %v3273 = vpack.c.b16 %v2809, %v2805
    %v3274 = vpack.c.b16 %v2810, %v2806
    %v3275 = vpack.c.b16 %v2811, %v2807
    %v3276 = vpack.c.b16 %v2816, %v2812
    %v3277 = vpack.c.b16 %v2817, %v2813
    %v3278 = vpack.c.b16 %v2818, %v2814
    %v3279 = vpack.c.b16 %v2819, %v2815
    %v3280 = vpack.c.b16 %v2824, %v2820
    %v3281 = vpack.c.b16 %v2825, %v2821
    %v3282 = vpack.c.b16 %v2826, %v2822
    %v3283 = vpack.c.b16 %v2827, %v2823
    %v3284 = vpack.c.b16 %v2832, %v2828
    %v3285 = vpack.c.b16 %v2833, %v2829
    %v3286 = vpack.c.b16 %v2834, %v2830
    %v3287 = vpack.c.b16 %v2835, %v2831
    %v3288 = vpack.c.b16 %v2840, %v2836
    %v3289 = vpack.c.b16 %v2841, %v2837
    %v3290 = vpack.c.b16 %v2842, %v2838
    %v3291 = vpack.c.b16 %v2843, %v2839
    %v3292 = vpack.c.b16 %v2848, %v2844
    %v3293 = vpack.c.b16 %v2849, %v2845
    %v3294 = vpack.c.b16 %v2850, %v2846
    %v3295 = vpack.c.b16 %v2851, %v2847
    %v3296 = vpack.c.b16 %v2856, %v2852
    %v3297 = vpack.c.b16 %v2857, %v2853
    %v3298 = vpack.c.b16 %v2858, %v2854
    %v3299 = vpack.c.b16 %v2859, %v2855
    %v3300 = vpack.c.b16 %v2864, %v2860
    %v3301 = vpack.c.b16 %v2865, %v2861
    %v3302 = vpack.c.b16 %v2866, %v2862
    %v3303 = vpack.c.b16 %v2867, %v2863
    %v3304 = vpack.c.b16 %v2872, %v2868
    %v3305 = vpack.c.b16 %v2873, %v2869
    %v3306 = vpack.c.b16 %v2874, %v2870
    %v3307 = vpack.c.b16 %v2875, %v2871
    %v3308 = vpack.c.b16 %v2880, %v2876
    %v3309 = vpack.c.b16 %v2881, %v2877
    %v3310 = vpack.c.b16 %v2882, %v2878
    %v3311 = vpack.c.b16 %v2883, %v2879
    %v3312 = vpack.c.b16 %v2888, %v2884
    %v3313 = vpack.c.b16 %v2889, %v2885
    %v3314 = vpack.c.b16 %v2890, %v2886
    %v3315 = vpack.c.b16 %v2891, %v2887
    %v3316 = vpack.c.b16 %v2896, %v2892
    %v3317 = vpack.c.b16 %v2897, %v2893
    %v3318 = vpack.c.b16 %v2898, %v2894
    %v3319 = vpack.c.b16 %v2899, %v2895
    %v3320 = vpack.c.b16 %v2904, %v2900
    %v3321 = vpack.c.b16 %v2905, %v2901
    %v3322 = vpack.c.b16 %v2906, %v2902
    %v3323 = vpack.c.b16 %v2907, %v2903
    %v3324 = vpack.c.b16 %v2912, %v2908
    %v3325 = vpack.c.b16 %v2913, %v2909
    %v3326 = vpack.c.b16 %v2914, %v2910
    %v3327 = vpack.c.b16 %v2915, %v2911
    %v3328 = vpack.c.b16 %v2920, %v2916
    %v3329 = vpack.c.b16 %v2921, %v2917
    %v3330 = vpack.c.b16 %v2922, %v2918
    %v3331 = vpack.c.b16 %v2923, %v2919
    %v3332 = vpack.c.b16 %v2928, %v2924
    %v3333 = vpack.c.b16 %v2929, %v2925
    %v3334 = vpack.c.b16 %v2930, %v2926
    %v3335 = vpack.c.b16 %v2931, %v2927
    %v3336 = vpack.c.b16 %v2936, %v2932
    %v3337 = vpack.c.b16 %v2937, %v2933
    %v3338 = vpack.c.b16 %v2938, %v2934
    %v3339 = vpack.c.b16 %v2939, %v2935
    %v3340 = vpack.c.b16 %v2944, %v2940
    %v3341 = vpack.c.b16 %v2945, %v2941
    %v3342 = vpack.c.b16 %v2946, %v2942
    %v3343 = vpack.c.b16 %v2947, %v2943
    %v3344 = vpack.c.b16 %v2952, %v2948
    %v3345 = vpack.c.b16 %v2953, %v2949
    %v3346 = vpack.c.b16 %v2954, %v2950
    %v3347 = vpack.c.b16 %v2955, %v2951
    %v3348 = vpack.c.b16 %v2960, %v2956
    %v3349 = vpack.c.b16 %v2961, %v2957
    %v3350 = vpack.c.b16 %v2962, %v2958
    %v3351 = vpack.c.b16 %v2963, %v2959
    %v3352 = vpack.c.b16 %v2968, %v2964
    %v3353 = vpack.c.b16 %v2969, %v2965
    %v3354 = vpack.c.b16 %v2970, %v2966
    %v3355 = vpack.c.b16 %v2971, %v2967
    %v3356 = vpack.c.b16 %v2976, %v2972
    %v3357 = vpack.c.b16 %v2977, %v2973
    %v3358 = vpack.c.b16 %v2978, %v2974
    %v3359 = vpack.c.b16 %v2979, %v2975
    %v3360 = vpack.c.b16 %v2984, %v2980
    %v3361 = vpack.c.b16 %v2985, %v2981
    %v3362 = vpack.c.b16 %v2986, %v2982
    %v3363 = vpack.c.b16 %v2987, %v2983
    %v3364 = vpack.c.b16 %v2992, %v2988
    %v3365 = vpack.c.b16 %v2993, %v2989
    %v3366 = vpack.c.b16 %v2994, %v2990
    %v3367 = vpack.c.b16 %v2995, %v2991
    %v3368 = vpack.c.b16 %v3000, %v2996
    %v3369 = vpack.c.b16 %v3001, %v2997
    %v3370 = vpack.c.b16 %v3002, %v2998
    %v3371 = vpack.c.b16 %v3003, %v2999
    %v3372 = vpack.c.b16 %v3008, %v3004
    %v3373 = vpack.c.b16 %v3009, %v3005
    %v3374 = vpack.c.b16 %v3010, %v3006
    %v3375 = vpack.c.b16 %v3011, %v3007
    %v3376 = vpack.c.b16 %v3016, %v3012
    %v3377 = vpack.c.b16 %v3017, %v3013
    %v3378 = vpack.c.b16 %v3018, %v3014
    %v3379 = vpack.c.b16 %v3019, %v3015
    %v3380 = vpack.c.b16 %v3024, %v3020
    %v3381 = vpack.c.b16 %v3025, %v3021
    %v3382 = vpack.c.b16 %v3026, %v3022
    %v3383 = vpack.c.b16 %v3027, %v3023
    %v3384 = vpack.c.b16 %v3032, %v3028
    %v3385 = vpack.c.b16 %v3033, %v3029
    %v3386 = vpack.c.b16 %v3034, %v3030
    %v3387 = vpack.c.b16 %v3035, %v3031
    %v3388 = vpack.c.b16 %v3040, %v3036
    %v3389 = vpack.c.b16 %v3041, %v3037
    %v3390 = vpack.c.b16 %v3042, %v3038
    %v3391 = vpack.c.b16 %v3043, %v3039
    %v3392 = vpack.c.b16 %v3048, %v3044
    %v3393 = vpack.c.b16 %v3049, %v3045
    %v3394 = vpack.c.b16 %v3050, %v3046
    %v3395 = vpack.c.b16 %v3051, %v3047
    %v3396 = vpack.c.b16 %v3056, %v3052
    %v3397 = vpack.c.b16 %v3057, %v3053
    %v3398 = vpack.c.b16 %v3058, %v3054
    %v3399 = vpack.c.b16 %v3059, %v3055
    %v3400 = vpack.c.b16 %v3064, %v3060
    %v3401 = vpack.c.b16 %v3065, %v3061
    %v3402 = vpack.c.b16 %v3066, %v3062
    %v3403 = vpack.c.b16 %v3067, %v3063
    %v3404 = vpack.c.b16 %v3072, %v3068
    %v3405 = vpack.c.b16 %v3073, %v3069
    %v3406 = vpack.c.b16 %v3074, %v3070
    %v3407 = vpack.c.b16 %v3075, %v3071
    %v3408 = vpack.c.b16 %v3080, %v3076
    %v3409 = vpack.c.b16 %v3081, %v3077
    %v3410 = vpack.c.b16 %v3082, %v3078
    %v3411 = vpack.c.b16 %v3083, %v3079
    %v3412 = vpack.c.b16 %v3088, %v3084
    %v3413 = vpack.c.b16 %v3089, %v3085
    %v3414 = vpack.c.b16 %v3090, %v3086
    %v3415 = vpack.c.b16 %v3091, %v3087
    %v3416 = vpack.c.b16 %v3096, %v3092
    %v3417 = vpack.c.b16 %v3097, %v3093
    %v3418 = vpack.c.b16 %v3098, %v3094
    %v3419 = vpack.c.b16 %v3099, %v3095
    %v3420 = vpack.c.b16 %v3104, %v3100
    %v3421 = vpack.c.b16 %v3105, %v3101
    %v3422 = vpack.c.b16 %v3106, %v3102
    %v3423 = vpack.c.b16 %v3107, %v3103
    %v3424 = vpack.c.b16 %v3112, %v3108
    %v3425 = vpack.c.b16 %v3113, %v3109
    %v3426 = vpack.c.b16 %v3114, %v3110
    %v3427 = vpack.c.b16 %v3115, %v3111
    %v3428 = vpack.c.b16 %v3120, %v3116
    %v3429 = vpack.c.b16 %v3121, %v3117
    %v3430 = vpack.c.b16 %v3122, %v3118
    %v3431 = vpack.c.b16 %v3123, %v3119
    %v3432 = vpack.c.b16 %v3128, %v3124
    %v3433 = vpack.c.b16 %v3129, %v3125
    %v3434 = vpack.c.b16 %v3130, %v3126
    %v3435 = vpack.c.b16 %v3131, %v3127
    %v3436 = vpack.c.b16 %v3136, %v3132
    %v3437 = vpack.c.b16 %v3137, %v3133
    %v3438 = vpack.c.b16 %v3138, %v3134
    %v3439 = vpack.c.b16 %v3139, %v3135
    %v3440 = vpack.c.b16 %v3144, %v3140
    %v3441 = vpack.c.b16 %v3145, %v3141
    %v3442 = vpack.c.b16 %v3146, %v3142
    %v3443 = vpack.c.b16 %v3147, %v3143
    %v3444 = vpack.c.b16 %v3152, %v3148
    %v3445 = vpack.c.b16 %v3153, %v3149
    %v3446 = vpack.c.b16 %v3154, %v3150
    %v3447 = vpack.c.b16 %v3155, %v3151
    %v3448 = vpack.c.b16 %v3160, %v3156
    %v3449 = vpack.c.b16 %v3161, %v3157
    %v3450 = vpack.c.b16 %v3162, %v3158
    %v3451 = vpack.c.b16 %v3163, %v3159
    %v3452 = vpack.c.b16 %v3168, %v3164
    %v3453 = vpack.c.b16 %v3169, %v3165
    %v3454 = vpack.c.b16 %v3170, %v3166
    %v3455 = vpack.c.b16 %v3171, %v3167
    %v3456 = vpack.c.b16 %v3176, %v3172
    %v3457 = vpack.c.b16 %v3177, %v3173
    %v3458 = vpack.c.b16 %v3178, %v3174
    %v3459 = vpack.c.b16 %v3179, %v3175
    %v3460 = vpack.c.b16 %v3184, %v3180
    %v3461 = vpack.c.b16 %v3185, %v3181
    %v3462 = vpack.c.b16 %v3186, %v3182
    %v3463 = vpack.c.b16 %v3187, %v3183
    %v3464 = vpack.c.b16 %v3192, %v3188
    %v3465 = vpack.c.b16 %v3193, %v3189
    %v3466 = vpack.c.b16 %v3194, %v3190
    %v3467 = vpack.c.b16 %v3195, %v3191
    %v3468 = vpack.c.b16 %v3200, %v3196
    %v3469 = vpack.c.b16 %v3201, %v3197
    %v3470 = vpack.c.b16 %v3202, %v3198
    %v3471 = vpack.c.b16 %v3203, %v3199
    %v3472 = vpack.c.b16 %v3208, %v3204
    %v3473 = vpack.c.b16 %v3209, %v3205
    %v3474 = vpack.c.b16 %v3210, %v3206
    %v3475 = vpack.c.b16 %v3211, %v3207
    %v3476 = vpack.c.b16 %v3216, %v3212
    %v3477 = vpack.c.b16 %v3217, %v3213
    %v3478 = vpack.c.b16 %v3218, %v3214
    %v3479 = vpack.c.b16 %v3219, %v3215
    %v3480 = vpack.c.b16 %v3224, %v3220
    %v3481 = vpack.c.b16 %v3225, %v3221
    %v3482 = vpack.c.b16 %v3226, %v3222
    %v3483 = vpack.c.b16 %v3227, %v3223
    %3740 = vmatprep.subr.bf16.mxu0 %v3257
    %3741 = vmatpush1.bf16.msra.mxu0 %v3256
    %3742 = vmatprep.subr.bf16.mxu0 %v3253
    %3743 = vmatpush1.bf16.msra.mxu0 %v3252
    %3744 = vmatprep.subr.bf16.mxu0 %v3249
    %3745 = vmatpush1.bf16.msra.mxu0 %v3248
    %3746 = vmatprep.subr.bf16.mxu0 %v3245
    %3747 = vmatpush1.bf16.msra.mxu0 %v3244
    %3748 = vmatprep.subr.bf16.mxu0 %v3241
    %3749 = vmatpush1.bf16.msra.mxu0 %v3240
    %3750 = vmatprep.subr.bf16.mxu0 %v3237
    %3751 = vmatpush1.bf16.msra.mxu0 %v3236
    %3752 = vmatprep.subr.bf16.mxu0 %v3233
    %3753 = vmatpush1.bf16.msra.mxu0 %v3232
    %3754 = vmatprep.subr.bf16.mxu0 %v3229
    %3755 = vmatpush1.bf16.msra.mxu0 %v3228
    %3756 = vmatprep.subr.bf16.mxu0 %v3289
    %3757 = vmatpush2.bf16.msra.mxu0 %v3288
    %3758 = vmatprep.subr.bf16.mxu0 %v3285
    %3759 = vmatpush2.bf16.msra.mxu0 %v3284
    %3760 = vmatprep.subr.bf16.mxu0 %v3281
    %3761 = vmatpush2.bf16.msra.mxu0 %v3280
    %3762 = vmatprep.subr.bf16.mxu0 %v3277
    %3763 = vmatpush2.bf16.msra.mxu0 %v3276
    %3764 = vmatprep.subr.bf16.mxu0 %v3273
    %3765 = vmatpush2.bf16.msra.mxu0 %v3272
    %3766 = vmatprep.subr.bf16.mxu0 %v3269
    %3767 = vmatpush2.bf16.msra.mxu0 %v3268
    %3768 = vmatprep.subr.bf16.mxu0 %v3265
    %3769 = vmatpush2.bf16.msra.mxu0 %v3264
    %3770 = vmatprep.subr.bf16.mxu0 %v3261
    %3771 = vmatpush2.bf16.msra.mxu0 %v3260
    %3772 = vmatprep.mubr.bf16.mxu0 %v2445
    %3773 = vmatmul.mubr.bf16.gmra.mxu0 %v2444
    %v3774 = vpop.f32.mrf.mxu0
    %v3775 = vadd.f32 %v2236, %v3774
    %v3776 = vpop.f32.mrf.mxu0
    %v3777 = vadd.f32 %v2240, %v3776
    %v3778 = vpop.f32.mrf.mxu0
    %v3779 = vpop.f32.mrf.mxu0
    %3780 = vdwg.mxu0
    %3781 = vmatprep.subr.bf16.mxu0 %v3321
    %3782 = vmatpush1.bf16.msra.mxu0 %v3320
    %3783 = vmatprep.subr.bf16.mxu0 %v3317
    %3784 = vmatpush1.bf16.msra.mxu0 %v3316
    %3785 = vmatprep.subr.bf16.mxu0 %v3313
    %3786 = vmatpush1.bf16.msra.mxu0 %v3312
    %3787 = vmatprep.subr.bf16.mxu0 %v3309
    %3788 = vmatpush1.bf16.msra.mxu0 %v3308
    %3789 = vmatprep.subr.bf16.mxu0 %v3305
    %3790 = vmatpush1.bf16.msra.mxu0 %v3304
    %3791 = vmatprep.subr.bf16.mxu0 %v3301
    %3792 = vmatpush1.bf16.msra.mxu0 %v3300
    %3793 = vmatprep.subr.bf16.mxu0 %v3297
    %3794 = vmatpush1.bf16.msra.mxu0 %v3296
    %3795 = vmatprep.subr.bf16.mxu0 %v3293
    %3796 = vmatpush1.bf16.msra.mxu0 %v3292
    %3797 = vmatprep.subr.bf16.mxu0 %v3353
    %3798 = vmatpush2.bf16.msra.mxu0 %v3352
    %3799 = vmatprep.subr.bf16.mxu0 %v3349
    %3800 = vmatpush2.bf16.msra.mxu0 %v3348
    %3801 = vmatprep.subr.bf16.mxu0 %v3345
    %3802 = vmatpush2.bf16.msra.mxu0 %v3344
    %3803 = vmatprep.subr.bf16.mxu0 %v3341
    %3804 = vmatpush2.bf16.msra.mxu0 %v3340
    %3805 = vmatprep.subr.bf16.mxu0 %v3337
    %3806 = vmatpush2.bf16.msra.mxu0 %v3336
    %3807 = vmatprep.subr.bf16.mxu0 %v3333
    %3808 = vmatpush2.bf16.msra.mxu0 %v3332
    %3809 = vmatprep.subr.bf16.mxu0 %v3329
    %3810 = vmatpush2.bf16.msra.mxu0 %v3328
    %3811 = vmatprep.subr.bf16.mxu0 %v3325
    %3812 = vmatpush2.bf16.msra.mxu0 %v3324
    %3813 = vmatprep.mubr.bf16.mxu0 %v2447
    %3814 = vmatmul.mubr.bf16.gmra.mxu0 %v2446
    %v3815 = vpop.f32.mrf.mxu0
    %v3816 = vadd.f32 %v3775, %v3815
    %v3817 = vpop.f32.mrf.mxu0
    %v3818 = vadd.f32 %v3777, %v3817
    %v3819 = vpop.f32.mrf.mxu0
    %v3820 = vpop.f32.mrf.mxu0
    %3821 = vdwg.mxu0
    %3822 = vmatprep.subr.bf16.mxu0 %v3385
    %3823 = vmatpush1.bf16.msra.mxu0 %v3384
    %3824 = vmatprep.subr.bf16.mxu0 %v3381
    %3825 = vmatpush1.bf16.msra.mxu0 %v3380
    %3826 = vmatprep.subr.bf16.mxu0 %v3377
    %3827 = vmatpush1.bf16.msra.mxu0 %v3376
    %3828 = vmatprep.subr.bf16.mxu0 %v3373
    %3829 = vmatpush1.bf16.msra.mxu0 %v3372
    %3830 = vmatprep.subr.bf16.mxu0 %v3369
    %3831 = vmatpush1.bf16.msra.mxu0 %v3368
    %3832 = vmatprep.subr.bf16.mxu0 %v3365
    %3833 = vmatpush1.bf16.msra.mxu0 %v3364
    %3834 = vmatprep.subr.bf16.mxu0 %v3361
    %3835 = vmatpush1.bf16.msra.mxu0 %v3360
    %3836 = vmatprep.subr.bf16.mxu0 %v3357
    %3837 = vmatpush1.bf16.msra.mxu0 %v3356
    %3838 = vmatprep.subr.bf16.mxu0 %v3417
    %3839 = vmatpush2.bf16.msra.mxu0 %v3416
    %3840 = vmatprep.subr.bf16.mxu0 %v3413
    %3841 = vmatpush2.bf16.msra.mxu0 %v3412
    %3842 = vmatprep.subr.bf16.mxu0 %v3409
    %3843 = vmatpush2.bf16.msra.mxu0 %v3408
    %3844 = vmatprep.subr.bf16.mxu0 %v3405
    %3845 = vmatpush2.bf16.msra.mxu0 %v3404
    %3846 = vmatprep.subr.bf16.mxu0 %v3401
    %3847 = vmatpush2.bf16.msra.mxu0 %v3400
    %3848 = vmatprep.subr.bf16.mxu0 %v3397
    %3849 = vmatpush2.bf16.msra.mxu0 %v3396
    %3850 = vmatprep.subr.bf16.mxu0 %v3393
    %3851 = vmatpush2.bf16.msra.mxu0 %v3392
    %3852 = vmatprep.subr.bf16.mxu0 %v3389
    %3853 = vmatpush2.bf16.msra.mxu0 %v3388
    %3854 = vmatprep.mubr.bf16.mxu0 %v2449
    %3855 = vmatmul.mubr.bf16.gmra.mxu0 %v2448
    %v3856 = vpop.f32.mrf.mxu0
    %v3857 = vadd.f32 %v3816, %v3856
    %v3858 = vpop.f32.mrf.mxu0
    %v3859 = vadd.f32 %v3818, %v3858
    %v3860 = vpop.f32.mrf.mxu0
    %v3861 = vpop.f32.mrf.mxu0
    %3862 = vdwg.mxu0
    %3863 = vmatprep.subr.bf16.mxu0 %v3449
    %3864 = vmatpush1.bf16.msra.mxu0 %v3448
    %3865 = vmatprep.subr.bf16.mxu0 %v3445
    %3866 = vmatpush1.bf16.msra.mxu0 %v3444
    %3867 = vmatprep.subr.bf16.mxu0 %v3441
    %3868 = vmatpush1.bf16.msra.mxu0 %v3440
    %3869 = vmatprep.subr.bf16.mxu0 %v3437
    %3870 = vmatpush1.bf16.msra.mxu0 %v3436
    %3871 = vmatprep.subr.bf16.mxu0 %v3433
    %3872 = vmatpush1.bf16.msra.mxu0 %v3432
    %3873 = vmatprep.subr.bf16.mxu0 %v3429
    %3874 = vmatpush1.bf16.msra.mxu0 %v3428
    %3875 = vmatprep.subr.bf16.mxu0 %v3425
    %3876 = vmatpush1.bf16.msra.mxu0 %v3424
    %3877 = vmatprep.subr.bf16.mxu0 %v3421
    %3878 = vmatpush1.bf16.msra.mxu0 %v3420
    %3879 = vmatprep.subr.bf16.mxu0 %v3481
    %3880 = vmatpush2.bf16.msra.mxu0 %v3480
    %3881 = vmatprep.subr.bf16.mxu0 %v3477
    %3882 = vmatpush2.bf16.msra.mxu0 %v3476
    %3883 = vmatprep.subr.bf16.mxu0 %v3473
    %3884 = vmatpush2.bf16.msra.mxu0 %v3472
    %3885 = vmatprep.subr.bf16.mxu0 %v3469
    %3886 = vmatpush2.bf16.msra.mxu0 %v3468
    %3887 = vmatprep.subr.bf16.mxu0 %v3465
    %3888 = vmatpush2.bf16.msra.mxu0 %v3464
    %3889 = vmatprep.subr.bf16.mxu0 %v3461
    %3890 = vmatpush2.bf16.msra.mxu0 %v3460
    %3891 = vmatprep.subr.bf16.mxu0 %v3457
    %3892 = vmatpush2.bf16.msra.mxu0 %v3456
    %3893 = vmatprep.subr.bf16.mxu0 %v3453
    %3894 = vmatpush2.bf16.msra.mxu0 %v3452
    %3895 = vmatprep.mubr.bf16.mxu0 %v2451
    %3896 = vmatmul.mubr.bf16.gmra.mxu0 %v2450
    %v3897 = vpop.f32.mrf.mxu0
    %v3898 = vadd.f32 %v3857, %v3897
    %v3899 = vpop.f32.mrf.mxu0
    %v3900 = vadd.f32 %v3859, %v3899
    %v3901 = vpop.f32.mrf.mxu0
    %v3902 = vpop.f32.mrf.mxu0
    %3903 = vdwg.mxu0
    %3904 = vmatprep.subr.bf16.mxu0 %v3259
    %3905 = vmatpush1.bf16.msra.mxu0 %v3258
    %3906 = vmatprep.subr.bf16.mxu0 %v3255
    %3907 = vmatpush1.bf16.msra.mxu0 %v3254
    %3908 = vmatprep.subr.bf16.mxu0 %v3251
    %3909 = vmatpush1.bf16.msra.mxu0 %v3250
    %3910 = vmatprep.subr.bf16.mxu0 %v3247
    %3911 = vmatpush1.bf16.msra.mxu0 %v3246
    %3912 = vmatprep.subr.bf16.mxu0 %v3243
    %3913 = vmatpush1.bf16.msra.mxu0 %v3242
    %3914 = vmatprep.subr.bf16.mxu0 %v3239
    %3915 = vmatpush1.bf16.msra.mxu0 %v3238
    %3916 = vmatprep.subr.bf16.mxu0 %v3235
    %3917 = vmatpush1.bf16.msra.mxu0 %v3234
    %3918 = vmatprep.subr.bf16.mxu0 %v3231
    %3919 = vmatpush1.bf16.msra.mxu0 %v3230
    %3920 = vmatprep.subr.bf16.mxu0 %v3291
    %3921 = vmatpush2.bf16.msra.mxu0 %v3290
    %3922 = vmatprep.subr.bf16.mxu0 %v3287
    %3923 = vmatpush2.bf16.msra.mxu0 %v3286
    %3924 = vmatprep.subr.bf16.mxu0 %v3283
    %3925 = vmatpush2.bf16.msra.mxu0 %v3282
    %3926 = vmatprep.subr.bf16.mxu0 %v3279
    %3927 = vmatpush2.bf16.msra.mxu0 %v3278
    %3928 = vmatprep.subr.bf16.mxu0 %v3275
    %3929 = vmatpush2.bf16.msra.mxu0 %v3274
    %3930 = vmatprep.subr.bf16.mxu0 %v3271
    %3931 = vmatpush2.bf16.msra.mxu0 %v3270
    %3932 = vmatprep.subr.bf16.mxu0 %v3267
    %3933 = vmatpush2.bf16.msra.mxu0 %v3266
    %3934 = vmatprep.subr.bf16.mxu0 %v3263
    %3935 = vmatpush2.bf16.msra.mxu0 %v3262
    %3936 = vmatprep.mubr.bf16.mxu0 %v2445
    %3937 = vmatmul.mubr.bf16.gmra.mxu0 %v2444
    %v3938 = vpop.f32.mrf.mxu0
    %v3939 = vadd.f32 %v2244, %v3938
    %v3940 = vpop.f32.mrf.mxu0
    %v3941 = vadd.f32 %v2248, %v3940
    %v3942 = vpop.f32.mrf.mxu0
    %v3943 = vpop.f32.mrf.mxu0
    %3944 = vdwg.mxu0
    %3945 = vmatprep.subr.bf16.mxu0 %v3323
    %3946 = vmatpush1.bf16.msra.mxu0 %v3322
    %3947 = vmatprep.subr.bf16.mxu0 %v3319
    %3948 = vmatpush1.bf16.msra.mxu0 %v3318
    %3949 = vmatprep.subr.bf16.mxu0 %v3315
    %3950 = vmatpush1.bf16.msra.mxu0 %v3314
    %3951 = vmatprep.subr.bf16.mxu0 %v3311
    %3952 = vmatpush1.bf16.msra.mxu0 %v3310
    %3953 = vmatprep.subr.bf16.mxu0 %v3307
    %3954 = vmatpush1.bf16.msra.mxu0 %v3306
    %3955 = vmatprep.subr.bf16.mxu0 %v3303
    %3956 = vmatpush1.bf16.msra.mxu0 %v3302
    %3957 = vmatprep.subr.bf16.mxu0 %v3299
    %3958 = vmatpush1.bf16.msra.mxu0 %v3298
    %3959 = vmatprep.subr.bf16.mxu0 %v3295
    %3960 = vmatpush1.bf16.msra.mxu0 %v3294
    %3961 = vmatprep.subr.bf16.mxu0 %v3355
    %3962 = vmatpush2.bf16.msra.mxu0 %v3354
    %3963 = vmatprep.subr.bf16.mxu0 %v3351
    %3964 = vmatpush2.bf16.msra.mxu0 %v3350
    %3965 = vmatprep.subr.bf16.mxu0 %v3347
    %3966 = vmatpush2.bf16.msra.mxu0 %v3346
    %3967 = vmatprep.subr.bf16.mxu0 %v3343
    %3968 = vmatpush2.bf16.msra.mxu0 %v3342
    %3969 = vmatprep.subr.bf16.mxu0 %v3339
    %3970 = vmatpush2.bf16.msra.mxu0 %v3338
    %3971 = vmatprep.subr.bf16.mxu0 %v3335
    %3972 = vmatpush2.bf16.msra.mxu0 %v3334
    %3973 = vmatprep.subr.bf16.mxu0 %v3331
    %3974 = vmatpush2.bf16.msra.mxu0 %v3330
    %3975 = vmatprep.subr.bf16.mxu0 %v3327
    %3976 = vmatpush2.bf16.msra.mxu0 %v3326
    %3977 = vmatprep.mubr.bf16.mxu0 %v2447
    %3978 = vmatmul.mubr.bf16.gmra.mxu0 %v2446
    %v3979 = vpop.f32.mrf.mxu0
    %v3980 = vadd.f32 %v3939, %v3979
    %v3981 = vpop.f32.mrf.mxu0
    %v3982 = vadd.f32 %v3941, %v3981
    %v3983 = vpop.f32.mrf.mxu0
    %v3984 = vpop.f32.mrf.mxu0
    %3985 = vdwg.mxu0
    %3986 = vmatprep.subr.bf16.mxu0 %v3387
    %3987 = vmatpush1.bf16.msra.mxu0 %v3386
    %3988 = vmatprep.subr.bf16.mxu0 %v3383
    %3989 = vmatpush1.bf16.msra.mxu0 %v3382
    %3990 = vmatprep.subr.bf16.mxu0 %v3379
    %3991 = vmatpush1.bf16.msra.mxu0 %v3378
    %3992 = vmatprep.subr.bf16.mxu0 %v3375
    %3993 = vmatpush1.bf16.msra.mxu0 %v3374
    %3994 = vmatprep.subr.bf16.mxu0 %v3371
    %3995 = vmatpush1.bf16.msra.mxu0 %v3370
    %3996 = vmatprep.subr.bf16.mxu0 %v3367
    %3997 = vmatpush1.bf16.msra.mxu0 %v3366
    %3998 = vmatprep.subr.bf16.mxu0 %v3363
    %3999 = vmatpush1.bf16.msra.mxu0 %v3362
    %4000 = vmatprep.subr.bf16.mxu0 %v3359
    %4001 = vmatpush1.bf16.msra.mxu0 %v3358
    %4002 = vmatprep.subr.bf16.mxu0 %v3419
    %4003 = vmatpush2.bf16.msra.mxu0 %v3418
    %4004 = vmatprep.subr.bf16.mxu0 %v3415
    %4005 = vmatpush2.bf16.msra.mxu0 %v3414
    %4006 = vmatprep.subr.bf16.mxu0 %v3411
    %4007 = vmatpush2.bf16.msra.mxu0 %v3410
    %4008 = vmatprep.subr.bf16.mxu0 %v3407
    %4009 = vmatpush2.bf16.msra.mxu0 %v3406
    %4010 = vmatprep.subr.bf16.mxu0 %v3403
    %4011 = vmatpush2.bf16.msra.mxu0 %v3402
    %4012 = vmatprep.subr.bf16.mxu0 %v3399
    %4013 = vmatpush2.bf16.msra.mxu0 %v3398
    %4014 = vmatprep.subr.bf16.mxu0 %v3395
    %4015 = vmatpush2.bf16.msra.mxu0 %v3394
    %4016 = vmatprep.subr.bf16.mxu0 %v3391
    %4017 = vmatpush2.bf16.msra.mxu0 %v3390
    %4018 = vmatprep.mubr.bf16.mxu0 %v2449
    %4019 = vmatmul.mubr.bf16.gmra.mxu0 %v2448
    %v4020 = vpop.f32.mrf.mxu0
    %v4021 = vadd.f32 %v3980, %v4020
    %v4022 = vpop.f32.mrf.mxu0
    %v4023 = vadd.f32 %v3982, %v4022
    %v4024 = vpop.f32.mrf.mxu0
    %v4025 = vpop.f32.mrf.mxu0
    %4026 = vdwg.mxu0
    %4027 = vmatprep.subr.bf16.mxu0 %v3451
    %4028 = vmatpush1.bf16.msra.mxu0 %v3450
    %4029 = vmatprep.subr.bf16.mxu0 %v3447
    %4030 = vmatpush1.bf16.msra.mxu0 %v3446
    %4031 = vmatprep.subr.bf16.mxu0 %v3443
    %4032 = vmatpush1.bf16.msra.mxu0 %v3442
    %4033 = vmatprep.subr.bf16.mxu0 %v3439
    %4034 = vmatpush1.bf16.msra.mxu0 %v3438
    %4035 = vmatprep.subr.bf16.mxu0 %v3435
    %4036 = vmatpush1.bf16.msra.mxu0 %v3434
    %4037 = vmatprep.subr.bf16.mxu0 %v3431
    %4038 = vmatpush1.bf16.msra.mxu0 %v3430
    %4039 = vmatprep.subr.bf16.mxu0 %v3427
    %4040 = vmatpush1.bf16.msra.mxu0 %v3426
    %4041 = vmatprep.subr.bf16.mxu0 %v3423
    %4042 = vmatpush1.bf16.msra.mxu0 %v3422
    %4043 = vmatprep.subr.bf16.mxu0 %v3483
    %4044 = vmatpush2.bf16.msra.mxu0 %v3482
    %4045 = vmatprep.subr.bf16.mxu0 %v3479
    %4046 = vmatpush2.bf16.msra.mxu0 %v3478
    %4047 = vmatprep.subr.bf16.mxu0 %v3475
    %4048 = vmatpush2.bf16.msra.mxu0 %v3474
    %4049 = vmatprep.subr.bf16.mxu0 %v3471
    %4050 = vmatpush2.bf16.msra.mxu0 %v3470
    %4051 = vmatprep.subr.bf16.mxu0 %v3467
    %4052 = vmatpush2.bf16.msra.mxu0 %v3466
    %4053 = vmatprep.subr.bf16.mxu0 %v3463
    %4054 = vmatpush2.bf16.msra.mxu0 %v3462
    %4055 = vmatprep.subr.bf16.mxu0 %v3459
    %4056 = vmatpush2.bf16.msra.mxu0 %v3458
    %4057 = vmatprep.subr.bf16.mxu0 %v3455
    %4058 = vmatpush2.bf16.msra.mxu0 %v3454
    %4059 = vmatprep.mubr.bf16.mxu0 %v2451
    %4060 = vmatmul.mubr.bf16.gmra.mxu0 %v2450
    %v4061 = vpop.f32.mrf.mxu0
    %v4062 = vadd.f32 %v4021, %v4061
    %v4063 = vpop.f32.mrf.mxu0
    %v4064 = vadd.f32 %v4023, %v4063
    %v4065 = vpop.f32.mrf.mxu0
    %v4066 = vpop.f32.mrf.mxu0
    %4067 = vdwg.mxu0
    %v4068 = vmax.f32 %v3898, 0.0
    %v4069 = vmax.f32 %v3900, 0.0
    %v4070 = vmax.f32 %v4062, 0.0
    %v4071 = vmax.f32 %v4064, 0.0
    %v4072 = vpack.c.bf16 %v4068, %v4068
    %v4073 = vpack.c.bf16 %v4069, %v4069
    %v4074 = vpack.c.bf16 %v4070, %v4070
    %v4075 = vpack.c.bf16 %v4071, %v4071
    %v4076 = vld [vmem:[#allocation7] sm:$0xff]
    %v4077 = vld [vmem:[#allocation7 + $0x8] sm:$0xff]
    %v4078 = vld [vmem:[#allocation7 + $0x10] sm:$0xff]
    %v4079 = vld [vmem:[#allocation7 + $0x18] sm:$0xff]
    %v4080 = vld [vmem:[#allocation7 + $0x20] sm:$0xff]
    %v4081 = vld [vmem:[#allocation7 + $0x28] sm:$0xff]
    %v4082 = vld [vmem:[#allocation7 + $0x30] sm:$0xff]
    %v4083 = vld [vmem:[#allocation7 + $0x38] sm:$0xff]
    %v4084 = vld [vmem:[#allocation7 + $0x40] sm:$0xff]
    %v4085 = vld [vmem:[#allocation7 + $0x48] sm:$0xff]
    %v4086 = vld [vmem:[#allocation7 + $0x50] sm:$0xff]
    %v4087 = vld [vmem:[#allocation7 + $0x58] sm:$0xff]
    %v4088 = vld [vmem:[#allocation7 + $0x60] sm:$0xff]
    %v4089 = vld [vmem:[#allocation7 + $0x68] sm:$0xff]
    %v4090 = vld [vmem:[#allocation7 + $0x70] sm:$0xff]
    %v4091 = vld [vmem:[#allocation7 + $0x78] sm:$0xff]
    %v4092 = vld [vmem:[#allocation7 + $0x80] sm:$0xff]
    %v4093 = vld [vmem:[#allocation7 + $0x88] sm:$0xff]
    %v4094 = vld [vmem:[#allocation7 + $0x90] sm:$0xff]
    %v4095 = vld [vmem:[#allocation7 + $0x98] sm:$0xff]
    %v4096 = vld [vmem:[#allocation7 + $0xa0] sm:$0xff]
    %v4097 = vld [vmem:[#allocation7 + $0xa8] sm:$0xff]
    %v4098 = vld [vmem:[#allocation7 + $0xb0] sm:$0xff]
    %v4099 = vld [vmem:[#allocation7 + $0xb8] sm:$0xff]
    %v4100 = vld [vmem:[#allocation7 + $0xc0] sm:$0xff]
    %v4101 = vld [vmem:[#allocation7 + $0xc8] sm:$0xff]
    %v4102 = vld [vmem:[#allocation7 + $0xd0] sm:$0xff]
    %v4103 = vld [vmem:[#allocation7 + $0xd8] sm:$0xff]
    %v4104 = vld [vmem:[#allocation7 + $0xe0] sm:$0xff]
    %v4105 = vld [vmem:[#allocation7 + $0xe8] sm:$0xff]
    %v4106 = vld [vmem:[#allocation7 + $0xf0] sm:$0xff]
    %v4107 = vld [vmem:[#allocation7 + $0xf8] sm:$0xff]
    %v4108 = vld [vmem:[#allocation7 + $0x100] sm:$0xff]
    %v4109 = vld [vmem:[#allocation7 + $0x108] sm:$0xff]
    %v4110 = vld [vmem:[#allocation7 + $0x110] sm:$0xff]
    %v4111 = vld [vmem:[#allocation7 + $0x118] sm:$0xff]
    %v4112 = vld [vmem:[#allocation7 + $0x120] sm:$0xff]
    %v4113 = vld [vmem:[#allocation7 + $0x128] sm:$0xff]
    %v4114 = vld [vmem:[#allocation7 + $0x130] sm:$0xff]
    %v4115 = vld [vmem:[#allocation7 + $0x138] sm:$0xff]
    %v4116 = vld [vmem:[#allocation7 + $0x140] sm:$0xff]
    %v4117 = vld [vmem:[#allocation7 + $0x148] sm:$0xff]
    %v4118 = vld [vmem:[#allocation7 + $0x150] sm:$0xff]
    %v4119 = vld [vmem:[#allocation7 + $0x158] sm:$0xff]
    %v4120 = vld [vmem:[#allocation7 + $0x160] sm:$0xff]
    %v4121 = vld [vmem:[#allocation7 + $0x168] sm:$0xff]
    %v4122 = vld [vmem:[#allocation7 + $0x170] sm:$0xff]
    %v4123 = vld [vmem:[#allocation7 + $0x178] sm:$0xff]
    %v4124 = vld [vmem:[#allocation7 + $0x180] sm:$0xff]
    %v4125 = vld [vmem:[#allocation7 + $0x188] sm:$0xff]
    %v4126 = vld [vmem:[#allocation7 + $0x190] sm:$0xff]
    %v4127 = vld [vmem:[#allocation7 + $0x198] sm:$0xff]
    %v4128 = vld [vmem:[#allocation7 + $0x1a0] sm:$0xff]
    %v4129 = vld [vmem:[#allocation7 + $0x1a8] sm:$0xff]
    %v4130 = vld [vmem:[#allocation7 + $0x1b0] sm:$0xff]
    %v4131 = vld [vmem:[#allocation7 + $0x1b8] sm:$0xff]
    %v4132 = vld [vmem:[#allocation7 + $0x1c0] sm:$0xff]
    %v4133 = vld [vmem:[#allocation7 + $0x1c8] sm:$0xff]
    %v4134 = vld [vmem:[#allocation7 + $0x1d0] sm:$0xff]
    %v4135 = vld [vmem:[#allocation7 + $0x1d8] sm:$0xff]
    %v4136 = vld [vmem:[#allocation7 + $0x1e0] sm:$0xff]
    %v4137 = vld [vmem:[#allocation7 + $0x1e8] sm:$0xff]
    %v4138 = vld [vmem:[#allocation7 + $0x1f0] sm:$0xff]
    %v4139 = vld [vmem:[#allocation7 + $0x1f8] sm:$0xff]
    %v4140 = vld [vmem:[%s10] sm:$0x3]
    %v4142 = vlaneseq
    %v4143 = vshrl.u32 %v4142, 7
    %v4144 = vsub.s32 0, %v4143
    %v4145 = vrot.slane %v4140, %v4144
    %v4146 = vlaneseq
    %v4147 = vshrl.u32 %v4146, 7
    %v4148 = vsub.s32 1, %v4147
    %v4149 = vrot.slane %v4140, %v4148
    %v4216 = vunpack.c.l.b16 %v4076
    %v4217 = vunpack.c.h.b16 %v4076
    %v4218 = vunpack.c.l.b16 %v4077
    %v4219 = vunpack.c.h.b16 %v4077
    %v4220 = vunpack.c.l.b16 %v4078
    %v4221 = vunpack.c.h.b16 %v4078
    %v4222 = vunpack.c.l.b16 %v4079
    %v4223 = vunpack.c.h.b16 %v4079
    %v4224 = vunpack.c.l.b16 %v4080
    %v4225 = vunpack.c.h.b16 %v4080
    %v4226 = vunpack.c.l.b16 %v4081
    %v4227 = vunpack.c.h.b16 %v4081
    %v4228 = vunpack.c.l.b16 %v4082
    %v4229 = vunpack.c.h.b16 %v4082
    %v4230 = vunpack.c.l.b16 %v4083
    %v4231 = vunpack.c.h.b16 %v4083
    %v4232 = vunpack.c.l.b16 %v4084
    %v4233 = vunpack.c.h.b16 %v4084
    %v4234 = vunpack.c.l.b16 %v4085
    %v4235 = vunpack.c.h.b16 %v4085
    %v4236 = vunpack.c.l.b16 %v4086
    %v4237 = vunpack.c.h.b16 %v4086
    %v4238 = vunpack.c.l.b16 %v4087
    %v4239 = vunpack.c.h.b16 %v4087
    %v4240 = vunpack.c.l.b16 %v4088
    %v4241 = vunpack.c.h.b16 %v4088
    %v4242 = vunpack.c.l.b16 %v4089
    %v4243 = vunpack.c.h.b16 %v4089
    %v4244 = vunpack.c.l.b16 %v4090
    %v4245 = vunpack.c.h.b16 %v4090
    %v4246 = vunpack.c.l.b16 %v4091
    %v4247 = vunpack.c.h.b16 %v4091
    %v4248 = vunpack.c.l.b16 %v4092
    %v4249 = vunpack.c.h.b16 %v4092
    %v4250 = vunpack.c.l.b16 %v4093
    %v4251 = vunpack.c.h.b16 %v4093
    %v4252 = vunpack.c.l.b16 %v4094
    %v4253 = vunpack.c.h.b16 %v4094
    %v4254 = vunpack.c.l.b16 %v4095
    %v4255 = vunpack.c.h.b16 %v4095
    %v4256 = vunpack.c.l.b16 %v4096
    %v4257 = vunpack.c.h.b16 %v4096
    %v4258 = vunpack.c.l.b16 %v4097
    %v4259 = vunpack.c.h.b16 %v4097
    %v4260 = vunpack.c.l.b16 %v4098
    %v4261 = vunpack.c.h.b16 %v4098
    %v4262 = vunpack.c.l.b16 %v4099
    %v4263 = vunpack.c.h.b16 %v4099
    %v4264 = vunpack.c.l.b16 %v4100
    %v4265 = vunpack.c.h.b16 %v4100
    %v4266 = vunpack.c.l.b16 %v4101
    %v4267 = vunpack.c.h.b16 %v4101
    %v4268 = vunpack.c.l.b16 %v4102
    %v4269 = vunpack.c.h.b16 %v4102
    %v4270 = vunpack.c.l.b16 %v4103
    %v4271 = vunpack.c.h.b16 %v4103
    %v4272 = vunpack.c.l.b16 %v4104
    %v4273 = vunpack.c.h.b16 %v4104
    %v4274 = vunpack.c.l.b16 %v4105
    %v4275 = vunpack.c.h.b16 %v4105
    %v4276 = vunpack.c.l.b16 %v4106
    %v4277 = vunpack.c.h.b16 %v4106
    %v4278 = vunpack.c.l.b16 %v4107
    %v4279 = vunpack.c.h.b16 %v4107
    %v4280 = vunpack.c.l.b16 %v4108
    %v4281 = vunpack.c.h.b16 %v4108
    %v4282 = vunpack.c.l.b16 %v4109
    %v4283 = vunpack.c.h.b16 %v4109
    %v4284 = vunpack.c.l.b16 %v4110
    %v4285 = vunpack.c.h.b16 %v4110
    %v4286 = vunpack.c.l.b16 %v4111
    %v4287 = vunpack.c.h.b16 %v4111
    %v4288 = vunpack.c.l.b16 %v4112
    %v4289 = vunpack.c.h.b16 %v4112
    %v4290 = vunpack.c.l.b16 %v4113
    %v4291 = vunpack.c.h.b16 %v4113
    %v4292 = vunpack.c.l.b16 %v4114
    %v4293 = vunpack.c.h.b16 %v4114
    %v4294 = vunpack.c.l.b16 %v4115
    %v4295 = vunpack.c.h.b16 %v4115
    %v4296 = vunpack.c.l.b16 %v4116
    %v4297 = vunpack.c.h.b16 %v4116
    %v4298 = vunpack.c.l.b16 %v4117
    %v4299 = vunpack.c.h.b16 %v4117
    %v4300 = vunpack.c.l.b16 %v4118
    %v4301 = vunpack.c.h.b16 %v4118
    %v4302 = vunpack.c.l.b16 %v4119
    %v4303 = vunpack.c.h.b16 %v4119
    %v4304 = vunpack.c.l.b16 %v4120
    %v4305 = vunpack.c.h.b16 %v4120
    %v4306 = vunpack.c.l.b16 %v4121
    %v4307 = vunpack.c.h.b16 %v4121
    %v4308 = vunpack.c.l.b16 %v4122
    %v4309 = vunpack.c.h.b16 %v4122
    %v4310 = vunpack.c.l.b16 %v4123
    %v4311 = vunpack.c.h.b16 %v4123
    %v4312 = vunpack.c.l.b16 %v4124
    %v4313 = vunpack.c.h.b16 %v4124
    %v4314 = vunpack.c.l.b16 %v4125
    %v4315 = vunpack.c.h.b16 %v4125
    %v4316 = vunpack.c.l.b16 %v4126
    %v4317 = vunpack.c.h.b16 %v4126
    %v4318 = vunpack.c.l.b16 %v4127
    %v4319 = vunpack.c.h.b16 %v4127
    %v4320 = vunpack.c.l.b16 %v4128
    %v4321 = vunpack.c.h.b16 %v4128
    %v4322 = vunpack.c.l.b16 %v4129
    %v4323 = vunpack.c.h.b16 %v4129
    %v4324 = vunpack.c.l.b16 %v4130
    %v4325 = vunpack.c.h.b16 %v4130
    %v4326 = vunpack.c.l.b16 %v4131
    %v4327 = vunpack.c.h.b16 %v4131
    %v4328 = vunpack.c.l.b16 %v4132
    %v4329 = vunpack.c.h.b16 %v4132
    %v4330 = vunpack.c.l.b16 %v4133
    %v4331 = vunpack.c.h.b16 %v4133
    %v4332 = vunpack.c.l.b16 %v4134
    %v4333 = vunpack.c.h.b16 %v4134
    %v4334 = vunpack.c.l.b16 %v4135
    %v4335 = vunpack.c.h.b16 %v4135
    %v4336 = vunpack.c.l.b16 %v4136
    %v4337 = vunpack.c.h.b16 %v4136
    %v4338 = vunpack.c.l.b16 %v4137
    %v4339 = vunpack.c.h.b16 %v4137
    %v4340 = vunpack.c.l.b16 %v4138
    %v4341 = vunpack.c.h.b16 %v4138
    %v4342 = vunpack.c.l.b16 %v4139
    %v4343 = vunpack.c.h.b16 %v4139
    %v4344 = vpack.c.b16 %v4218, %v4216
    %v4345 = vpack.c.b16 %v4219, %v4217
    %v4346 = vpack.c.b16 %v4222, %v4220
    %v4347 = vpack.c.b16 %v4223, %v4221
    %v4348 = vpack.c.b16 %v4226, %v4224
    %v4349 = vpack.c.b16 %v4227, %v4225
    %v4350 = vpack.c.b16 %v4230, %v4228
    %v4351 = vpack.c.b16 %v4231, %v4229
    %v4352 = vpack.c.b16 %v4234, %v4232
    %v4353 = vpack.c.b16 %v4235, %v4233
    %v4354 = vpack.c.b16 %v4238, %v4236
    %v4355 = vpack.c.b16 %v4239, %v4237
    %v4356 = vpack.c.b16 %v4242, %v4240
    %v4357 = vpack.c.b16 %v4243, %v4241
    %v4358 = vpack.c.b16 %v4246, %v4244
    %v4359 = vpack.c.b16 %v4247, %v4245
    %v4360 = vpack.c.b16 %v4250, %v4248
    %v4361 = vpack.c.b16 %v4251, %v4249
    %v4362 = vpack.c.b16 %v4254, %v4252
    %v4363 = vpack.c.b16 %v4255, %v4253
    %v4364 = vpack.c.b16 %v4258, %v4256
    %v4365 = vpack.c.b16 %v4259, %v4257
    %v4366 = vpack.c.b16 %v4262, %v4260
    %v4367 = vpack.c.b16 %v4263, %v4261
    %v4368 = vpack.c.b16 %v4266, %v4264
    %v4369 = vpack.c.b16 %v4267, %v4265
    %v4370 = vpack.c.b16 %v4270, %v4268
    %v4371 = vpack.c.b16 %v4271, %v4269
    %v4372 = vpack.c.b16 %v4274, %v4272
    %v4373 = vpack.c.b16 %v4275, %v4273
    %v4374 = vpack.c.b16 %v4278, %v4276
    %v4375 = vpack.c.b16 %v4279, %v4277
    %v4376 = vpack.c.b16 %v4282, %v4280
    %v4377 = vpack.c.b16 %v4283, %v4281
    %v4378 = vpack.c.b16 %v4286, %v4284
    %v4379 = vpack.c.b16 %v4287, %v4285
    %v4380 = vpack.c.b16 %v4290, %v4288
    %v4381 = vpack.c.b16 %v4291, %v4289
    %v4382 = vpack.c.b16 %v4294, %v4292
    %v4383 = vpack.c.b16 %v4295, %v4293
    %v4384 = vpack.c.b16 %v4298, %v4296
    %v4385 = vpack.c.b16 %v4299, %v4297
    %v4386 = vpack.c.b16 %v4302, %v4300
    %v4387 = vpack.c.b16 %v4303, %v4301
    %v4388 = vpack.c.b16 %v4306, %v4304
    %v4389 = vpack.c.b16 %v4307, %v4305
    %v4390 = vpack.c.b16 %v4310, %v4308
    %v4391 = vpack.c.b16 %v4311, %v4309
    %v4392 = vpack.c.b16 %v4314, %v4312
    %v4393 = vpack.c.b16 %v4315, %v4313
    %v4394 = vpack.c.b16 %v4318, %v4316
    %v4395 = vpack.c.b16 %v4319, %v4317
    %v4396 = vpack.c.b16 %v4322, %v4320
    %v4397 = vpack.c.b16 %v4323, %v4321
    %v4398 = vpack.c.b16 %v4326, %v4324
    %v4399 = vpack.c.b16 %v4327, %v4325
    %v4400 = vpack.c.b16 %v4330, %v4328
    %v4401 = vpack.c.b16 %v4331, %v4329
    %v4402 = vpack.c.b16 %v4334, %v4332
    %v4403 = vpack.c.b16 %v4335, %v4333
    %v4404 = vpack.c.b16 %v4338, %v4336
    %v4405 = vpack.c.b16 %v4339, %v4337
    %v4406 = vpack.c.b16 %v4342, %v4340
    %v4407 = vpack.c.b16 %v4343, %v4341
    %4472 = vmatprep.subr.bf16.mxu0 %v4359
    %4473 = vmatpush1.bf16.msra.mxu0 %v4358
    %4474 = vmatprep.subr.bf16.mxu0 %v4357
    %4475 = vmatpush1.bf16.msra.mxu0 %v4356
    %4476 = vmatprep.subr.bf16.mxu0 %v4355
    %4477 = vmatpush1.bf16.msra.mxu0 %v4354
    %4478 = vmatprep.subr.bf16.mxu0 %v4353
    %4479 = vmatpush1.bf16.msra.mxu0 %v4352
    %4480 = vmatprep.subr.bf16.mxu0 %v4351
    %4481 = vmatpush1.bf16.msra.mxu0 %v4350
    %4482 = vmatprep.subr.bf16.mxu0 %v4349
    %4483 = vmatpush1.bf16.msra.mxu0 %v4348
    %4484 = vmatprep.subr.bf16.mxu0 %v4347
    %4485 = vmatpush1.bf16.msra.mxu0 %v4346
    %4486 = vmatprep.subr.bf16.mxu0 %v4345
    %4487 = vmatpush1.bf16.msra.mxu0 %v4344
    %4488 = vmatprep.subr.bf16.mxu0 %v4375
    %4489 = vmatpush2.bf16.msra.mxu0 %v4374
    %4490 = vmatprep.subr.bf16.mxu0 %v4373
    %4491 = vmatpush2.bf16.msra.mxu0 %v4372
    %4492 = vmatprep.subr.bf16.mxu0 %v4371
    %4493 = vmatpush2.bf16.msra.mxu0 %v4370
    %4494 = vmatprep.subr.bf16.mxu0 %v4369
    %4495 = vmatpush2.bf16.msra.mxu0 %v4368
    %4496 = vmatprep.subr.bf16.mxu0 %v4367
    %4497 = vmatpush2.bf16.msra.mxu0 %v4366
    %4498 = vmatprep.subr.bf16.mxu0 %v4365
    %4499 = vmatpush2.bf16.msra.mxu0 %v4364
    %4500 = vmatprep.subr.bf16.mxu0 %v4363
    %4501 = vmatpush2.bf16.msra.mxu0 %v4362
    %4502 = vmatprep.subr.bf16.mxu0 %v4361
    %4503 = vmatpush2.bf16.msra.mxu0 %v4360
    %4504 = vmatprep.mubr.bf16.mxu0 %v4073
    %4505 = vmatmul.mubr.bf16.gmra.mxu0 %v4072
    %v4506 = vpop.f32.mrf.mxu0
    %v4507 = vadd.f32 %v4145, %v4506
    %v4508 = vpop.f32.mrf.mxu0
    %v4509 = vadd.f32 %v4149, %v4508
    %v4510 = vpop.f32.mrf.mxu0
    %v4511 = vpop.f32.mrf.mxu0
    %4512 = vdwg.mxu0
    %4513 = vmatprep.subr.bf16.mxu0 %v4391
    %4514 = vmatpush1.bf16.msra.mxu0 %v4390
    %4515 = vmatprep.subr.bf16.mxu0 %v4389
    %4516 = vmatpush1.bf16.msra.mxu0 %v4388
    %4517 = vmatprep.subr.bf16.mxu0 %v4387
    %4518 = vmatpush1.bf16.msra.mxu0 %v4386
    %4519 = vmatprep.subr.bf16.mxu0 %v4385
    %4520 = vmatpush1.bf16.msra.mxu0 %v4384
    %4521 = vmatprep.subr.bf16.mxu0 %v4383
    %4522 = vmatpush1.bf16.msra.mxu0 %v4382
    %4523 = vmatprep.subr.bf16.mxu0 %v4381
    %4524 = vmatpush1.bf16.msra.mxu0 %v4380
    %4525 = vmatprep.subr.bf16.mxu0 %v4379
    %4526 = vmatpush1.bf16.msra.mxu0 %v4378
    %4527 = vmatprep.subr.bf16.mxu0 %v4377
    %4528 = vmatpush1.bf16.msra.mxu0 %v4376
    %4529 = vmatprep.subr.bf16.mxu0 %v4407
    %4530 = vmatpush2.bf16.msra.mxu0 %v4406
    %4531 = vmatprep.subr.bf16.mxu0 %v4405
    %4532 = vmatpush2.bf16.msra.mxu0 %v4404
    %4533 = vmatprep.subr.bf16.mxu0 %v4403
    %4534 = vmatpush2.bf16.msra.mxu0 %v4402
    %4535 = vmatprep.subr.bf16.mxu0 %v4401
    %4536 = vmatpush2.bf16.msra.mxu0 %v4400
    %4537 = vmatprep.subr.bf16.mxu0 %v4399
    %4538 = vmatpush2.bf16.msra.mxu0 %v4398
    %4539 = vmatprep.subr.bf16.mxu0 %v4397
    %4540 = vmatpush2.bf16.msra.mxu0 %v4396
    %4541 = vmatprep.subr.bf16.mxu0 %v4395
    %4542 = vmatpush2.bf16.msra.mxu0 %v4394
    %4543 = vmatprep.subr.bf16.mxu0 %v4393
    %4544 = vmatpush2.bf16.msra.mxu0 %v4392
    %4545 = vmatprep.mubr.bf16.mxu0 %v4075
    %4546 = vmatmul.mubr.bf16.gmra.mxu0 %v4074
    %v4547 = vpop.f32.mrf.mxu0
    %v4548 = vadd.f32 %v4507, %v4547
    %v4549 = vpop.f32.mrf.mxu0
    %v4550 = vadd.f32 %v4509, %v4549
    %v4551 = vpop.f32.mrf.mxu0
    %v4552 = vpop.f32.mrf.mxu0
    %4553 = vdwg.mxu0
    %v4554 = vmax.f32 %v4548, 0.0
    %v4555 = vmax.f32 %v4550, 0.0
    %v4556 = vpack.c.bf16 %v4554, %v4554
    %v4557 = vpack.c.bf16 %v4555, %v4555
    %v4558 = vld [vmem:[%s11] sm:$0xf]
    %v4559 = vld [vmem:[%s11 + $0x4] sm:$0xf]
    %v4560 = vld [vmem:[%s11 + $0x8] sm:$0xf]
    %v4561 = vld [vmem:[%s11 + $0xc] sm:$0xf]
    %v4562 = vld [vmem:[%s11 + $0x10] sm:$0xf]
    %v4563 = vld [vmem:[%s11 + $0x14] sm:$0xf]
    %v4564 = vld [vmem:[%s11 + $0x18] sm:$0xf]
    %v4565 = vld [vmem:[%s11 + $0x1c] sm:$0xf]
    %v4566 = vld [vmem:[%s11 + $0x20] sm:$0xf]
    %v4567 = vld [vmem:[%s11 + $0x24] sm:$0xf]
    %v4568 = vld [vmem:[%s11 + $0x28] sm:$0xf]
    %v4569 = vld [vmem:[%s11 + $0x2c] sm:$0xf]
    %v4570 = vld [vmem:[%s11 + $0x30] sm:$0xf]
    %v4571 = vld [vmem:[%s11 + $0x34] sm:$0xf]
    %v4572 = vld [vmem:[%s11 + $0x38] sm:$0xf]
    %v4573 = vld [vmem:[%s11 + $0x3c] sm:$0xf]
    %v4574 = vld [vmem:[%s11 + $0x40] sm:$0xf]
    %v4575 = vld [vmem:[%s11 + $0x44] sm:$0xf]
    %v4576 = vld [vmem:[%s11 + $0x48] sm:$0xf]
    %v4577 = vld [vmem:[%s11 + $0x4c] sm:$0xf]
    %v4578 = vld [vmem:[%s11 + $0x50] sm:$0xf]
    %v4579 = vld [vmem:[%s11 + $0x54] sm:$0xf]
    %v4580 = vld [vmem:[%s11 + $0x58] sm:$0xf]
    %v4581 = vld [vmem:[%s11 + $0x5c] sm:$0xf]
    %v4582 = vld [vmem:[%s11 + $0x60] sm:$0xf]
    %v4583 = vld [vmem:[%s11 + $0x64] sm:$0xf]
    %v4584 = vld [vmem:[%s11 + $0x68] sm:$0xf]
    %v4585 = vld [vmem:[%s11 + $0x6c] sm:$0xf]
    %v4586 = vld [vmem:[%s11 + $0x70] sm:$0xf]
    %v4587 = vld [vmem:[%s11 + $0x74] sm:$0xf]
    %v4588 = vld [vmem:[%s11 + $0x78] sm:$0xf]
    %v4589 = vld [vmem:[%s11 + $0x7c] sm:$0xf]
    %v4590 = vld [vmem:[%s12] sm:$0x1]
    %v4592 = vlaneseq
    %v4593 = vshrl.u32 %v4592, 7
    %v4594 = vsub.s32 0, %v4593
    %v4595 = vrot.slane %v4590, %v4594
    %v4629 = vunpack.c.l.b16 %v4558
    %v4630 = vunpack.c.l.b16 %v4559
    %v4631 = vunpack.c.l.b16 %v4560
    %v4632 = vunpack.c.l.b16 %v4561
    %v4633 = vunpack.c.l.b16 %v4562
    %v4634 = vunpack.c.l.b16 %v4563
    %v4635 = vunpack.c.l.b16 %v4564
    %v4636 = vunpack.c.l.b16 %v4565
    %v4637 = vunpack.c.l.b16 %v4566
    %v4638 = vunpack.c.l.b16 %v4567
    %v4639 = vunpack.c.l.b16 %v4568
    %v4640 = vunpack.c.l.b16 %v4569
    %v4641 = vunpack.c.l.b16 %v4570
    %v4642 = vunpack.c.l.b16 %v4571
    %v4643 = vunpack.c.l.b16 %v4572
    %v4644 = vunpack.c.l.b16 %v4573
    %v4645 = vunpack.c.l.b16 %v4574
    %v4646 = vunpack.c.l.b16 %v4575
    %v4647 = vunpack.c.l.b16 %v4576
    %v4648 = vunpack.c.l.b16 %v4577
    %v4649 = vunpack.c.l.b16 %v4578
    %v4650 = vunpack.c.l.b16 %v4579
    %v4651 = vunpack.c.l.b16 %v4580
    %v4652 = vunpack.c.l.b16 %v4581
    %v4653 = vunpack.c.l.b16 %v4582
    %v4654 = vunpack.c.l.b16 %v4583
    %v4655 = vunpack.c.l.b16 %v4584
    %v4656 = vunpack.c.l.b16 %v4585
    %v4657 = vunpack.c.l.b16 %v4586
    %v4658 = vunpack.c.l.b16 %v4587
    %v4659 = vunpack.c.l.b16 %v4588
    %v4660 = vunpack.c.l.b16 %v4589
    %v4661 = vpack.c.b16 %v4630, %v4629
    %v4662 = vpack.c.b16 %v4632, %v4631
    %v4663 = vpack.c.b16 %v4634, %v4633
    %v4664 = vpack.c.b16 %v4636, %v4635
    %v4665 = vpack.c.b16 %v4638, %v4637
    %v4666 = vpack.c.b16 %v4640, %v4639
    %v4667 = vpack.c.b16 %v4642, %v4641
    %v4668 = vpack.c.b16 %v4644, %v4643
    %v4669 = vpack.c.b16 %v4646, %v4645
    %v4670 = vpack.c.b16 %v4648, %v4647
    %v4671 = vpack.c.b16 %v4650, %v4649
    %v4672 = vpack.c.b16 %v4652, %v4651
    %v4673 = vpack.c.b16 %v4654, %v4653
    %v4674 = vpack.c.b16 %v4656, %v4655
    %v4675 = vpack.c.b16 %v4658, %v4657
    %v4676 = vpack.c.b16 %v4660, %v4659
    %4693 = vmatprep.subr.bf16.mxu0 0
    %4694 = vmatpush1.bf16.msra.mxu0 %v4668
    %4695 = vmatprep.subr.bf16.mxu0 0
    %4696 = vmatpush1.bf16.msra.mxu0 %v4667
    %4697 = vmatprep.subr.bf16.mxu0 0
    %4698 = vmatpush1.bf16.msra.mxu0 %v4666
    %4699 = vmatprep.subr.bf16.mxu0 0
    %4700 = vmatpush1.bf16.msra.mxu0 %v4665
    %4701 = vmatprep.subr.bf16.mxu0 0
    %4702 = vmatpush1.bf16.msra.mxu0 %v4664
    %4703 = vmatprep.subr.bf16.mxu0 0
    %4704 = vmatpush1.bf16.msra.mxu0 %v4663
    %4705 = vmatprep.subr.bf16.mxu0 0
    %4706 = vmatpush1.bf16.msra.mxu0 %v4662
    %4707 = vmatprep.subr.bf16.mxu0 0
    %4708 = vmatpush1.bf16.msra.mxu0 %v4661
    %4709 = vmatprep.subr.bf16.mxu0 0
    %4710 = vmatpush2.bf16.msra.mxu0 %v4676
    %4711 = vmatprep.subr.bf16.mxu0 0
    %4712 = vmatpush2.bf16.msra.mxu0 %v4675
    %4713 = vmatprep.subr.bf16.mxu0 0
    %4714 = vmatpush2.bf16.msra.mxu0 %v4674
    %4715 = vmatprep.subr.bf16.mxu0 0
    %4716 = vmatpush2.bf16.msra.mxu0 %v4673
    %4717 = vmatprep.subr.bf16.mxu0 0
    %4718 = vmatpush2.bf16.msra.mxu0 %v4672
    %4719 = vmatprep.subr.bf16.mxu0 0
    %4720 = vmatpush2.bf16.msra.mxu0 %v4671
    %4721 = vmatprep.subr.bf16.mxu0 0
    %4722 = vmatpush2.bf16.msra.mxu0 %v4670
    %4723 = vmatprep.subr.bf16.mxu0 0
    %4724 = vmatpush2.bf16.msra.mxu0 %v4669
    %4725 = vmatprep.mubr.bf16.mxu0 %v4557
    %4726 = vmatmul.mubr.bf16.gmra.mxu0 %v4556
    %v4727 = vpop.f32.mrf.mxu0
    %v4728 = vadd.f32 %v4595, %v4727
    %v4729 = vpop.f32.mrf.mxu0
    %v4730 = vpop.f32.mrf.mxu0
    %v4731 = vpop.f32.mrf.mxu0
    %4732 = vdwg.mxu0
    %vm4733 = vcmask 72704
    %4734 = vst.msk [vmem:[#allocation8] sm:$0xff] %vm4733, %v4728
    // Predicated region
    $region66: #{tpu_custom_call.1} parent=1 // pred_check
      _
    $region67: #{tpu_custom_call.1} parent=1 // pred_check_branch
      %4736 = sbr.rel (0) target = $region69
    $region68: #{tpu_custom_call.1} parent=1 // pred_region
      %s4738 = ssub.s32 128, 128
      %4739 = vsyncadd [#allocation4], %s4738
      %s4741 = sshll.u32 [#allocation8], 4
      %s4742 = int_to_ptr.vmem [resolvable:$true] %s4741
      %4744 = dma.vmem_to_hbm [thread:$0]  %s4742, 128, %s13, [#allocation4]
    $region69: #{tpu_custom_call.1} parent=1 // pred_fallthru
      _
    // Predicated region
    $region70: #{tpu_custom_call.1} parent=1 // pred_check
      _
    $region71: #{tpu_custom_call.1} parent=1 // pred_check_branch
      %4746 = sbr.rel (0) target = $region73
    $region72: #{tpu_custom_call.1} parent=1 // pred_region
      %4747 = dma.done [#allocation4], 128
    $region73: #{tpu_custom_call.1} parent=1 // pred_fallthru
      _
    %4748 = vsyncpa [#allocation3], 1
    %4749 = vsyncpa [#allocation6], 1
    %4750 = vsyncpa [#allocation4], 1

</llo_original>
